<compile_context>
chip_gen: v5e
topology: v5e:2x2
jax: 0.10.0
libtpu: 0.0.40
codegen_flags: <defaults>
</compile_context>

<pallas_src>
import functools

import jax
import jax.numpy as jnp
from jax import lax
from jax.experimental import pallas as pl
from jax.experimental.pallas import tpu as pltpu


# ---------------------------------------------------------------------------
# Pallas kernels
# ---------------------------------------------------------------------------

def _matmul_bias_relu_kernel(x_ref, w_ref, b_ref, o_ref):
    """out = relu(x @ w + b); bf16 in, f32 accumulate, bf16 out."""
    acc = jnp.dot(x_ref[...], w_ref[...], preferred_element_type=jnp.float32)
    acc = jnp.maximum(acc + b_ref[...], 0.0)
    o_ref[...] = acc.astype(o_ref.dtype)


def matmul_bias_relu(x, w, b, *, block_rows):
    """x:[M,K] bf16 @ w:[K,N] bf16 + b:[1,N] f32, ReLU.  1-D parallel grid over M."""
    M, K = x.shape
    K2, N = w.shape
    assert K == K2 and M % block_rows == 0
    grid = (M // block_rows,)
    return pl.pallas_call(
        _matmul_bias_relu_kernel,
        out_shape=jax.ShapeDtypeStruct((M, N), jnp.bfloat16),
        grid_spec=pltpu.PrefetchScalarGridSpec(
            num_scalar_prefetch=0,
            grid=grid,
            in_specs=[pl.BlockSpec((block_rows, K), lambda g: (g, 0)),
                      pl.BlockSpec((K, N), lambda g: (0, 0)),
                      pl.BlockSpec((1, N), lambda g: (0, 0))],
            out_specs=pl.BlockSpec((block_rows, N), lambda g: (g, 0))),
        compiler_params=pltpu.CompilerParams(dimension_semantics=("parallel",)),
    )(x, w, b)


def _pool_from_phases(x):
    """3x3 / stride 2 / pad 1 max-pool expressed on the four parity phases of a
    post-ReLU feature map.

    x: [2, 2, HP, WP, Bt, C] f32 with x[hr, wr, i, j] = Y[2i+hr, 2j+wr].
    Zero fill at the (-1) edges is exact because Y >= 0 after ReLU.
    Returns [HP, WP, Bt, C].
    """
    ee, eo = x[0, 0], x[0, 1]
    oe, oo = x[1, 0], x[1, 1]

    def sh(a):  # shift +1 along output-row axis (leading dim), zero fill
        return jnp.concatenate([jnp.zeros_like(a[:1]), a[:-1]], axis=0)

    def sw(a):  # shift +1 along output-col axis (leading dim), zero fill
        return jnp.concatenate([jnp.zeros_like(a[:, :1]), a[:, :-1]], axis=1)

    out = ee
    for tap in (eo, sw(eo), oe, sh(oe), oo, sw(oo), sh(oo), sh(sw(oo))):
        out = jnp.maximum(out, tap)
    return out


def _pool_kernel(x_ref, o_ref):
    out = _pool_from_phases(x_ref[...].astype(jnp.float32))
    o_ref[...] = out.astype(o_ref.dtype)


def maxpool_phases(phases, bt):
    """phases: [2, 2, HP, WP, B, C] bf16 -> pooled [HP, WP, B, C] bf16."""
    _, _, hp, wp, B, C = phases.shape
    assert B % bt == 0
    grid = (B // bt,)
    return pl.pallas_call(
        _pool_kernel,
        out_shape=jax.ShapeDtypeStruct((hp, wp, B, C), jnp.bfloat16),
        grid_spec=pltpu.PrefetchScalarGridSpec(
            num_scalar_prefetch=0,
            grid=grid,
            in_specs=[pl.BlockSpec((2, 2, hp, wp, bt, C),
                                   lambda g: (0, 0, 0, 0, g, 0))],
            out_specs=pl.BlockSpec((hp, wp, bt, C), lambda g: (0, 0, g, 0))),
        compiler_params=pltpu.CompilerParams(dimension_semantics=("parallel",)),
    )(phases)


def _head_kernel(x_ref, w1_ref, b1_ref, w2_ref, b2_ref, o_ref, *, num_classes):
    """pool2 + fc1 + ReLU + (Dropout(0.5): identity at inference) + fc2 + log_softmax."""
    pooled = _pool_from_phases(x_ref[...].astype(jnp.float32))     # [2, 2, Bt, 64]
    pooled = pooled.astype(jnp.bfloat16)
    bt = pooled.shape[2]
    n_hidden = w1_ref.shape[2]

    # fc1: flatten order is (h, w, c) -> 4 per-pixel [64, 128] weight blocks.
    acc = jnp.zeros((bt, n_hidden), jnp.float32)
    for t in range(4):
        i, j = t // 2, t % 2
        acc = acc + jnp.dot(pooled[i, j], w1_ref[t],
                            preferred_element_type=jnp.float32)
    h = jnp.maximum(acc + b1_ref[...], 0.0)                        # ReLU; dropout = identity

    logits = jnp.dot(h.astype(jnp.bfloat16), w2_ref[...],
                     preferred_element_type=jnp.float32) + b2_ref[...]
    # mask the padded (lane-density) classes before the softmax
    col = lax.broadcasted_iota(jnp.int32, logits.shape, 1)
    logits = jnp.where(col < num_classes, logits, jnp.float32(-1e30))

    m = jnp.max(logits, axis=-1, keepdims=True)
    s = logits - m
    o_ref[...] = s - jnp.log(jnp.sum(jnp.exp(s), axis=-1, keepdims=True))


def head_call(phases, w1, b1, w2, b2, *, bt, num_classes):
    """phases: [2, 2, 2, 2, B, 64] bf16 -> log-probs [B, 128] f32 (padded classes are junk)."""
    _, _, hp, wp, B, C = phases.shape
    assert (hp, wp) == (2, 2) and B % bt == 0
    n_pad = w2.shape[1]
    grid = (B // bt,)
    return pl.pallas_call(
        functools.partial(_head_kernel, num_classes=num_classes),
        out_shape=jax.ShapeDtypeStruct((B, n_pad), jnp.float32),
        grid_spec=pltpu.PrefetchScalarGridSpec(
            num_scalar_prefetch=0,
            grid=grid,
            in_specs=[pl.BlockSpec((2, 2, hp, wp, bt, C),
                                   lambda g: (0, 0, 0, 0, g, 0)),
                      pl.BlockSpec(w1.shape, lambda g: (0, 0, 0)),
                      pl.BlockSpec(b1.shape, lambda g: (0, 0)),
                      pl.BlockSpec(w2.shape, lambda g: (0, 0)),
                      pl.BlockSpec(b2.shape, lambda g: (0, 0))],
            out_specs=pl.BlockSpec((bt, n_pad), lambda g: (g, 0))),
        compiler_params=pltpu.CompilerParams(dimension_semantics=("parallel",)),
    )(phases, w1, b1, w2, b2)


# ---------------------------------------------------------------------------
# XLA glue: im2col for conv, parity-phase split for pooling (cheap, ~1x data)
# ---------------------------------------------------------------------------

def conv_im2col(x_nhwc, k, stride, pad, k_pad_to=None):
    B, H, W, C = x_nhwc.shape
    xp = jnp.pad(x_nhwc, ((0, 0), (pad, pad), (pad, pad), (0, 0)))
    Ho = (H + 2 * pad - k) // stride + 1
    Wo = (W + 2 * pad - k) // stride + 1
    taps = [xp[:, i:i + stride * Ho:stride, j:j + stride * Wo:stride, :]
            for i in range(k) for j in range(k)]
    patches = jnp.stack(taps, axis=3)                 # [B, Ho, Wo, k*k, C]
    cols = patches.reshape(B * Ho * Wo, k * k * C)    # rows in (kh, kw, cin) order
    if k_pad_to is not None and k_pad_to > k * k * C:
        cols = jnp.pad(cols, ((0, 0), (0, k_pad_to - k * k * C)))
    return cols, (B, Ho, Wo)


def split_phases(y_2d, B, H, W):
    """y_2d: [B*H*W, C], rows in (b, h, w) order -> [2, 2, H//2, W//2, B, C] (hr, wr, i, j, b, c)."""
    C = y_2d.shape[1]
    y6 = y_2d.reshape(B, H // 2, 2, W // 2, 2, C)     # (b, i, hr, j, wr, c)
    return jnp.transpose(y6, (2, 4, 1, 3, 0, 5))


# ---------------------------------------------------------------------------
# Parameters (deterministic synthetic init) + BN folding (eval mode)
# ---------------------------------------------------------------------------

def _fold_bn(w_oihw, b, gamma, beta, mean, var, eps=1e-5):
    scale = gamma / jnp.sqrt(var + eps)
    return w_oihw * scale[:, None, None, None], (b - mean) * scale + beta


def conv_w_to_matrix(w_oihw, k_pad_to=None):
    # [O, I, kh, kw] -> [kh*kw*I, O] matching im2col row order (kh, kw, cin).
    O, I, kh, kw = w_oihw.shape
    m = jnp.transpose(w_oihw, (2, 3, 1, 0)).reshape(kh * kw * I, O)
    if k_pad_to is not None and k_pad_to > kh * kw * I:
        m = jnp.pad(m, ((0, k_pad_to - kh * kw * I), (0, 0)))
    return m


def init_params(key, in_channels=1, num_classes=10):
    assert num_classes <= 128
    ks = jax.random.split(key, 16)
    u = lambda k, s, a: jax.random.uniform(k, s, jnp.float32, -a, a)

    # conv1 block
    w1 = u(ks[0], (32, in_channels, 5, 5), 0.2)
    b1 = u(ks[1], (32,), 0.1)
    g1 = 1.0 + 0.1 * jax.random.normal(ks[2], (32,), jnp.float32)
    be1 = 0.05 * jax.random.normal(ks[3], (32,), jnp.float32)
    m1 = 0.02 * jax.random.normal(ks[4], (32,), jnp.float32)
    v1 = 1.0 + 0.1 * jax.random.uniform(ks[5], (32,), jnp.float32)

    # conv2 block
    w2 = u(ks[6], (64, 32, 5, 5), 0.05)
    b2 = u(ks[7], (64,), 0.05)
    g2 = 1.0 + 0.1 * jax.random.normal(ks[8], (64,), jnp.float32)
    be2 = 0.05 * jax.random.normal(ks[9], (64,), jnp.float32)
    m2 = 0.02 * jax.random.normal(ks[10], (64,), jnp.float32)
    v2 = 1.0 + 0.1 * jax.random.uniform(ks[11], (64,), jnp.float32)

    w1f, b1f = _fold_bn(w1, b1, g1, be1, m1, v1)
    w2f, b2f = _fold_bn(w2, b2, g2, be2, m2, v2)

    flat = 64 * 2 * 2  # head built for 32x32 inputs in the PyTorch module
    # fc1 rows are stored in OUR flatten order (h, w, c).  Loading real PyTorch
    # weights would require a fixed row permutation from the (c, h, w) order.
    fc1_w = u(ks[12], (flat, 128), 0.06).reshape(4, 64, 128)
    fc2_w = u(ks[14], (128, num_classes), 0.09)
    fc2_b = u(ks[15], (num_classes,), 0.09)

    params = {
        "w1": conv_w_to_matrix(w1f, k_pad_to=32).astype(jnp.bfloat16),   # [32, 32]
        "b1": b1f.reshape(1, 32).astype(jnp.float32),
        "w2": conv_w_to_matrix(w2f).astype(jnp.bfloat16),                # [800, 64]
        "b2": b2f.reshape(1, 64).astype(jnp.float32),
        "fc1_w": fc1_w.astype(jnp.bfloat16),                             # [4, 64, 128]
        "fc1_b": u(ks[13], (1, 128), 0.06).astype(jnp.float32),
        # fc2 padded 10 -> 128 output columns for a lane-dense store.
        "fc2_w": jnp.pad(fc2_w, ((0, 0), (0, 128 - num_classes))).astype(jnp.bfloat16),
        "fc2_b": jnp.pad(fc2_b, (0, 128 - num_classes)).reshape(1, 128).astype(jnp.float32),
    }
    return params


# ---------------------------------------------------------------------------
# Full forward pass
# ---------------------------------------------------------------------------

def toynet_forward(params, x_nchw, num_classes=10):
    if x_nchw.ndim != 4:
        raise ValueError(f"Expected 4D input [B, C, H, W], got {x_nchw.shape}")
    B, _, H, W = x_nchw.shape
    assert (H, W) == (32, 32), "classifier head is built for 32x32 inputs"
    bt = 8 if B % 8 == 0 else B                                   # batch tile (grid axis)

    x = jnp.transpose(x_nchw, (0, 2, 3, 1)).astype(jnp.bfloat16)  # NCHW -> NHWC, bf16

    # conv1 (5x5, s=2, p=2) + BN1 + ReLU
    cols1, (_, H1, W1) = conv_im2col(x, 5, 2, 2, k_pad_to=32)     # [B*256, 32] bf16
    y1 = matmul_bias_relu(cols1, params["w1"], params["b1"],
                          block_rows=H1 * W1 * bt)                # [B*256, 32] bf16

    # maxpool1 (3x3, s=2, p=1) from parity phases (conv output read once)
    p1 = split_phases(y1, B, H1, W1)                              # [2,2,8,8,B,32]
    y1p = maxpool_phases(p1, bt)                                  # [8,8,B,32] bf16

    # conv2 (5x5, s=2, p=2) + BN2 + ReLU
    x2 = jnp.transpose(y1p, (2, 0, 1, 3))                         # [B,8,8,32] NHWC
    cols2, (_, H2, W2) = conv_im2col(x2, 5, 2, 2)                 # [B*16, 800] bf16
    y2 = matmul_bias_relu(cols2, params["w2"], params["b2"],
                          block_rows=H2 * W2 * bt)                # [B*16, 64] bf16

    # pool2 + fc1 + ReLU + Dropout(eval: identity) + fc2 + log_softmax, fused
    p2 = split_phases(y2, B, H2, W2)                              # [2,2,2,2,B,64]
    out = head_call(p2, params["fc1_w"], params["fc1_b"],
                    params["fc2_w"], params["fc2_b"],
                    bt=bt, num_classes=num_classes)               # [B, 128] f32
    return out[:, :num_classes]


if __name__ == "__main__":
    key = jax.random.PRNGKey(0)
    pkey, xkey = jax.random.split(key)
    params = init_params(pkey, in_channels=1, num_classes=10)

    # spatial must be 32x32 (the PyTorch head is initialized for 32x32 inputs)
    x = jax.random.normal(xkey, (2, 1, 32, 32), dtype=jnp.float32)

    out = jax.jit(toynet_forward)(params, x)
    out = jax.block_until_ready(out)

    assert out.shape == (2, 10)
    # log-probabilities: each row should sum to ~1 after exp
    assert bool(jnp.all(jnp.abs(jnp.sum(jnp.exp(out), axis=1) - 1.0) < 1e-3))
    print("KERNEL_OK")
</pallas_src>

<mosaic_0001>
module attributes {stable_mosaic.version = 11 : i64} {
  func.func @_matmul_bias_relu_kernel(%arg0: i32, %arg1: memref<512x32xbf16, #tpu.memory_space<vmem>>, %arg2: memref<32x32xbf16, #tpu.memory_space<vmem>>, %arg3: memref<1x32xf32, #tpu.memory_space<vmem>>, %arg4: memref<512x32xbf16, #tpu.memory_space<vmem>>) attributes {dimension_semantics = [#tpu.dimension_semantics<parallel>], iteration_bounds = array<i64: 1>, scalar_prefetch = 0 : i64, scratch_operands = 0 : i64, tpu.core_type = #tpu.core_type<tc>, window_params = [{transform_indices = @transform_0, window_bounds = array<i64: 512, 32>}, {pipeline_mode = #tpu.pipeline_mode<synchronous>, transform_indices = @transform_1, window_bounds = array<i64: 32, 32>}, {pipeline_mode = #tpu.pipeline_mode<synchronous>, transform_indices = @transform_2, window_bounds = array<i64: 1, 32>}, {transform_indices = @transform_3, window_bounds = array<i64: 512, 32>}]} {
    %c0 = arith.constant 0 : index
    %c0_0 = arith.constant 0 : index
    %0 = vector.load %arg1[%c0, %c0_0] : memref<512x32xbf16, #tpu.memory_space<vmem>>, vector<512x32xbf16>
    %c0_1 = arith.constant 0 : index
    %c0_2 = arith.constant 0 : index
    %1 = vector.load %arg2[%c0_1, %c0_2] : memref<32x32xbf16, #tpu.memory_space<vmem>>, vector<32x32xbf16>
    %cst = arith.constant dense<0.000000e+00> : vector<512x32xf32>
    %2 = tpu.matmul %0, %1, %cst {dimension_numbers = #tpu.dot_dimension_numbers<[1], [0], [0], [1], [0, 0, 1, 1], [], []>} : vector<512x32xbf16>, vector<32x32xbf16>, vector<512x32xf32> -> vector<512x32xf32>
    %c0_3 = arith.constant 0 : index
    %c0_4 = arith.constant 0 : index
    %3 = vector.load %arg3[%c0_3, %c0_4] : memref<1x32xf32, #tpu.memory_space<vmem>>, vector<1x32xf32>
    %4 = vector.broadcast %3 : vector<1x32xf32> to vector<512x32xf32>
    %5 = arith.addf %2, %4 : vector<512x32xf32>
    %cst_5 = arith.constant 0.000000e+00 : f32
    %6 = vector.broadcast %cst_5 : f32 to vector<512x32xf32>
    %7 = arith.maximumf %5, %6 : vector<512x32xf32>
    %8 = arith.truncf %7 : vector<512x32xf32> to vector<512x32xbf16>
    %c0_6 = arith.constant 0 : index
    %c0_7 = arith.constant 0 : index
    %9 = vector.load %arg4[%c0_6, %c0_7] : memref<512x32xbf16, #tpu.memory_space<vmem>>, vector<512x32xbf16>
    tpu.vector_store %arg4[%c0_6, %c0_7], %8 {strides = array<i32>} : memref<512x32xbf16, #tpu.memory_space<vmem>>, vector<512x32xbf16>,
    return
  }
  func.func @transform_0(%arg0: i32) -> (i32, i32) {
    %c0_i32 = arith.constant 0 : i32
    %c0_i32_0 = arith.constant 0 : i32
    return %arg0, %c0_i32 : i32, i32
  }
  func.func @transform_1(%arg0: i32) -> (i32, i32) {
    %c0_i32 = arith.constant 0 : i32
    %c0_i32_0 = arith.constant 0 : i32
    %c0_i32_1 = arith.constant 0 : i32
    return %c0_i32, %c0_i32_0 : i32, i32
  }
  func.func @transform_2(%arg0: i32) -> (i32, i32) {
    %c0_i32 = arith.constant 0 : i32
    %c0_i32_0 = arith.constant 0 : i32
    %c0_i32_1 = arith.constant 0 : i32
    return %c0_i32, %c0_i32_0 : i32, i32
  }
  func.func @transform_3(%arg0: i32) -> (i32, i32) {
    %c0_i32 = arith.constant 0 : i32
    %c0_i32_0 = arith.constant 0 : i32
    return %arg0, %c0_i32 : i32, i32
  }
}

module attributes {stable_mosaic.version = 11 : i64} {
  func.func @_pool_kernel(%arg0: i32, %arg1: memref<2x2x8x8x2x32xbf16, #tpu.memory_space<vmem>>, %arg2: memref<8x8x2x32xbf16, #tpu.memory_space<vmem>>) attributes {dimension_semantics = [#tpu.dimension_semantics<parallel>], iteration_bounds = array<i64: 1>, scalar_prefetch = 0 : i64, scratch_operands = 0 : i64, tpu.core_type = #tpu.core_type<tc>, window_params = [{transform_indices = @transform_0, window_bounds = array<i64: 2, 2, 8, 8, 2, 32>}, {transform_indices = @transform_1, window_bounds = array<i64: 8, 8, 2, 32>}]} {
    %c0 = arith.constant 0 : index
    %c0_0 = arith.constant 0 : index
    %c0_1 = arith.constant 0 : index
    %c0_2 = arith.constant 0 : index
    %c0_3 = arith.constant 0 : index
    %c0_4 = arith.constant 0 : index
    %0 = vector.load %arg1[%c0, %c0_0, %c0_1, %c0_2, %c0_3, %c0_4] : memref<2x2x8x8x2x32xbf16, #tpu.memory_space<vmem>>, vector<2x2x8x8x2x32xbf16>
    %1 = arith.extf %0 : vector<2x2x8x8x2x32xbf16> to vector<2x2x8x8x2x32xf32>
    %2 = vector.extract_strided_slice %1 {offsets = [0, 0, 0, 0, 0, 0], sizes = [1, 1, 8, 8, 2, 32], strides = [1, 1, 1, 1, 1, 1]} : vector<2x2x8x8x2x32xf32> to vector<1x1x8x8x2x32xf32>
    %3 = vector.shape_cast %2 : vector<1x1x8x8x2x32xf32> to vector<8x8x2x32xf32>
    %4 = vector.extract_strided_slice %1 {offsets = [0, 1, 0, 0, 0, 0], sizes = [1, 1, 8, 8, 2, 32], strides = [1, 1, 1, 1, 1, 1]} : vector<2x2x8x8x2x32xf32> to vector<1x1x8x8x2x32xf32>
    %5 = vector.shape_cast %4 : vector<1x1x8x8x2x32xf32> to vector<8x8x2x32xf32>
    %6 = vector.extract_strided_slice %1 {offsets = [1, 0, 0, 0, 0, 0], sizes = [1, 1, 8, 8, 2, 32], strides = [1, 1, 1, 1, 1, 1]} : vector<2x2x8x8x2x32xf32> to vector<1x1x8x8x2x32xf32>
    %7 = vector.shape_cast %6 : vector<1x1x8x8x2x32xf32> to vector<8x8x2x32xf32>
    %8 = vector.extract_strided_slice %1 {offsets = [1, 1, 0, 0, 0, 0], sizes = [1, 1, 8, 8, 2, 32], strides = [1, 1, 1, 1, 1, 1]} : vector<2x2x8x8x2x32xf32> to vector<1x1x8x8x2x32xf32>
    %9 = vector.shape_cast %8 : vector<1x1x8x8x2x32xf32> to vector<8x8x2x32xf32>
    %cst = arith.constant 0.000000e+00 : f32
    %10 = vector.broadcast %cst : f32 to vector<8x1x2x32xf32>
    %11 = vector.extract_strided_slice %5 {offsets = [0, 0, 0, 0], sizes = [8, 7, 2, 32], strides = [1, 1, 1, 1]} : vector<8x8x2x32xf32> to vector<8x7x2x32xf32>
    %12 = tpu.concatenate %10, %11 in 1 : vector<8x1x2x32xf32>, vector<8x7x2x32xf32> -> vector<8x8x2x32xf32>
    %cst_5 = arith.constant 0.000000e+00 : f32
    %13 = vector.broadcast %cst_5 : f32 to vector<1x8x2x32xf32>
    %14 = vector.extract_strided_slice %7 {offsets = [0, 0, 0, 0], sizes = [7, 8, 2, 32], strides = [1, 1, 1, 1]} : vector<8x8x2x32xf32> to vector<7x8x2x32xf32>
    %15 = tpu.concatenate %13, %14 in 0 : vector<1x8x2x32xf32>, vector<7x8x2x32xf32> -> vector<8x8x2x32xf32>
    %cst_6 = arith.constant 0.000000e+00 : f32
    %16 = vector.broadcast %cst_6 : f32 to vector<8x1x2x32xf32>
    %17 = vector.extract_strided_slice %9 {offsets = [0, 0, 0, 0], sizes = [8, 7, 2, 32], strides = [1, 1, 1, 1]} : vector<8x8x2x32xf32> to vector<8x7x2x32xf32>
    %18 = tpu.concatenate %16, %17 in 1 : vector<8x1x2x32xf32>, vector<8x7x2x32xf32> -> vector<8x8x2x32xf32>
    %cst_7 = arith.constant 0.000000e+00 : f32
    %19 = vector.broadcast %cst_7 : f32 to vector<1x8x2x32xf32>
    %20 = vector.extract_strided_slice %9 {offsets = [0, 0, 0, 0], sizes = [7, 8, 2, 32], strides = [1, 1, 1, 1]} : vector<8x8x2x32xf32> to vector<7x8x2x32xf32>
    %21 = tpu.concatenate %19, %20 in 0 : vector<1x8x2x32xf32>, vector<7x8x2x32xf32> -> vector<8x8x2x32xf32>
    %cst_8 = arith.constant 0.000000e+00 : f32
    %22 = vector.broadcast %cst_8 : f32 to vector<8x1x2x32xf32>
    %23 = vector.extract_strided_slice %9 {offsets = [0, 0, 0, 0], sizes = [8, 7, 2, 32], strides = [1, 1, 1, 1]} : vector<8x8x2x32xf32> to vector<8x7x2x32xf32>
    %24 = tpu.concatenate %22, %23 in 1 : vector<8x1x2x32xf32>, vector<8x7x2x32xf32> -> vector<8x8x2x32xf32>
    %cst_9 = arith.constant 0.000000e+00 : f32
    %25 = vector.broadcast %cst_9 : f32 to vector<1x8x2x32xf32>
    %26 = vector.extract_strided_slice %24 {offsets = [0, 0, 0, 0], sizes = [7, 8, 2, 32], strides = [1, 1, 1, 1]} : vector<8x8x2x32xf32> to vector<7x8x2x32xf32>
    %27 = tpu.concatenate %25, %26 in 0 : vector<1x8x2x32xf32>, vector<7x8x2x32xf32> -> vector<8x8x2x32xf32>
    %28 = arith.maximumf %3, %5 : vector<8x8x2x32xf32>
    %29 = arith.maximumf %28, %12 : vector<8x8x2x32xf32>
    %30 = arith.maximumf %29, %7 : vector<8x8x2x32xf32>
    %31 = arith.maximumf %30, %15 : vector<8x8x2x32xf32>
    %32 = arith.maximumf %31, %9 : vector<8x8x2x32xf32>
    %33 = arith.maximumf %32, %18 : vector<8x8x2x32xf32>
    %34 = arith.maximumf %33, %21 : vector<8x8x2x32xf32>
    %35 = arith.maximumf %34, %27 : vector<8x8x2x32xf32>
    %36 = arith.truncf %35 : vector<8x8x2x32xf32> to vector<8x8x2x32xbf16>
    %c0_10 = arith.constant 0 : index
    %c0_11 = arith.constant 0 : index
    %c0_12 = arith.constant 0 : index
    %c0_13 = arith.constant 0 : index
    %37 = vector.load %arg2[%c0_10, %c0_11, %c0_12, %c0_13] : memref<8x8x2x32xbf16, #tpu.memory_space<vmem>>, vector<8x8x2x32xbf16>
    tpu.vector_store %arg2[%c0_10, %c0_11, %c0_12, %c0_13], %36 {strides = array<i32>} : memref<8x8x2x32xbf16, #tpu.memory_space<vmem>>, vector<8x8x2x32xbf16>,
    return
  }
  func.func @transform_0(%arg0: i32) -> (i32, i32, i32, i32, i32, i32) {
    %c0_i32 = arith.constant 0 : i32
    %c0_i32_0 = arith.constant 0 : i32
    %c0_i32_1 = arith.constant 0 : i32
    %c0_i32_2 = arith.constant 0 : i32
    %c0_i32_3 = arith.constant 0 : i32
    %c0_i32_4 = arith.constant 0 : i32
    return %c0_i32, %c0_i32_0, %c0_i32_1, %c0_i32_2, %arg0, %c0_i32_3 : i32, i32, i32, i32, i32, i32
  }
  func.func @transform_1(%arg0: i32) -> (i32, i32, i32, i32) {
    %c0_i32 = arith.constant 0 : i32
    %c0_i32_0 = arith.constant 0 : i32
    %c0_i32_1 = arith.constant 0 : i32
    %c0_i32_2 = arith.constant 0 : i32
    return %c0_i32, %c0_i32_0, %arg0, %c0_i32_1 : i32, i32, i32, i32
  }
}

module attributes {stable_mosaic.version = 11 : i64} {
  func.func @_matmul_bias_relu_kernel(%arg0: i32, %arg1: memref<32x800xbf16, #tpu.memory_space<vmem>>, %arg2: memref<800x64xbf16, #tpu.memory_space<vmem>>, %arg3: memref<1x64xf32, #tpu.memory_space<vmem>>, %arg4: memref<32x64xbf16, #tpu.memory_space<vmem>>) attributes {dimension_semantics = [#tpu.dimension_semantics<parallel>], iteration_bounds = array<i64: 1>, scalar_prefetch = 0 : i64, scratch_operands = 0 : i64, tpu.core_type = #tpu.core_type<tc>, window_params = [{transform_indices = @transform_0, window_bounds = array<i64: 32, 800>}, {pipeline_mode = #tpu.pipeline_mode<synchronous>, transform_indices = @transform_1, window_bounds = array<i64: 800, 64>}, {pipeline_mode = #tpu.pipeline_mode<synchronous>, transform_indices = @transform_2, window_bounds = array<i64: 1, 64>}, {transform_indices = @transform_3, window_bounds = array<i64: 32, 64>}]} {
    %c0 = arith.constant 0 : index
    %c0_0 = arith.constant 0 : index
    %0 = vector.load %arg1[%c0, %c0_0] : memref<32x800xbf16, #tpu.memory_space<vmem>>, vector<32x800xbf16>
    %c0_1 = arith.constant 0 : index
    %c0_2 = arith.constant 0 : index
    %1 = vector.load %arg2[%c0_1, %c0_2] : memref<800x64xbf16, #tpu.memory_space<vmem>>, vector<800x64xbf16>
    %cst = arith.constant dense<0.000000e+00> : vector<32x64xf32>
    %2 = tpu.matmul %0, %1, %cst {dimension_numbers = #tpu.dot_dimension_numbers<[1], [0], [0], [1], [0, 0, 1, 1], [], []>} : vector<32x800xbf16>, vector<800x64xbf16>, vector<32x64xf32> -> vector<32x64xf32>
    %c0_3 = arith.constant 0 : index
    %c0_4 = arith.constant 0 : index
    %3 = vector.load %arg3[%c0_3, %c0_4] : memref<1x64xf32, #tpu.memory_space<vmem>>, vector<1x64xf32>
    %4 = vector.broadcast %3 : vector<1x64xf32> to vector<32x64xf32>
    %5 = arith.addf %2, %4 : vector<32x64xf32>
    %cst_5 = arith.constant 0.000000e+00 : f32
    %6 = vector.broadcast %cst_5 : f32 to vector<32x64xf32>
    %7 = arith.maximumf %5, %6 : vector<32x64xf32>
    %8 = arith.truncf %7 : vector<32x64xf32> to vector<32x64xbf16>
    %c0_6 = arith.constant 0 : index
    %c0_7 = arith.constant 0 : index
    %9 = vector.load %arg4[%c0_6, %c0_7] : memref<32x64xbf16, #tpu.memory_space<vmem>>, vector<32x64xbf16>
    tpu.vector_store %arg4[%c0_6, %c0_7], %8 {strides = array<i32>} : memref<32x64xbf16, #tpu.memory_space<vmem>>, vector<32x64xbf16>,
    return
  }
  func.func @transform_0(%arg0: i32) -> (i32, i32) {
    %c0_i32 = arith.constant 0 : i32
    %c0_i32_0 = arith.constant 0 : i32
    return %arg0, %c0_i32 : i32, i32
  }
  func.func @transform_1(%arg0: i32) -> (i32, i32) {
    %c0_i32 = arith.constant 0 : i32
    %c0_i32_0 = arith.constant 0 : i32
    %c0_i32_1 = arith.constant 0 : i32
    return %c0_i32, %c0_i32_0 : i32, i32
  }
  func.func @transform_2(%arg0: i32) -> (i32, i32) {
    %c0_i32 = arith.constant 0 : i32
    %c0_i32_0 = arith.constant 0 : i32
    %c0_i32_1 = arith.constant 0 : i32
    return %c0_i32, %c0_i32_0 : i32, i32
  }
  func.func @transform_3(%arg0: i32) -> (i32, i32) {
    %c0_i32 = arith.constant 0 : i32
    %c0_i32_0 = arith.constant 0 : i32
    return %arg0, %c0_i32 : i32, i32
  }
}

module attributes {stable_mosaic.version = 11 : i64} {
  func.func @_head_kernel(%arg0: i32, %arg1: memref<2x2x2x2x2x64xbf16, #tpu.memory_space<vmem>>, %arg2: memref<4x64x128xbf16, #tpu.memory_space<vmem>>, %arg3: memref<1x128xf32, #tpu.memory_space<vmem>>, %arg4: memref<128x128xbf16, #tpu.memory_space<vmem>>, %arg5: memref<1x128xf32, #tpu.memory_space<vmem>>, %arg6: memref<2x128xf32, #tpu.memory_space<vmem>>) attributes {dimension_semantics = [#tpu.dimension_semantics<parallel>], iteration_bounds = array<i64: 1>, scalar_prefetch = 0 : i64, scratch_operands = 0 : i64, tpu.core_type = #tpu.core_type<tc>, window_params = [{transform_indices = @transform_0, window_bounds = array<i64: 2, 2, 2, 2, 2, 64>}, {pipeline_mode = #tpu.pipeline_mode<synchronous>, transform_indices = @transform_1, window_bounds = array<i64: 4, 64, 128>}, {pipeline_mode = #tpu.pipeline_mode<synchronous>, transform_indices = @transform_2, window_bounds = array<i64: 1, 128>}, {pipeline_mode = #tpu.pipeline_mode<synchronous>, transform_indices = @transform_3, window_bounds = array<i64: 128, 128>}, {pipeline_mode = #tpu.pipeline_mode<synchronous>, transform_indices = @transform_4, window_bounds = array<i64: 1, 128>}, {transform_indices = @transform_5, window_bounds = array<i64: 2, 128>}]} {
    %c0 = arith.constant 0 : index
    %c0_0 = arith.constant 0 : index
    %c0_1 = arith.constant 0 : index
    %c0_2 = arith.constant 0 : index
    %c0_3 = arith.constant 0 : index
    %c0_4 = arith.constant 0 : index
    %0 = vector.load %arg1[%c0, %c0_0, %c0_1, %c0_2, %c0_3, %c0_4] : memref<2x2x2x2x2x64xbf16, #tpu.memory_space<vmem>>, vector<2x2x2x2x2x64xbf16>
    %1 = arith.extf %0 : vector<2x2x2x2x2x64xbf16> to vector<2x2x2x2x2x64xf32>
    %2 = vector.extract_strided_slice %1 {offsets = [0, 0, 0, 0, 0, 0], sizes = [1, 1, 2, 2, 2, 64], strides = [1, 1, 1, 1, 1, 1]} : vector<2x2x2x2x2x64xf32> to vector<1x1x2x2x2x64xf32>
    %3 = vector.shape_cast %2 : vector<1x1x2x2x2x64xf32> to vector<2x2x2x64xf32>
    %4 = vector.extract_strided_slice %1 {offsets = [0, 1, 0, 0, 0, 0], sizes = [1, 1, 2, 2, 2, 64], strides = [1, 1, 1, 1, 1, 1]} : vector<2x2x2x2x2x64xf32> to vector<1x1x2x2x2x64xf32>
    %5 = vector.shape_cast %4 : vector<1x1x2x2x2x64xf32> to vector<2x2x2x64xf32>
    %6 = vector.extract_strided_slice %1 {offsets = [1, 0, 0, 0, 0, 0], sizes = [1, 1, 2, 2, 2, 64], strides = [1, 1, 1, 1, 1, 1]} : vector<2x2x2x2x2x64xf32> to vector<1x1x2x2x2x64xf32>
    %7 = vector.shape_cast %6 : vector<1x1x2x2x2x64xf32> to vector<2x2x2x64xf32>
    %8 = vector.extract_strided_slice %1 {offsets = [1, 1, 0, 0, 0, 0], sizes = [1, 1, 2, 2, 2, 64], strides = [1, 1, 1, 1, 1, 1]} : vector<2x2x2x2x2x64xf32> to vector<1x1x2x2x2x64xf32>
    %9 = vector.shape_cast %8 : vector<1x1x2x2x2x64xf32> to vector<2x2x2x64xf32>
    %cst = arith.constant 0.000000e+00 : f32
    %10 = vector.broadcast %cst : f32 to vector<2x1x2x64xf32>
    %11 = vector.extract_strided_slice %5 {offsets = [0, 0, 0, 0], sizes = [2, 1, 2, 64], strides = [1, 1, 1, 1]} : vector<2x2x2x64xf32> to vector<2x1x2x64xf32>
    %12 = tpu.concatenate %10, %11 in 1 : vector<2x1x2x64xf32>, vector<2x1x2x64xf32> -> vector<2x2x2x64xf32>
    %cst_5 = arith.constant 0.000000e+00 : f32
    %13 = vector.broadcast %cst_5 : f32 to vector<1x2x2x64xf32>
    %14 = vector.extract_strided_slice %7 {offsets = [0, 0, 0, 0], sizes = [1, 2, 2, 64], strides = [1, 1, 1, 1]} : vector<2x2x2x64xf32> to vector<1x2x2x64xf32>
    %15 = tpu.concatenate %13, %14 in 0 : vector<1x2x2x64xf32>, vector<1x2x2x64xf32> -> vector<2x2x2x64xf32>
    %cst_6 = arith.constant 0.000000e+00 : f32
    %16 = vector.broadcast %cst_6 : f32 to vector<2x1x2x64xf32>
    %17 = vector.extract_strided_slice %9 {offsets = [0, 0, 0, 0], sizes = [2, 1, 2, 64], strides = [1, 1, 1, 1]} : vector<2x2x2x64xf32> to vector<2x1x2x64xf32>
    %18 = tpu.concatenate %16, %17 in 1 : vector<2x1x2x64xf32>, vector<2x1x2x64xf32> -> vector<2x2x2x64xf32>
    %cst_7 = arith.constant 0.000000e+00 : f32
    %19 = vector.broadcast %cst_7 : f32 to vector<1x2x2x64xf32>
    %20 = vector.extract_strided_slice %9 {offsets = [0, 0, 0, 0], sizes = [1, 2, 2, 64], strides = [1, 1, 1, 1]} : vector<2x2x2x64xf32> to vector<1x2x2x64xf32>
    %21 = tpu.concatenate %19, %20 in 0 : vector<1x2x2x64xf32>, vector<1x2x2x64xf32> -> vector<2x2x2x64xf32>
    %cst_8 = arith.constant 0.000000e+00 : f32
    %22 = vector.broadcast %cst_8 : f32 to vector<2x1x2x64xf32>
    %23 = vector.extract_strided_slice %9 {offsets = [0, 0, 0, 0], sizes = [2, 1, 2, 64], strides = [1, 1, 1, 1]} : vector<2x2x2x64xf32> to vector<2x1x2x64xf32>
    %24 = tpu.concatenate %22, %23 in 1 : vector<2x1x2x64xf32>, vector<2x1x2x64xf32> -> vector<2x2x2x64xf32>
    %cst_9 = arith.constant 0.000000e+00 : f32
    %25 = vector.broadcast %cst_9 : f32 to vector<1x2x2x64xf32>
    %26 = vector.extract_strided_slice %24 {offsets = [0, 0, 0, 0], sizes = [1, 2, 2, 64], strides = [1, 1, 1, 1]} : vector<2x2x2x64xf32> to vector<1x2x2x64xf32>
    %27 = tpu.concatenate %25, %26 in 0 : vector<1x2x2x64xf32>, vector<1x2x2x64xf32> -> vector<2x2x2x64xf32>
    %28 = arith.maximumf %3, %5 : vector<2x2x2x64xf32>
    %29 = arith.maximumf %28, %12 : vector<2x2x2x64xf32>
    %30 = arith.maximumf %29, %7 : vector<2x2x2x64xf32>
    %31 = arith.maximumf %30, %15 : vector<2x2x2x64xf32>
    %32 = arith.maximumf %31, %9 : vector<2x2x2x64xf32>
    %33 = arith.maximumf %32, %18 : vector<2x2x2x64xf32>
    %34 = arith.maximumf %33, %21 : vector<2x2x2x64xf32>
    %35 = arith.maximumf %34, %27 : vector<2x2x2x64xf32>
    %36 = arith.truncf %35 : vector<2x2x2x64xf32> to vector<2x2x2x64xbf16>
    %cst_10 = arith.constant 0.000000e+00 : f32
    %37 = vector.broadcast %cst_10 : f32 to vector<2x128xf32>
    %38 = vector.extract_strided_slice %36 {offsets = [0, 0, 0, 0], sizes = [1, 1, 2, 64], strides = [1, 1, 1, 1]} : vector<2x2x2x64xbf16> to vector<1x1x2x64xbf16>
    %39 = vector.shape_cast %38 : vector<1x1x2x64xbf16> to vector<2x64xbf16>
    %c0_11 = arith.constant 0 : index
    %c0_12 = arith.constant 0 : index
    %c0_13 = arith.constant 0 : index
    %40 = vector.load %arg2[%c0_11, %c0_12, %c0_13] : memref<4x64x128xbf16, #tpu.memory_space<vmem>>, vector<1x64x128xbf16>
    %41 = vector.shape_cast %40 : vector<1x64x128xbf16> to vector<64x128xbf16>
    %cst_14 = arith.constant dense<0.000000e+00> : vector<2x128xf32>
    %42 = tpu.matmul %39, %41, %cst_14 {dimension_numbers = #tpu.dot_dimension_numbers<[1], [0], [0], [1], [0, 0, 1, 1], [], []>} : vector<2x64xbf16>, vector<64x128xbf16>, vector<2x128xf32> -> vector<2x128xf32>
    %43 = arith.addf %37, %42 : vector<2x128xf32>
    %44 = vector.extract_strided_slice %36 {offsets = [0, 1, 0, 0], sizes = [1, 1, 2, 64], strides = [1, 1, 1, 1]} : vector<2x2x2x64xbf16> to vector<1x1x2x64xbf16>
    %45 = vector.shape_cast %44 : vector<1x1x2x64xbf16> to vector<2x64xbf16>
    %c1 = arith.constant 1 : index
    %c0_15 = arith.constant 0 : index
    %c0_16 = arith.constant 0 : index
    %46 = vector.load %arg2[%c1, %c0_15, %c0_16] : memref<4x64x128xbf16, #tpu.memory_space<vmem>>, vector<1x64x128xbf16>
    %47 = vector.shape_cast %46 : vector<1x64x128xbf16> to vector<64x128xbf16>
    %cst_17 = arith.constant dense<0.000000e+00> : vector<2x128xf32>
    %48 = tpu.matmul %45, %47, %cst_17 {dimension_numbers = #tpu.dot_dimension_numbers<[1], [0], [0], [1], [0, 0, 1, 1], [], []>} : vector<2x64xbf16>, vector<64x128xbf16>, vector<2x128xf32> -> vector<2x128xf32>
    %49 = arith.addf %43, %48 : vector<2x128xf32>
    %50 = vector.extract_strided_slice %36 {offsets = [1, 0, 0, 0], sizes = [1, 1, 2, 64], strides = [1, 1, 1, 1]} : vector<2x2x2x64xbf16> to vector<1x1x2x64xbf16>
    %51 = vector.shape_cast %50 : vector<1x1x2x64xbf16> to vector<2x64xbf16>
    %c2 = arith.constant 2 : index
    %c0_18 = arith.constant 0 : index
    %c0_19 = arith.constant 0 : index
    %52 = vector.load %arg2[%c2, %c0_18, %c0_19] : memref<4x64x128xbf16, #tpu.memory_space<vmem>>, vector<1x64x128xbf16>
    %53 = vector.shape_cast %52 : vector<1x64x128xbf16> to vector<64x128xbf16>
    %cst_20 = arith.constant dense<0.000000e+00> : vector<2x128xf32>
    %54 = tpu.matmul %51, %53, %cst_20 {dimension_numbers = #tpu.dot_dimension_numbers<[1], [0], [0], [1], [0, 0, 1, 1], [], []>} : vector<2x64xbf16>, vector<64x128xbf16>, vector<2x128xf32> -> vector<2x128xf32>
    %55 = arith.addf %49, %54 : vector<2x128xf32>
    %56 = vector.extract_strided_slice %36 {offsets = [1, 1, 0, 0], sizes = [1, 1, 2, 64], strides = [1, 1, 1, 1]} : vector<2x2x2x64xbf16> to vector<1x1x2x64xbf16>
    %57 = vector.shape_cast %56 : vector<1x1x2x64xbf16> to vector<2x64xbf16>
    %c3 = arith.constant 3 : index
    %c0_21 = arith.constant 0 : index
    %c0_22 = arith.constant 0 : index
    %58 = vector.load %arg2[%c3, %c0_21, %c0_22] : memref<4x64x128xbf16, #tpu.memory_space<vmem>>, vector<1x64x128xbf16>
    %59 = vector.shape_cast %58 : vector<1x64x128xbf16> to vector<64x128xbf16>
    %cst_23 = arith.constant dense<0.000000e+00> : vector<2x128xf32>
    %60 = tpu.matmul %57, %59, %cst_23 {dimension_numbers = #tpu.dot_dimension_numbers<[1], [0], [0], [1], [0, 0, 1, 1], [], []>} : vector<2x64xbf16>, vector<64x128xbf16>, vector<2x128xf32> -> vector<2x128xf32>
    %61 = arith.addf %55, %60 : vector<2x128xf32>
    %c0_24 = arith.constant 0 : index
    %c0_25 = arith.constant 0 : index
    %62 = vector.load %arg3[%c0_24, %c0_25] : memref<1x128xf32, #tpu.memory_space<vmem>>, vector<1x128xf32>
    %63 = vector.broadcast %62 : vector<1x128xf32> to vector<2x128xf32>
    %64 = arith.addf %61, %63 : vector<2x128xf32>
    %cst_26 = arith.constant 0.000000e+00 : f32
    %65 = vector.broadcast %cst_26 : f32 to vector<2x128xf32>
    %66 = arith.maximumf %64, %65 : vector<2x128xf32>
    %67 = arith.truncf %66 : vector<2x128xf32> to vector<2x128xbf16>
    %c0_27 = arith.constant 0 : index
    %c0_28 = arith.constant 0 : index
    %68 = vector.load %arg4[%c0_27, %c0_28] : memref<128x128xbf16, #tpu.memory_space<vmem>>, vector<128x128xbf16>
    %cst_29 = arith.constant dense<0.000000e+00> : vector<2x128xf32>
    %69 = tpu.matmul %67, %68, %cst_29 {dimension_numbers = #tpu.dot_dimension_numbers<[1], [0], [0], [1], [0, 0, 1, 1], [], []>} : vector<2x128xbf16>, vector<128x128xbf16>, vector<2x128xf32> -> vector<2x128xf32>
    %c0_30 = arith.constant 0 : index
    %c0_31 = arith.constant 0 : index
    %70 = vector.load %arg5[%c0_30, %c0_31] : memref<1x128xf32, #tpu.memory_space<vmem>>, vector<1x128xf32>
    %71 = vector.broadcast %70 : vector<1x128xf32> to vector<2x128xf32>
    %72 = arith.addf %69, %71 : vector<2x128xf32>
    %73 = tpu.iota {dimensions = array<i32: 1>} : vector<2x128xi32>
    %c10_i32 = arith.constant 10 : i32
    %74 = vector.broadcast %c10_i32 : i32 to vector<2x128xi32>
    %75 = arith.cmpi slt, %73, %74 : vector<2x128xi32>
    %cst_32 = arith.constant -1.000000e+30 : f32
    %76 = vector.broadcast %cst_32 : f32 to vector<2x128xf32>
    %77 = arith.select %75, %72, %76 : vector<2x128xi1>, vector<2x128xf32>
    %cst_33 = arith.constant dense<0xFF800000> : vector<2xf32>
    %78 = vector.multi_reduction <maximumf>, %77, %cst_33 [1] : vector<2x128xf32> to vector<2xf32>
    %79 = vector.shape_cast %78 : vector<2xf32> to vector<2x1xf32>
    %80 = vector.broadcast %79 : vector<2x1xf32> to vector<2x128xf32>
    %81 = arith.subf %77, %80 : vector<2x128xf32>
    %82 = math.exp %81 : vector<2x128xf32>
    %cst_34 = arith.constant dense<0.000000e+00> : vector<2xf32>
    %83 = vector.multi_reduction <add>, %82, %cst_34 [1] : vector<2x128xf32> to vector<2xf32>
    %84 = vector.shape_cast %83 : vector<2xf32> to vector<2x1xf32>
    %85 = math.log %84 : vector<2x1xf32>
    %86 = vector.broadcast %85 : vector<2x1xf32> to vector<2x128xf32>
    %87 = arith.subf %81, %86 : vector<2x128xf32>
    %c0_35 = arith.constant 0 : index
    %c0_36 = arith.constant 0 : index
    %88 = vector.load %arg6[%c0_35, %c0_36] : memref<2x128xf32, #tpu.memory_space<vmem>>, vector<2x128xf32>
    tpu.vector_store %arg6[%c0_35, %c0_36], %87 {strides = array<i32>} : memref<2x128xf32, #tpu.memory_space<vmem>>, vector<2x128xf32>,
    return
  }
  func.func @transform_0(%arg0: i32) -> (i32, i32, i32, i32, i32, i32) {
    %c0_i32 = arith.constant 0 : i32
    %c0_i32_0 = arith.constant 0 : i32
    %c0_i32_1 = arith.constant 0 : i32
    %c0_i32_2 = arith.constant 0 : i32
    %c0_i32_3 = arith.constant 0 : i32
    %c0_i32_4 = arith.constant 0 : i32
    return %c0_i32, %c0_i32_0, %c0_i32_1, %c0_i32_2, %arg0, %c0_i32_3 : i32, i32, i32, i32, i32, i32
  }
  func.func @transform_1(%arg0: i32) -> (i32, i32, i32) {
    %c0_i32 = arith.constant 0 : i32
    %c0_i32_0 = arith.constant 0 : i32
    %c0_i32_1 = arith.constant 0 : i32
    %c0_i32_2 = arith.constant 0 : i32
    return %c0_i32, %c0_i32_0, %c0_i32_1 : i32, i32, i32
  }
  func.func @transform_2(%arg0: i32) -> (i32, i32) {
    %c0_i32 = arith.constant 0 : i32
    %c0_i32_0 = arith.constant 0 : i32
    %c0_i32_1 = arith.constant 0 : i32
    return %c0_i32, %c0_i32_0 : i32, i32
  }
  func.func @transform_3(%arg0: i32) -> (i32, i32) {
    %c0_i32 = arith.constant 0 : i32
    %c0_i32_0 = arith.constant 0 : i32
    %c0_i32_1 = arith.constant 0 : i32
    return %c0_i32, %c0_i32_0 : i32, i32
  }
  func.func @transform_4(%arg0: i32) -> (i32, i32) {
    %c0_i32 = arith.constant 0 : i32
    %c0_i32_0 = arith.constant 0 : i32
    %c0_i32_1 = arith.constant 0 : i32
    return %c0_i32, %c0_i32_0 : i32, i32
  }
  func.func @transform_5(%arg0: i32) -> (i32, i32) {
    %c0_i32 = arith.constant 0 : i32
    %c0_i32_0 = arith.constant 0 : i32
    return %arg0, %c0_i32 : i32, i32
  }
}

</mosaic_0001>

<llo_original>
// kernel: toynet_forward.4
$region0: #{toynet_forward.4}
  #allocation0 [shape = 'u32[]', space=smem, size = 0x4, offset = 0x4, fixed_abs, tag = 'smem constant byte address 0x4 - core index']
  #allocation1 [shape = 'u32[72,128]{1,0:T(1,128)}', space=vmem, size = 0x9000, scoped, tag = 'internal scratch']
  %s0 = inlined_call_operand.vmem [shape: bf16[512,32], index: 0, kind: input, shape index: {}]
  %s1 = inlined_call_operand.vmem [shape: bf16[32,32], index: 1, kind: input, shape index: {}]
  %s2 = inlined_call_operand.vmem [shape: f32[1,32], index: 2, kind: input, shape index: {}]
  %s3 = inlined_call_operand.vmem [shape: bf16[512,32], index: 3, kind: output, shape index: {}]
  %s4 = sld [smem:[#allocation0]]
  $region22: #{toynet_forward.4} parent=0
    _
  %s6 = ssub.s32 1, %s4
  %s7 = scalar_select 0, %s6, %s4
  // Predicated region
  $region2: #{toynet_forward.4} parent=0 // pred_check
    _
  $region3: #{toynet_forward.4} parent=0 // pred_check_branch
    %9 = sbr.rel (0) target = $region5
  $region4: #{toynet_forward.4} parent=0 // pred_region
    _
  $region5: #{toynet_forward.4} parent=0 // pred_fallthru
    _
  // Predicated region
  $region6: #{toynet_forward.4} parent=0 // pred_check
    _
  $region7: #{toynet_forward.4} parent=0 // pred_check_branch
    %11 = sbr.rel (0) target = $region9
  $region8: #{toynet_forward.4} parent=0 // pred_region
    _
  $region9: #{toynet_forward.4} parent=0 // pred_fallthru
    _
  // Predicated region
  $region10: #{toynet_forward.4} parent=0 // pred_check
    _
  $region11: #{toynet_forward.4} parent=0 // pred_check_branch
    %13 = sbr.rel (0) target = $region13
  $region12: #{toynet_forward.4} parent=0 // pred_region
    _
  $region13: #{toynet_forward.4} parent=0 // pred_fallthru
    _
  %v15 = vld [vmem:[%s0] sm:$0xf]
  %v16 = vld [vmem:[%s0 + $0x4] sm:$0xf]
  %v17 = vld [vmem:[%s0 + $0x8] sm:$0xf]
  %v18 = vld [vmem:[%s0 + $0xc] sm:$0xf]
  %v19 = vld [vmem:[%s0 + $0x10] sm:$0xf]
  %v20 = vld [vmem:[%s0 + $0x14] sm:$0xf]
  %v21 = vld [vmem:[%s0 + $0x18] sm:$0xf]
  %v22 = vld [vmem:[%s0 + $0x1c] sm:$0xf]
  %v23 = vld [vmem:[%s0 + $0x20] sm:$0xf]
  %v24 = vld [vmem:[%s0 + $0x24] sm:$0xf]
  %v25 = vld [vmem:[%s0 + $0x28] sm:$0xf]
  %v26 = vld [vmem:[%s0 + $0x2c] sm:$0xf]
  %v27 = vld [vmem:[%s0 + $0x30] sm:$0xf]
  %v28 = vld [vmem:[%s0 + $0x34] sm:$0xf]
  %v29 = vld [vmem:[%s0 + $0x38] sm:$0xf]
  %v30 = vld [vmem:[%s0 + $0x3c] sm:$0xf]
  %v31 = vld [vmem:[%s0 + $0x40] sm:$0xf]
  %v32 = vld [vmem:[%s0 + $0x44] sm:$0xf]
  %v33 = vld [vmem:[%s0 + $0x48] sm:$0xf]
  %v34 = vld [vmem:[%s0 + $0x4c] sm:$0xf]
  %v35 = vld [vmem:[%s0 + $0x50] sm:$0xf]
  %v36 = vld [vmem:[%s0 + $0x54] sm:$0xf]
  %v37 = vld [vmem:[%s0 + $0x58] sm:$0xf]
  %v38 = vld [vmem:[%s0 + $0x5c] sm:$0xf]
  %v39 = vld [vmem:[%s0 + $0x60] sm:$0xf]
  %v40 = vld [vmem:[%s0 + $0x64] sm:$0xf]
  %v41 = vld [vmem:[%s0 + $0x68] sm:$0xf]
  %v42 = vld [vmem:[%s0 + $0x6c] sm:$0xf]
  %v43 = vld [vmem:[%s0 + $0x70] sm:$0xf]
  %v44 = vld [vmem:[%s0 + $0x74] sm:$0xf]
  %v45 = vld [vmem:[%s0 + $0x78] sm:$0xf]
  %v46 = vld [vmem:[%s0 + $0x7c] sm:$0xf]
  %v47 = vld [vmem:[%s0 + $0x80] sm:$0xf]
  %v48 = vld [vmem:[%s0 + $0x84] sm:$0xf]
  %v49 = vld [vmem:[%s0 + $0x88] sm:$0xf]
  %v50 = vld [vmem:[%s0 + $0x8c] sm:$0xf]
  %v51 = vld [vmem:[%s0 + $0x90] sm:$0xf]
  %v52 = vld [vmem:[%s0 + $0x94] sm:$0xf]
  %v53 = vld [vmem:[%s0 + $0x98] sm:$0xf]
  %v54 = vld [vmem:[%s0 + $0x9c] sm:$0xf]
  %v55 = vld [vmem:[%s0 + $0xa0] sm:$0xf]
  %v56 = vld [vmem:[%s0 + $0xa4] sm:$0xf]
  %v57 = vld [vmem:[%s0 + $0xa8] sm:$0xf]
  %v58 = vld [vmem:[%s0 + $0xac] sm:$0xf]
  %v59 = vld [vmem:[%s0 + $0xb0] sm:$0xf]
  %v60 = vld [vmem:[%s0 + $0xb4] sm:$0xf]
  %v61 = vld [vmem:[%s0 + $0xb8] sm:$0xf]
  %v62 = vld [vmem:[%s0 + $0xbc] sm:$0xf]
  %v63 = vld [vmem:[%s0 + $0xc0] sm:$0xf]
  %v64 = vld [vmem:[%s0 + $0xc4] sm:$0xf]
  %v65 = vld [vmem:[%s0 + $0xc8] sm:$0xf]
  %v66 = vld [vmem:[%s0 + $0xcc] sm:$0xf]
  %v67 = vld [vmem:[%s0 + $0xd0] sm:$0xf]
  %v68 = vld [vmem:[%s0 + $0xd4] sm:$0xf]
  %v69 = vld [vmem:[%s0 + $0xd8] sm:$0xf]
  %v70 = vld [vmem:[%s0 + $0xdc] sm:$0xf]
  %v71 = vld [vmem:[%s0 + $0xe0] sm:$0xf]
  %v72 = vld [vmem:[%s0 + $0xe4] sm:$0xf]
  %v73 = vld [vmem:[%s0 + $0xe8] sm:$0xf]
  %v74 = vld [vmem:[%s0 + $0xec] sm:$0xf]
  %v75 = vld [vmem:[%s0 + $0xf0] sm:$0xf]
  %v76 = vld [vmem:[%s0 + $0xf4] sm:$0xf]
  %v77 = vld [vmem:[%s0 + $0xf8] sm:$0xf]
  %v78 = vld [vmem:[%s0 + $0xfc] sm:$0xf]
  %v79 = vld [vmem:[%s1] sm:$0xf]
  %v80 = vld [vmem:[%s1 + $0x4] sm:$0xf]
  %v81 = vld [vmem:[%s1 + $0x8] sm:$0xf]
  %v82 = vld [vmem:[%s1 + $0xc] sm:$0xf]
  %v83 = vld [vmem:[%s2] sm:$0x1]
  %v85 = vperm.slane %v83, 0
  %v151 = vunpack.c.l.b16 %v15
  %v152 = vunpack.c.l.b16 %v16
  %v153 = vunpack.c.l.b16 %v17
  %v154 = vunpack.c.l.b16 %v18
  %v155 = vunpack.c.l.b16 %v19
  %v156 = vunpack.c.l.b16 %v20
  %v157 = vunpack.c.l.b16 %v21
  %v158 = vunpack.c.l.b16 %v22
  %v159 = vunpack.c.l.b16 %v23
  %v160 = vunpack.c.l.b16 %v24
  %v161 = vunpack.c.l.b16 %v25
  %v162 = vunpack.c.l.b16 %v26
  %v163 = vunpack.c.l.b16 %v27
  %v164 = vunpack.c.l.b16 %v28
  %v165 = vunpack.c.l.b16 %v29
  %v166 = vunpack.c.l.b16 %v30
  %v167 = vunpack.c.l.b16 %v31
  %v168 = vunpack.c.l.b16 %v32
  %v169 = vunpack.c.l.b16 %v33
  %v170 = vunpack.c.l.b16 %v34
  %v171 = vunpack.c.l.b16 %v35
  %v172 = vunpack.c.l.b16 %v36
  %v173 = vunpack.c.l.b16 %v37
  %v174 = vunpack.c.l.b16 %v38
  %v175 = vunpack.c.l.b16 %v39
  %v176 = vunpack.c.l.b16 %v40
  %v177 = vunpack.c.l.b16 %v41
  %v178 = vunpack.c.l.b16 %v42
  %v179 = vunpack.c.l.b16 %v43
  %v180 = vunpack.c.l.b16 %v44
  %v181 = vunpack.c.l.b16 %v45
  %v182 = vunpack.c.l.b16 %v46
  %v183 = vunpack.c.l.b16 %v47
  %v184 = vunpack.c.l.b16 %v48
  %v185 = vunpack.c.l.b16 %v49
  %v186 = vunpack.c.l.b16 %v50
  %v187 = vunpack.c.l.b16 %v51
  %v188 = vunpack.c.l.b16 %v52
  %v189 = vunpack.c.l.b16 %v53
  %v190 = vunpack.c.l.b16 %v54
  %v191 = vunpack.c.l.b16 %v55
  %v192 = vunpack.c.l.b16 %v56
  %v193 = vunpack.c.l.b16 %v57
  %v194 = vunpack.c.l.b16 %v58
  %v195 = vunpack.c.l.b16 %v59
  %v196 = vunpack.c.l.b16 %v60
  %v197 = vunpack.c.l.b16 %v61
  %v198 = vunpack.c.l.b16 %v62
  %v199 = vunpack.c.l.b16 %v63
  %v200 = vunpack.c.l.b16 %v64
  %v201 = vunpack.c.l.b16 %v65
  %v202 = vunpack.c.l.b16 %v66
  %v203 = vunpack.c.l.b16 %v67
  %v204 = vunpack.c.l.b16 %v68
  %v205 = vunpack.c.l.b16 %v69
  %v206 = vunpack.c.l.b16 %v70
  %v207 = vunpack.c.l.b16 %v71
  %v208 = vunpack.c.l.b16 %v72
  %v209 = vunpack.c.l.b16 %v73
  %v210 = vunpack.c.l.b16 %v74
  %v211 = vunpack.c.l.b16 %v75
  %v212 = vunpack.c.l.b16 %v76
  %v213 = vunpack.c.l.b16 %v77
  %v214 = vunpack.c.l.b16 %v78
  %v215 = vpack.c.b16 %v152, %v151
  %v216 = vpack.c.b16 %v154, %v153
  %v217 = vpack.c.b16 %v156, %v155
  %v218 = vpack.c.b16 %v158, %v157
  %v219 = vpack.c.b16 %v160, %v159
  %v220 = vpack.c.b16 %v162, %v161
  %v221 = vpack.c.b16 %v164, %v163
  %v222 = vpack.c.b16 %v166, %v165
  %v223 = vpack.c.b16 %v168, %v167
  %v224 = vpack.c.b16 %v170, %v169
  %v225 = vpack.c.b16 %v172, %v171
  %v226 = vpack.c.b16 %v174, %v173
  %v227 = vpack.c.b16 %v176, %v175
  %v228 = vpack.c.b16 %v178, %v177
  %v229 = vpack.c.b16 %v180, %v179
  %v230 = vpack.c.b16 %v182, %v181
  %v231 = vpack.c.b16 %v184, %v183
  %v232 = vpack.c.b16 %v186, %v185
  %v233 = vpack.c.b16 %v188, %v187
  %v234 = vpack.c.b16 %v190, %v189
  %v235 = vpack.c.b16 %v192, %v191
  %v236 = vpack.c.b16 %v194, %v193
  %v237 = vpack.c.b16 %v196, %v195
  %v238 = vpack.c.b16 %v198, %v197
  %v239 = vpack.c.b16 %v200, %v199
  %v240 = vpack.c.b16 %v202, %v201
  %v241 = vpack.c.b16 %v204, %v203
  %v242 = vpack.c.b16 %v206, %v205
  %v243 = vpack.c.b16 %v208, %v207
  %v244 = vpack.c.b16 %v210, %v209
  %v245 = vpack.c.b16 %v212, %v211
  %v246 = vpack.c.b16 %v214, %v213
  %v251 = vunpack.c.l.b16 %v79
  %v252 = vunpack.c.l.b16 %v80
  %v253 = vunpack.c.l.b16 %v81
  %v254 = vunpack.c.l.b16 %v82
  %v255 = vpack.c.b16 %v252, %v251
  %v256 = vpack.c.b16 %v254, %v253
  %vm259 = vcmask 261120
  %v261 = vsel %vm259, %v215, 0
  %v264 = vsel %vm259, %v216, 0
  %v267 = vsel %vm259, %v217, 0
  %v270 = vsel %vm259, %v218, 0
  %v273 = vsel %vm259, %v219, 0
  %v276 = vsel %vm259, %v220, 0
  %v279 = vsel %vm259, %v221, 0
  %v282 = vsel %vm259, %v222, 0
  %v285 = vsel %vm259, %v223, 0
  %v288 = vsel %vm259, %v224, 0
  %v291 = vsel %vm259, %v225, 0
  %v294 = vsel %vm259, %v226, 0
  %v297 = vsel %vm259, %v227, 0
  %v300 = vsel %vm259, %v228, 0
  %v303 = vsel %vm259, %v229, 0
  %v306 = vsel %vm259, %v230, 0
  %v309 = vsel %vm259, %v231, 0
  %v312 = vsel %vm259, %v232, 0
  %v315 = vsel %vm259, %v233, 0
  %v318 = vsel %vm259, %v234, 0
  %v321 = vsel %vm259, %v235, 0
  %v324 = vsel %vm259, %v236, 0
  %v327 = vsel %vm259, %v237, 0
  %v330 = vsel %vm259, %v238, 0
  %v333 = vsel %vm259, %v239, 0
  %v336 = vsel %vm259, %v240, 0
  %v339 = vsel %vm259, %v241, 0
  %v342 = vsel %vm259, %v242, 0
  %v345 = vsel %vm259, %v243, 0
  %v348 = vsel %vm259, %v244, 0
  %v351 = vsel %vm259, %v245, 0
  %v354 = vsel %vm259, %v246, 0
  %356 = vmatpush.bf16.msra.mxu0 0
  %357 = vmatpush.bf16.msra.mxu0 0
  %358 = vmatpush.bf16.msra.mxu0 0
  %359 = vmatpush.bf16.msra.mxu0 0
  %360 = vmatpush.bf16.msra.mxu0 0
  %361 = vmatpush.bf16.msra.mxu0 0
  %362 = vmatpush.bf16.msra.mxu0 %v256
  %363 = vmatpush.bf16.msra.mxu0 %v255
  %364 = vmatmul.bf16.gmra.mxu0 %v261
  %v365 = vpop.f32.mrf.mxu0
  %v366 = vadd.f32 %v85, %v365
  %v367 = vpop.f32.mrf.mxu0
  %v368 = vadd.f32 %v85, %v367
  %369 = vmatmul.bf16.gmra.mxu0 %v264
  %v370 = vpop.f32.mrf.mxu0
  %v371 = vadd.f32 %v85, %v370
  %v372 = vpop.f32.mrf.mxu0
  %v373 = vadd.f32 %v85, %v372
  %374 = vmatmul.bf16.gmra.mxu0 %v267
  %v375 = vpop.f32.mrf.mxu0
  %v376 = vadd.f32 %v85, %v375
  %v377 = vpop.f32.mrf.mxu0
  %v378 = vadd.f32 %v85, %v377
  %379 = vmatmul.bf16.gmra.mxu0 %v270
  %v380 = vpop.f32.mrf.mxu0
  %v381 = vadd.f32 %v85, %v380
  %v382 = vpop.f32.mrf.mxu0
  %v383 = vadd.f32 %v85, %v382
  %384 = vmatmul.bf16.gmra.mxu0 %v273
  %v385 = vpop.f32.mrf.mxu0
  %v386 = vadd.f32 %v85, %v385
  %v387 = vpop.f32.mrf.mxu0
  %v388 = vadd.f32 %v85, %v387
  %389 = vmatmul.bf16.gmra.mxu0 %v276
  %v390 = vpop.f32.mrf.mxu0
  %v391 = vadd.f32 %v85, %v390
  %v392 = vpop.f32.mrf.mxu0
  %v393 = vadd.f32 %v85, %v392
  %394 = vmatmul.bf16.gmra.mxu0 %v279
  %v395 = vpop.f32.mrf.mxu0
  %v396 = vadd.f32 %v85, %v395
  %v397 = vpop.f32.mrf.mxu0
  %v398 = vadd.f32 %v85, %v397
  %399 = vmatmul.bf16.gmra.mxu0 %v282
  %v400 = vpop.f32.mrf.mxu0
  %v401 = vadd.f32 %v85, %v400
  %v402 = vpop.f32.mrf.mxu0
  %v403 = vadd.f32 %v85, %v402
  %404 = vmatmul.bf16.gmra.mxu0 %v285
  %v405 = vpop.f32.mrf.mxu0
  %v406 = vadd.f32 %v85, %v405
  %v407 = vpop.f32.mrf.mxu0
  %v408 = vadd.f32 %v85, %v407
  %409 = vmatmul.bf16.gmra.mxu0 %v288
  %v410 = vpop.f32.mrf.mxu0
  %v411 = vadd.f32 %v85, %v410
  %v412 = vpop.f32.mrf.mxu0
  %v413 = vadd.f32 %v85, %v412
  %414 = vmatmul.bf16.gmra.mxu0 %v291
  %v415 = vpop.f32.mrf.mxu0
  %v416 = vadd.f32 %v85, %v415
  %v417 = vpop.f32.mrf.mxu0
  %v418 = vadd.f32 %v85, %v417
  %419 = vmatmul.bf16.gmra.mxu0 %v294
  %v420 = vpop.f32.mrf.mxu0
  %v421 = vadd.f32 %v85, %v420
  %v422 = vpop.f32.mrf.mxu0
  %v423 = vadd.f32 %v85, %v422
  %424 = vmatmul.bf16.gmra.mxu0 %v297
  %v425 = vpop.f32.mrf.mxu0
  %v426 = vadd.f32 %v85, %v425
  %v427 = vpop.f32.mrf.mxu0
  %v428 = vadd.f32 %v85, %v427
  %429 = vmatmul.bf16.gmra.mxu0 %v300
  %v430 = vpop.f32.mrf.mxu0
  %v431 = vadd.f32 %v85, %v430
  %v432 = vpop.f32.mrf.mxu0
  %v433 = vadd.f32 %v85, %v432
  %434 = vmatmul.bf16.gmra.mxu0 %v303
  %v435 = vpop.f32.mrf.mxu0
  %v436 = vadd.f32 %v85, %v435
  %v437 = vpop.f32.mrf.mxu0
  %v438 = vadd.f32 %v85, %v437
  %439 = vmatmul.bf16.gmra.mxu0 %v306
  %v440 = vpop.f32.mrf.mxu0
  %v441 = vadd.f32 %v85, %v440
  %v442 = vpop.f32.mrf.mxu0
  %v443 = vadd.f32 %v85, %v442
  %444 = vmatmul.bf16.gmra.mxu0 %v309
  %v445 = vpop.f32.mrf.mxu0
  %v446 = vadd.f32 %v85, %v445
  %v447 = vpop.f32.mrf.mxu0
  %v448 = vadd.f32 %v85, %v447
  %449 = vmatmul.bf16.gmra.mxu0 %v312
  %v450 = vpop.f32.mrf.mxu0
  %v451 = vadd.f32 %v85, %v450
  %v452 = vpop.f32.mrf.mxu0
  %v453 = vadd.f32 %v85, %v452
  %454 = vmatmul.bf16.gmra.mxu0 %v315
  %v455 = vpop.f32.mrf.mxu0
  %v456 = vadd.f32 %v85, %v455
  %v457 = vpop.f32.mrf.mxu0
  %v458 = vadd.f32 %v85, %v457
  %459 = vmatmul.bf16.gmra.mxu0 %v318
  %v460 = vpop.f32.mrf.mxu0
  %v461 = vadd.f32 %v85, %v460
  %v462 = vpop.f32.mrf.mxu0
  %v463 = vadd.f32 %v85, %v462
  %464 = vmatmul.bf16.gmra.mxu0 %v321
  %v465 = vpop.f32.mrf.mxu0
  %v466 = vadd.f32 %v85, %v465
  %v467 = vpop.f32.mrf.mxu0
  %v468 = vadd.f32 %v85, %v467
  %469 = vmatmul.bf16.gmra.mxu0 %v324
  %v470 = vpop.f32.mrf.mxu0
  %v471 = vadd.f32 %v85, %v470
  %v472 = vpop.f32.mrf.mxu0
  %v473 = vadd.f32 %v85, %v472
  %474 = vmatmul.bf16.gmra.mxu0 %v327
  %v475 = vpop.f32.mrf.mxu0
  %v476 = vadd.f32 %v85, %v475
  %v477 = vpop.f32.mrf.mxu0
  %v478 = vadd.f32 %v85, %v477
  %479 = vmatmul.bf16.gmra.mxu0 %v330
  %v480 = vpop.f32.mrf.mxu0
  %v481 = vadd.f32 %v85, %v480
  %v482 = vpop.f32.mrf.mxu0
  %v483 = vadd.f32 %v85, %v482
  %484 = vmatmul.bf16.gmra.mxu0 %v333
  %v485 = vpop.f32.mrf.mxu0
  %v486 = vadd.f32 %v85, %v485
  %v487 = vpop.f32.mrf.mxu0
  %v488 = vadd.f32 %v85, %v487
  %489 = vmatmul.bf16.gmra.mxu0 %v336
  %v490 = vpop.f32.mrf.mxu0
  %v491 = vadd.f32 %v85, %v490
  %v492 = vpop.f32.mrf.mxu0
  %v493 = vadd.f32 %v85, %v492
  %494 = vmatmul.bf16.gmra.mxu0 %v339
  %v495 = vpop.f32.mrf.mxu0
  %v496 = vadd.f32 %v85, %v495
  %v497 = vpop.f32.mrf.mxu0
  %v498 = vadd.f32 %v85, %v497
  %499 = vmatmul.bf16.gmra.mxu0 %v342
  %v500 = vpop.f32.mrf.mxu0
  %v501 = vadd.f32 %v85, %v500
  %v502 = vpop.f32.mrf.mxu0
  %v503 = vadd.f32 %v85, %v502
  %504 = vmatmul.bf16.gmra.mxu0 %v345
  %v505 = vpop.f32.mrf.mxu0
  %v506 = vadd.f32 %v85, %v505
  %v507 = vpop.f32.mrf.mxu0
  %v508 = vadd.f32 %v85, %v507
  %509 = vmatmul.bf16.gmra.mxu0 %v348
  %v510 = vpop.f32.mrf.mxu0
  %v511 = vadd.f32 %v85, %v510
  %v512 = vpop.f32.mrf.mxu0
  %v513 = vadd.f32 %v85, %v512
  %514 = vmatmul.bf16.gmra.mxu0 %v351
  %v515 = vpop.f32.mrf.mxu0
  %v516 = vadd.f32 %v85, %v515
  %v517 = vpop.f32.mrf.mxu0
  %v518 = vadd.f32 %v85, %v517
  %519 = vmatmul.bf16.gmra.mxu0 %v354
  %v520 = vpop.f32.mrf.mxu0
  %v521 = vadd.f32 %v85, %v520
  %v522 = vpop.f32.mrf.mxu0
  %v523 = vadd.f32 %v85, %v522
  %524 = vdwg.mxu0
  %v525 = vmax.f32 %v366, 0.0
  %v526 = vmax.f32 %v368, 0.0
  %v527 = vmax.f32 %v371, 0.0
  %v528 = vmax.f32 %v373, 0.0
  %v529 = vmax.f32 %v376, 0.0
  %v530 = vmax.f32 %v378, 0.0
  %v531 = vmax.f32 %v381, 0.0
  %v532 = vmax.f32 %v383, 0.0
  %v533 = vmax.f32 %v386, 0.0
  %v534 = vmax.f32 %v388, 0.0
  %v535 = vmax.f32 %v391, 0.0
  %v536 = vmax.f32 %v393, 0.0
  %v537 = vmax.f32 %v396, 0.0
  %v538 = vmax.f32 %v398, 0.0
  %v539 = vmax.f32 %v401, 0.0
  %v540 = vmax.f32 %v403, 0.0
  %v541 = vmax.f32 %v406, 0.0
  %v542 = vmax.f32 %v408, 0.0
  %v543 = vmax.f32 %v411, 0.0
  %v544 = vmax.f32 %v413, 0.0
  %v545 = vmax.f32 %v416, 0.0
  %v546 = vmax.f32 %v418, 0.0
  %v547 = vmax.f32 %v421, 0.0
  %v548 = vmax.f32 %v423, 0.0
  %v549 = vmax.f32 %v426, 0.0
  %v550 = vmax.f32 %v428, 0.0
  %v551 = vmax.f32 %v431, 0.0
  %v552 = vmax.f32 %v433, 0.0
  %v553 = vmax.f32 %v436, 0.0
  %v554 = vmax.f32 %v438, 0.0
  %v555 = vmax.f32 %v441, 0.0
  %v556 = vmax.f32 %v443, 0.0
  %v557 = vmax.f32 %v446, 0.0
  %v558 = vmax.f32 %v448, 0.0
  %v559 = vmax.f32 %v451, 0.0
  %v560 = vmax.f32 %v453, 0.0
  %v561 = vmax.f32 %v456, 0.0
  %v562 = vmax.f32 %v458, 0.0
  %v563 = vmax.f32 %v461, 0.0
  %v564 = vmax.f32 %v463, 0.0
  %v565 = vmax.f32 %v466, 0.0
  %v566 = vmax.f32 %v468, 0.0
  %v567 = vmax.f32 %v471, 0.0
  %v568 = vmax.f32 %v473, 0.0
  %v569 = vmax.f32 %v476, 0.0
  %v570 = vmax.f32 %v478, 0.0
  %v571 = vmax.f32 %v481, 0.0
  %v572 = vmax.f32 %v483, 0.0
  %v573 = vmax.f32 %v486, 0.0
  %v574 = vmax.f32 %v488, 0.0
  %v575 = vmax.f32 %v491, 0.0
  %v576 = vmax.f32 %v493, 0.0
  %v577 = vmax.f32 %v496, 0.0
  %v578 = vmax.f32 %v498, 0.0
  %v579 = vmax.f32 %v501, 0.0
  %v580 = vmax.f32 %v503, 0.0
  %v581 = vmax.f32 %v506, 0.0
  %v582 = vmax.f32 %v508, 0.0
  %v583 = vmax.f32 %v511, 0.0
  %v584 = vmax.f32 %v513, 0.0
  %v585 = vmax.f32 %v516, 0.0
  %v586 = vmax.f32 %v518, 0.0
  %v587 = vmax.f32 %v521, 0.0
  %v588 = vmax.f32 %v523, 0.0
  %v589 = vpack.c.bf16 %v525, %v525
  %v590 = vpack.c.bf16 %v526, %v526
  %v591 = vpack.c.bf16 %v527, %v527
  %v592 = vpack.c.bf16 %v528, %v528
  %v593 = vpack.c.bf16 %v529, %v529
  %v594 = vpack.c.bf16 %v530, %v530
  %v595 = vpack.c.bf16 %v531, %v531
  %v596 = vpack.c.bf16 %v532, %v532
  %v597 = vpack.c.bf16 %v533, %v533
  %v598 = vpack.c.bf16 %v534, %v534
  %v599 = vpack.c.bf16 %v535, %v535
  %v600 = vpack.c.bf16 %v536, %v536
  %v601 = vpack.c.bf16 %v537, %v537
  %v602 = vpack.c.bf16 %v538, %v538
  %v603 = vpack.c.bf16 %v539, %v539
  %v604 = vpack.c.bf16 %v540, %v540
  %v605 = vpack.c.bf16 %v541, %v541
  %v606 = vpack.c.bf16 %v542, %v542
  %v607 = vpack.c.bf16 %v543, %v543
  %v608 = vpack.c.bf16 %v544, %v544
  %v609 = vpack.c.bf16 %v545, %v545
  %v610 = vpack.c.bf16 %v546, %v546
  %v611 = vpack.c.bf16 %v547, %v547
  %v612 = vpack.c.bf16 %v548, %v548
  %v613 = vpack.c.bf16 %v549, %v549
  %v614 = vpack.c.bf16 %v550, %v550
  %v615 = vpack.c.bf16 %v551, %v551
  %v616 = vpack.c.bf16 %v552, %v552
  %v617 = vpack.c.bf16 %v553, %v553
  %v618 = vpack.c.bf16 %v554, %v554
  %v619 = vpack.c.bf16 %v555, %v555
  %v620 = vpack.c.bf16 %v556, %v556
  %v621 = vpack.c.bf16 %v557, %v557
  %v622 = vpack.c.bf16 %v558, %v558
  %v623 = vpack.c.bf16 %v559, %v559
  %v624 = vpack.c.bf16 %v560, %v560
  %v625 = vpack.c.bf16 %v561, %v561
  %v626 = vpack.c.bf16 %v562, %v562
  %v627 = vpack.c.bf16 %v563, %v563
  %v628 = vpack.c.bf16 %v564, %v564
  %v629 = vpack.c.bf16 %v565, %v565
  %v630 = vpack.c.bf16 %v566, %v566
  %v631 = vpack.c.bf16 %v567, %v567
  %v632 = vpack.c.bf16 %v568, %v568
  %v633 = vpack.c.bf16 %v569, %v569
  %v634 = vpack.c.bf16 %v570, %v570
  %v635 = vpack.c.bf16 %v571, %v571
  %v636 = vpack.c.bf16 %v572, %v572
  %v637 = vpack.c.bf16 %v573, %v573
  %v638 = vpack.c.bf16 %v574, %v574
  %v639 = vpack.c.bf16 %v575, %v575
  %v640 = vpack.c.bf16 %v576, %v576
  %v641 = vpack.c.bf16 %v577, %v577
  %v642 = vpack.c.bf16 %v578, %v578
  %v643 = vpack.c.bf16 %v579, %v579
  %v644 = vpack.c.bf16 %v580, %v580
  %v645 = vpack.c.bf16 %v581, %v581
  %v646 = vpack.c.bf16 %v582, %v582
  %v647 = vpack.c.bf16 %v583, %v583
  %v648 = vpack.c.bf16 %v584, %v584
  %v649 = vpack.c.bf16 %v585, %v585
  %v650 = vpack.c.bf16 %v586, %v586
  %v651 = vpack.c.bf16 %v587, %v587
  %v652 = vpack.c.bf16 %v588, %v588
  %vm653 = vcmask 257024
  %654 = vst.msk [vmem:[%s3] sm:$0xf] %vm653, %v589
  %655 = vst.msk [vmem:[%s3 + $0x4] sm:$0xf] %vm653, %v590
  %656 = vst.msk [vmem:[%s3 + $0x8] sm:$0xf] %vm653, %v591
  %657 = vst.msk [vmem:[%s3 + $0xc] sm:$0xf] %vm653, %v592
  %658 = vst.msk [vmem:[%s3 + $0x10] sm:$0xf] %vm653, %v593
  %659 = vst.msk [vmem:[%s3 + $0x14] sm:$0xf] %vm653, %v594
  %660 = vst.msk [vmem:[%s3 + $0x18] sm:$0xf] %vm653, %v595
  %661 = vst.msk [vmem:[%s3 + $0x1c] sm:$0xf] %vm653, %v596
  %662 = vst.msk [vmem:[%s3 + $0x20] sm:$0xf] %vm653, %v597
  %663 = vst.msk [vmem:[%s3 + $0x24] sm:$0xf] %vm653, %v598
  %664 = vst.msk [vmem:[%s3 + $0x28] sm:$0xf] %vm653, %v599
  %665 = vst.msk [vmem:[%s3 + $0x2c] sm:$0xf] %vm653, %v600
  %666 = vst.msk [vmem:[%s3 + $0x30] sm:$0xf] %vm653, %v601
  %667 = vst.msk [vmem:[%s3 + $0x34] sm:$0xf] %vm653, %v602
  %668 = vst.msk [vmem:[%s3 + $0x38] sm:$0xf] %vm653, %v603
  %669 = vst.msk [vmem:[%s3 + $0x3c] sm:$0xf] %vm653, %v604
  %670 = vst.msk [vmem:[%s3 + $0x40] sm:$0xf] %vm653, %v605
  %671 = vst.msk [vmem:[%s3 + $0x44] sm:$0xf] %vm653, %v606
  %672 = vst.msk [vmem:[%s3 + $0x48] sm:$0xf] %vm653, %v607
  %673 = vst.msk [vmem:[%s3 + $0x4c] sm:$0xf] %vm653, %v608
  %674 = vst.msk [vmem:[%s3 + $0x50] sm:$0xf] %vm653, %v609
  %675 = vst.msk [vmem:[%s3 + $0x54] sm:$0xf] %vm653, %v610
  %676 = vst.msk [vmem:[%s3 + $0x58] sm:$0xf] %vm653, %v611
  %677 = vst.msk [vmem:[%s3 + $0x5c] sm:$0xf] %vm653, %v612
  %678 = vst.msk [vmem:[%s3 + $0x60] sm:$0xf] %vm653, %v613
  %679 = vst.msk [vmem:[%s3 + $0x64] sm:$0xf] %vm653, %v614
  %680 = vst.msk [vmem:[%s3 + $0x68] sm:$0xf] %vm653, %v615
  %681 = vst.msk [vmem:[%s3 + $0x6c] sm:$0xf] %vm653, %v616
  %682 = vst.msk [vmem:[%s3 + $0x70] sm:$0xf] %vm653, %v617
  %683 = vst.msk [vmem:[%s3 + $0x74] sm:$0xf] %vm653, %v618
  %684 = vst.msk [vmem:[%s3 + $0x78] sm:$0xf] %vm653, %v619
  %685 = vst.msk [vmem:[%s3 + $0x7c] sm:$0xf] %vm653, %v620
  %686 = vst.msk [vmem:[%s3 + $0x80] sm:$0xf] %vm653, %v621
  %687 = vst.msk [vmem:[%s3 + $0x84] sm:$0xf] %vm653, %v622
  %688 = vst.msk [vmem:[%s3 + $0x88] sm:$0xf] %vm653, %v623
  %689 = vst.msk [vmem:[%s3 + $0x8c] sm:$0xf] %vm653, %v624
  %690 = vst.msk [vmem:[%s3 + $0x90] sm:$0xf] %vm653, %v625
  %691 = vst.msk [vmem:[%s3 + $0x94] sm:$0xf] %vm653, %v626
  %692 = vst.msk [vmem:[%s3 + $0x98] sm:$0xf] %vm653, %v627
  %693 = vst.msk [vmem:[%s3 + $0x9c] sm:$0xf] %vm653, %v628
  %694 = vst.msk [vmem:[%s3 + $0xa0] sm:$0xf] %vm653, %v629
  %695 = vst.msk [vmem:[%s3 + $0xa4] sm:$0xf] %vm653, %v630
  %696 = vst.msk [vmem:[%s3 + $0xa8] sm:$0xf] %vm653, %v631
  %697 = vst.msk [vmem:[%s3 + $0xac] sm:$0xf] %vm653, %v632
  %698 = vst.msk [vmem:[%s3 + $0xb0] sm:$0xf] %vm653, %v633
  %699 = vst.msk [vmem:[%s3 + $0xb4] sm:$0xf] %vm653, %v634
  %700 = vst.msk [vmem:[%s3 + $0xb8] sm:$0xf] %vm653, %v635
  %701 = vst.msk [vmem:[%s3 + $0xbc] sm:$0xf] %vm653, %v636
  %702 = vst.msk [vmem:[%s3 + $0xc0] sm:$0xf] %vm653, %v637
  %703 = vst.msk [vmem:[%s3 + $0xc4] sm:$0xf] %vm653, %v638
  %704 = vst.msk [vmem:[%s3 + $0xc8] sm:$0xf] %vm653, %v639
  %705 = vst.msk [vmem:[%s3 + $0xcc] sm:$0xf] %vm653, %v640
  %706 = vst.msk [vmem:[%s3 + $0xd0] sm:$0xf] %vm653, %v641
  %707 = vst.msk [vmem:[%s3 + $0xd4] sm:$0xf] %vm653, %v642
  %708 = vst.msk [vmem:[%s3 + $0xd8] sm:$0xf] %vm653, %v643
  %709 = vst.msk [vmem:[%s3 + $0xdc] sm:$0xf] %vm653, %v644
  %710 = vst.msk [vmem:[%s3 + $0xe0] sm:$0xf] %vm653, %v645
  %711 = vst.msk [vmem:[%s3 + $0xe4] sm:$0xf] %vm653, %v646
  %712 = vst.msk [vmem:[%s3 + $0xe8] sm:$0xf] %vm653, %v647
  %713 = vst.msk [vmem:[%s3 + $0xec] sm:$0xf] %vm653, %v648
  %714 = vst.msk [vmem:[%s3 + $0xf0] sm:$0xf] %vm653, %v649
  %715 = vst.msk [vmem:[%s3 + $0xf4] sm:$0xf] %vm653, %v650
  %716 = vst.msk [vmem:[%s3 + $0xf8] sm:$0xf] %vm653, %v651
  %717 = vst.msk [vmem:[%s3 + $0xfc] sm:$0xf] %vm653, %v652
  // Predicated region
  $region14: #{toynet_forward.4} parent=0 // pred_check
    _
  $region15: #{toynet_forward.4} parent=0 // pred_check_branch
    %719 = sbr.rel (0) target = $region17
  $region16: #{toynet_forward.4} parent=0 // pred_region
    _
  $region17: #{toynet_forward.4} parent=0 // pred_fallthru
    _
  // Predicated region
  $region18: #{toynet_forward.4} parent=0 // pred_check
    _
  $region19: #{toynet_forward.4} parent=0 // pred_check_branch
    %721 = sbr.rel (0) target = $region21
  $region20: #{toynet_forward.4} parent=0 // pred_region
    _
  $region21: #{toynet_forward.4} parent=0 // pred_fallthru
    _

// kernel: toynet_forward.5
$region0: #{toynet_forward.5}
  #allocation0 [shape = 'u32[]', space=smem, size = 0x4, offset = 0x4, fixed_abs, tag = 'smem constant byte address 0x4 - core index']
  #allocation1 [shape = 'u32[72,128]{1,0:T(1,128)}', space=vmem, size = 0x9000, scoped, tag = 'internal scratch']
  %s0 = inlined_call_operand.vmem [shape: bf16[2,2,8,8,2,32], index: 0, kind: input, shape index: {}]
  %s1 = inlined_call_operand.vmem [shape: bf16[8,8,2,32], index: 1, kind: output, shape index: {}]
  %s2 = sld [smem:[#allocation0]]
  $region14: #{toynet_forward.5} parent=0
    _
  %s4 = ssub.s32 1, %s2
  %s5 = scalar_select 0, %s4, %s2
  // Predicated region
  $region2: #{toynet_forward.5} parent=0 // pred_check
    _
  $region3: #{toynet_forward.5} parent=0 // pred_check_branch
    %7 = sbr.rel (0) target = $region5
  $region4: #{toynet_forward.5} parent=0 // pred_region
    _
  $region5: #{toynet_forward.5} parent=0 // pred_fallthru
    _
  %v8 = vld [vmem:[%s0] sm:$0x1]
  %v9 = vld [vmem:[%s0 + $0x1] sm:$0x1]
  %v10 = vld [vmem:[%s0 + $0x2] sm:$0x1]
  %v11 = vld [vmem:[%s0 + $0x3] sm:$0x1]
  %v12 = vld [vmem:[%s0 + $0x4] sm:$0x1]
  %v13 = vld [vmem:[%s0 + $0x5] sm:$0x1]
  %v14 = vld [vmem:[%s0 + $0x6] sm:$0x1]
  %v15 = vld [vmem:[%s0 + $0x7] sm:$0x1]
  %v16 = vld [vmem:[%s0 + $0x8] sm:$0x1]
  %v17 = vld [vmem:[%s0 + $0x9] sm:$0x1]
  %v18 = vld [vmem:[%s0 + $0xa] sm:$0x1]
  %v19 = vld [vmem:[%s0 + $0xb] sm:$0x1]
  %v20 = vld [vmem:[%s0 + $0xc] sm:$0x1]
  %v21 = vld [vmem:[%s0 + $0xd] sm:$0x1]
  %v22 = vld [vmem:[%s0 + $0xe] sm:$0x1]
  %v23 = vld [vmem:[%s0 + $0xf] sm:$0x1]
  %v24 = vld [vmem:[%s0 + $0x10] sm:$0x1]
  %v25 = vld [vmem:[%s0 + $0x11] sm:$0x1]
  %v26 = vld [vmem:[%s0 + $0x12] sm:$0x1]
  %v27 = vld [vmem:[%s0 + $0x13] sm:$0x1]
  %v28 = vld [vmem:[%s0 + $0x14] sm:$0x1]
  %v29 = vld [vmem:[%s0 + $0x15] sm:$0x1]
  %v30 = vld [vmem:[%s0 + $0x16] sm:$0x1]
  %v31 = vld [vmem:[%s0 + $0x17] sm:$0x1]
  %v32 = vld [vmem:[%s0 + $0x18] sm:$0x1]
  %v33 = vld [vmem:[%s0 + $0x19] sm:$0x1]
  %v34 = vld [vmem:[%s0 + $0x1a] sm:$0x1]
  %v35 = vld [vmem:[%s0 + $0x1b] sm:$0x1]
  %v36 = vld [vmem:[%s0 + $0x1c] sm:$0x1]
  %v37 = vld [vmem:[%s0 + $0x1d] sm:$0x1]
  %v38 = vld [vmem:[%s0 + $0x1e] sm:$0x1]
  %v39 = vld [vmem:[%s0 + $0x1f] sm:$0x1]
  %v40 = vld [vmem:[%s0 + $0x20] sm:$0x1]
  %v41 = vld [vmem:[%s0 + $0x21] sm:$0x1]
  %v42 = vld [vmem:[%s0 + $0x22] sm:$0x1]
  %v43 = vld [vmem:[%s0 + $0x23] sm:$0x1]
  %v44 = vld [vmem:[%s0 + $0x24] sm:$0x1]
  %v45 = vld [vmem:[%s0 + $0x25] sm:$0x1]
  %v46 = vld [vmem:[%s0 + $0x26] sm:$0x1]
  %v47 = vld [vmem:[%s0 + $0x27] sm:$0x1]
  %v48 = vld [vmem:[%s0 + $0x28] sm:$0x1]
  %v49 = vld [vmem:[%s0 + $0x29] sm:$0x1]
  %v50 = vld [vmem:[%s0 + $0x2a] sm:$0x1]
  %v51 = vld [vmem:[%s0 + $0x2b] sm:$0x1]
  %v52 = vld [vmem:[%s0 + $0x2c] sm:$0x1]
  %v53 = vld [vmem:[%s0 + $0x2d] sm:$0x1]
  %v54 = vld [vmem:[%s0 + $0x2e] sm:$0x1]
  %v55 = vld [vmem:[%s0 + $0x2f] sm:$0x1]
  %v56 = vld [vmem:[%s0 + $0x30] sm:$0x1]
  %v57 = vld [vmem:[%s0 + $0x31] sm:$0x1]
  %v58 = vld [vmem:[%s0 + $0x32] sm:$0x1]
  %v59 = vld [vmem:[%s0 + $0x33] sm:$0x1]
  %v60 = vld [vmem:[%s0 + $0x34] sm:$0x1]
  %v61 = vld [vmem:[%s0 + $0x35] sm:$0x1]
  %v62 = vld [vmem:[%s0 + $0x36] sm:$0x1]
  %v63 = vld [vmem:[%s0 + $0x37] sm:$0x1]
  %v64 = vld [vmem:[%s0 + $0x38] sm:$0x1]
  %v65 = vld [vmem:[%s0 + $0x39] sm:$0x1]
  %v66 = vld [vmem:[%s0 + $0x3a] sm:$0x1]
  %v67 = vld [vmem:[%s0 + $0x3b] sm:$0x1]
  %v68 = vld [vmem:[%s0 + $0x3c] sm:$0x1]
  %v69 = vld [vmem:[%s0 + $0x3d] sm:$0x1]
  %v70 = vld [vmem:[%s0 + $0x3e] sm:$0x1]
  %v71 = vld [vmem:[%s0 + $0x3f] sm:$0x1]
  %v72 = vld [vmem:[%s0 + $0x40] sm:$0x1]
  %v73 = vld [vmem:[%s0 + $0x41] sm:$0x1]
  %v74 = vld [vmem:[%s0 + $0x42] sm:$0x1]
  %v75 = vld [vmem:[%s0 + $0x43] sm:$0x1]
  %v76 = vld [vmem:[%s0 + $0x44] sm:$0x1]
  %v77 = vld [vmem:[%s0 + $0x45] sm:$0x1]
  %v78 = vld [vmem:[%s0 + $0x46] sm:$0x1]
  %v79 = vld [vmem:[%s0 + $0x47] sm:$0x1]
  %v80 = vld [vmem:[%s0 + $0x48] sm:$0x1]
  %v81 = vld [vmem:[%s0 + $0x49] sm:$0x1]
  %v82 = vld [vmem:[%s0 + $0x4a] sm:$0x1]
  %v83 = vld [vmem:[%s0 + $0x4b] sm:$0x1]
  %v84 = vld [vmem:[%s0 + $0x4c] sm:$0x1]
  %v85 = vld [vmem:[%s0 + $0x4d] sm:$0x1]
  %v86 = vld [vmem:[%s0 + $0x4e] sm:$0x1]
  %v87 = vld [vmem:[%s0 + $0x4f] sm:$0x1]
  %v88 = vld [vmem:[%s0 + $0x50] sm:$0x1]
  %v89 = vld [vmem:[%s0 + $0x51] sm:$0x1]
  %v90 = vld [vmem:[%s0 + $0x52] sm:$0x1]
  %v91 = vld [vmem:[%s0 + $0x53] sm:$0x1]
  %v92 = vld [vmem:[%s0 + $0x54] sm:$0x1]
  %v93 = vld [vmem:[%s0 + $0x55] sm:$0x1]
  %v94 = vld [vmem:[%s0 + $0x56] sm:$0x1]
  %v95 = vld [vmem:[%s0 + $0x57] sm:$0x1]
  %v96 = vld [vmem:[%s0 + $0x58] sm:$0x1]
  %v97 = vld [vmem:[%s0 + $0x59] sm:$0x1]
  %v98 = vld [vmem:[%s0 + $0x5a] sm:$0x1]
  %v99 = vld [vmem:[%s0 + $0x5b] sm:$0x1]
  %v100 = vld [vmem:[%s0 + $0x5c] sm:$0x1]
  %v101 = vld [vmem:[%s0 + $0x5d] sm:$0x1]
  %v102 = vld [vmem:[%s0 + $0x5e] sm:$0x1]
  %v103 = vld [vmem:[%s0 + $0x5f] sm:$0x1]
  %v104 = vld [vmem:[%s0 + $0x60] sm:$0x1]
  %v105 = vld [vmem:[%s0 + $0x61] sm:$0x1]
  %v106 = vld [vmem:[%s0 + $0x62] sm:$0x1]
  %v107 = vld [vmem:[%s0 + $0x63] sm:$0x1]
  %v108 = vld [vmem:[%s0 + $0x64] sm:$0x1]
  %v109 = vld [vmem:[%s0 + $0x65] sm:$0x1]
  %v110 = vld [vmem:[%s0 + $0x66] sm:$0x1]
  %v111 = vld [vmem:[%s0 + $0x67] sm:$0x1]
  %v112 = vld [vmem:[%s0 + $0x68] sm:$0x1]
  %v113 = vld [vmem:[%s0 + $0x69] sm:$0x1]
  %v114 = vld [vmem:[%s0 + $0x6a] sm:$0x1]
  %v115 = vld [vmem:[%s0 + $0x6b] sm:$0x1]
  %v116 = vld [vmem:[%s0 + $0x6c] sm:$0x1]
  %v117 = vld [vmem:[%s0 + $0x6d] sm:$0x1]
  %v118 = vld [vmem:[%s0 + $0x6e] sm:$0x1]
  %v119 = vld [vmem:[%s0 + $0x6f] sm:$0x1]
  %v120 = vld [vmem:[%s0 + $0x70] sm:$0x1]
  %v121 = vld [vmem:[%s0 + $0x71] sm:$0x1]
  %v122 = vld [vmem:[%s0 + $0x72] sm:$0x1]
  %v123 = vld [vmem:[%s0 + $0x73] sm:$0x1]
  %v124 = vld [vmem:[%s0 + $0x74] sm:$0x1]
  %v125 = vld [vmem:[%s0 + $0x75] sm:$0x1]
  %v126 = vld [vmem:[%s0 + $0x76] sm:$0x1]
  %v127 = vld [vmem:[%s0 + $0x77] sm:$0x1]
  %v128 = vld [vmem:[%s0 + $0x78] sm:$0x1]
  %v129 = vld [vmem:[%s0 + $0x79] sm:$0x1]
  %v130 = vld [vmem:[%s0 + $0x7a] sm:$0x1]
  %v131 = vld [vmem:[%s0 + $0x7b] sm:$0x1]
  %v132 = vld [vmem:[%s0 + $0x7c] sm:$0x1]
  %v133 = vld [vmem:[%s0 + $0x7d] sm:$0x1]
  %v134 = vld [vmem:[%s0 + $0x7e] sm:$0x1]
  %v135 = vld [vmem:[%s0 + $0x7f] sm:$0x1]
  %v136 = vld [vmem:[%s0 + $0x80] sm:$0x1]
  %v137 = vld [vmem:[%s0 + $0x81] sm:$0x1]
  %v138 = vld [vmem:[%s0 + $0x82] sm:$0x1]
  %v139 = vld [vmem:[%s0 + $0x83] sm:$0x1]
  %v140 = vld [vmem:[%s0 + $0x84] sm:$0x1]
  %v141 = vld [vmem:[%s0 + $0x85] sm:$0x1]
  %v142 = vld [vmem:[%s0 + $0x86] sm:$0x1]
  %v143 = vld [vmem:[%s0 + $0x87] sm:$0x1]
  %v144 = vld [vmem:[%s0 + $0x88] sm:$0x1]
  %v145 = vld [vmem:[%s0 + $0x89] sm:$0x1]
  %v146 = vld [vmem:[%s0 + $0x8a] sm:$0x1]
  %v147 = vld [vmem:[%s0 + $0x8b] sm:$0x1]
  %v148 = vld [vmem:[%s0 + $0x8c] sm:$0x1]
  %v149 = vld [vmem:[%s0 + $0x8d] sm:$0x1]
  %v150 = vld [vmem:[%s0 + $0x8e] sm:$0x1]
  %v151 = vld [vmem:[%s0 + $0x8f] sm:$0x1]
  %v152 = vld [vmem:[%s0 + $0x90] sm:$0x1]
  %v153 = vld [vmem:[%s0 + $0x91] sm:$0x1]
  %v154 = vld [vmem:[%s0 + $0x92] sm:$0x1]
  %v155 = vld [vmem:[%s0 + $0x93] sm:$0x1]
  %v156 = vld [vmem:[%s0 + $0x94] sm:$0x1]
  %v157 = vld [vmem:[%s0 + $0x95] sm:$0x1]
  %v158 = vld [vmem:[%s0 + $0x96] sm:$0x1]
  %v159 = vld [vmem:[%s0 + $0x97] sm:$0x1]
  %v160 = vld [vmem:[%s0 + $0x98] sm:$0x1]
  %v161 = vld [vmem:[%s0 + $0x99] sm:$0x1]
  %v162 = vld [vmem:[%s0 + $0x9a] sm:$0x1]
  %v163 = vld [vmem:[%s0 + $0x9b] sm:$0x1]
  %v164 = vld [vmem:[%s0 + $0x9c] sm:$0x1]
  %v165 = vld [vmem:[%s0 + $0x9d] sm:$0x1]
  %v166 = vld [vmem:[%s0 + $0x9e] sm:$0x1]
  %v167 = vld [vmem:[%s0 + $0x9f] sm:$0x1]
  %v168 = vld [vmem:[%s0 + $0xa0] sm:$0x1]
  %v169 = vld [vmem:[%s0 + $0xa1] sm:$0x1]
  %v170 = vld [vmem:[%s0 + $0xa2] sm:$0x1]
  %v171 = vld [vmem:[%s0 + $0xa3] sm:$0x1]
  %v172 = vld [vmem:[%s0 + $0xa4] sm:$0x1]
  %v173 = vld [vmem:[%s0 + $0xa5] sm:$0x1]
  %v174 = vld [vmem:[%s0 + $0xa6] sm:$0x1]
  %v175 = vld [vmem:[%s0 + $0xa7] sm:$0x1]
  %v176 = vld [vmem:[%s0 + $0xa8] sm:$0x1]
  %v177 = vld [vmem:[%s0 + $0xa9] sm:$0x1]
  %v178 = vld [vmem:[%s0 + $0xaa] sm:$0x1]
  %v179 = vld [vmem:[%s0 + $0xab] sm:$0x1]
  %v180 = vld [vmem:[%s0 + $0xac] sm:$0x1]
  %v181 = vld [vmem:[%s0 + $0xad] sm:$0x1]
  %v182 = vld [vmem:[%s0 + $0xae] sm:$0x1]
  %v183 = vld [vmem:[%s0 + $0xaf] sm:$0x1]
  %v184 = vld [vmem:[%s0 + $0xb0] sm:$0x1]
  %v185 = vld [vmem:[%s0 + $0xb1] sm:$0x1]
  %v186 = vld [vmem:[%s0 + $0xb2] sm:$0x1]
  %v187 = vld [vmem:[%s0 + $0xb3] sm:$0x1]
  %v188 = vld [vmem:[%s0 + $0xb4] sm:$0x1]
  %v189 = vld [vmem:[%s0 + $0xb5] sm:$0x1]
  %v190 = vld [vmem:[%s0 + $0xb6] sm:$0x1]
  %v191 = vld [vmem:[%s0 + $0xb7] sm:$0x1]
  %v192 = vld [vmem:[%s0 + $0xb8] sm:$0x1]
  %v193 = vld [vmem:[%s0 + $0xb9] sm:$0x1]
  %v194 = vld [vmem:[%s0 + $0xba] sm:$0x1]
  %v195 = vld [vmem:[%s0 + $0xbb] sm:$0x1]
  %v196 = vld [vmem:[%s0 + $0xbc] sm:$0x1]
  %v197 = vld [vmem:[%s0 + $0xbd] sm:$0x1]
  %v198 = vld [vmem:[%s0 + $0xbe] sm:$0x1]
  %v199 = vld [vmem:[%s0 + $0xbf] sm:$0x1]
  %v200 = vld [vmem:[%s0 + $0xc0] sm:$0x1]
  %v201 = vld [vmem:[%s0 + $0xc1] sm:$0x1]
  %v202 = vld [vmem:[%s0 + $0xc2] sm:$0x1]
  %v203 = vld [vmem:[%s0 + $0xc3] sm:$0x1]
  %v204 = vld [vmem:[%s0 + $0xc4] sm:$0x1]
  %v205 = vld [vmem:[%s0 + $0xc5] sm:$0x1]
  %v206 = vld [vmem:[%s0 + $0xc6] sm:$0x1]
  %v207 = vld [vmem:[%s0 + $0xc7] sm:$0x1]
  %v208 = vld [vmem:[%s0 + $0xc8] sm:$0x1]
  %v209 = vld [vmem:[%s0 + $0xc9] sm:$0x1]
  %v210 = vld [vmem:[%s0 + $0xca] sm:$0x1]
  %v211 = vld [vmem:[%s0 + $0xcb] sm:$0x1]
  %v212 = vld [vmem:[%s0 + $0xcc] sm:$0x1]
  %v213 = vld [vmem:[%s0 + $0xcd] sm:$0x1]
  %v214 = vld [vmem:[%s0 + $0xce] sm:$0x1]
  %v215 = vld [vmem:[%s0 + $0xcf] sm:$0x1]
  %v216 = vld [vmem:[%s0 + $0xd0] sm:$0x1]
  %v217 = vld [vmem:[%s0 + $0xd1] sm:$0x1]
  %v218 = vld [vmem:[%s0 + $0xd2] sm:$0x1]
  %v219 = vld [vmem:[%s0 + $0xd3] sm:$0x1]
  %v220 = vld [vmem:[%s0 + $0xd4] sm:$0x1]
  %v221 = vld [vmem:[%s0 + $0xd5] sm:$0x1]
  %v222 = vld [vmem:[%s0 + $0xd6] sm:$0x1]
  %v223 = vld [vmem:[%s0 + $0xd7] sm:$0x1]
  %v224 = vld [vmem:[%s0 + $0xd8] sm:$0x1]
  %v225 = vld [vmem:[%s0 + $0xd9] sm:$0x1]
  %v226 = vld [vmem:[%s0 + $0xda] sm:$0x1]
  %v227 = vld [vmem:[%s0 + $0xdb] sm:$0x1]
  %v228 = vld [vmem:[%s0 + $0xdc] sm:$0x1]
  %v229 = vld [vmem:[%s0 + $0xdd] sm:$0x1]
  %v230 = vld [vmem:[%s0 + $0xde] sm:$0x1]
  %v231 = vld [vmem:[%s0 + $0xdf] sm:$0x1]
  %v232 = vld [vmem:[%s0 + $0xe0] sm:$0x1]
  %v233 = vld [vmem:[%s0 + $0xe1] sm:$0x1]
  %v234 = vld [vmem:[%s0 + $0xe2] sm:$0x1]
  %v235 = vld [vmem:[%s0 + $0xe3] sm:$0x1]
  %v236 = vld [vmem:[%s0 + $0xe4] sm:$0x1]
  %v237 = vld [vmem:[%s0 + $0xe5] sm:$0x1]
  %v238 = vld [vmem:[%s0 + $0xe6] sm:$0x1]
  %v239 = vld [vmem:[%s0 + $0xe7] sm:$0x1]
  %v240 = vld [vmem:[%s0 + $0xe8] sm:$0x1]
  %v241 = vld [vmem:[%s0 + $0xe9] sm:$0x1]
  %v242 = vld [vmem:[%s0 + $0xea] sm:$0x1]
  %v243 = vld [vmem:[%s0 + $0xeb] sm:$0x1]
  %v244 = vld [vmem:[%s0 + $0xec] sm:$0x1]
  %v245 = vld [vmem:[%s0 + $0xed] sm:$0x1]
  %v246 = vld [vmem:[%s0 + $0xee] sm:$0x1]
  %v247 = vld [vmem:[%s0 + $0xef] sm:$0x1]
  %v248 = vld [vmem:[%s0 + $0xf0] sm:$0x1]
  %v249 = vld [vmem:[%s0 + $0xf1] sm:$0x1]
  %v250 = vld [vmem:[%s0 + $0xf2] sm:$0x1]
  %v251 = vld [vmem:[%s0 + $0xf3] sm:$0x1]
  %v252 = vld [vmem:[%s0 + $0xf4] sm:$0x1]
  %v253 = vld [vmem:[%s0 + $0xf5] sm:$0x1]
  %v254 = vld [vmem:[%s0 + $0xf6] sm:$0x1]
  %v255 = vld [vmem:[%s0 + $0xf7] sm:$0x1]
  %v256 = vld [vmem:[%s0 + $0xf8] sm:$0x1]
  %v257 = vld [vmem:[%s0 + $0xf9] sm:$0x1]
  %v258 = vld [vmem:[%s0 + $0xfa] sm:$0x1]
  %v259 = vld [vmem:[%s0 + $0xfb] sm:$0x1]
  %v260 = vld [vmem:[%s0 + $0xfc] sm:$0x1]
  %v261 = vld [vmem:[%s0 + $0xfd] sm:$0x1]
  %v262 = vld [vmem:[%s0 + $0xfe] sm:$0x1]
  %v263 = vld [vmem:[%s0 + $0xff] sm:$0x1]
  %v264 = vunpack.c.l.bf16 %v8
  %v265 = vunpack.c.l.bf16 %v9
  %v266 = vunpack.c.l.bf16 %v10
  %v267 = vunpack.c.l.bf16 %v11
  %v268 = vunpack.c.l.bf16 %v12
  %v269 = vunpack.c.l.bf16 %v13
  %v270 = vunpack.c.l.bf16 %v14
  %v271 = vunpack.c.l.bf16 %v15
  %v272 = vunpack.c.l.bf16 %v16
  %v273 = vunpack.c.l.bf16 %v17
  %v274 = vunpack.c.l.bf16 %v18
  %v275 = vunpack.c.l.bf16 %v19
  %v276 = vunpack.c.l.bf16 %v20
  %v277 = vunpack.c.l.bf16 %v21
  %v278 = vunpack.c.l.bf16 %v22
  %v279 = vunpack.c.l.bf16 %v23
  %v280 = vunpack.c.l.bf16 %v24
  %v281 = vunpack.c.l.bf16 %v25
  %v282 = vunpack.c.l.bf16 %v26
  %v283 = vunpack.c.l.bf16 %v27
  %v284 = vunpack.c.l.bf16 %v28
  %v285 = vunpack.c.l.bf16 %v29
  %v286 = vunpack.c.l.bf16 %v30
  %v287 = vunpack.c.l.bf16 %v31
  %v288 = vunpack.c.l.bf16 %v32
  %v289 = vunpack.c.l.bf16 %v33
  %v290 = vunpack.c.l.bf16 %v34
  %v291 = vunpack.c.l.bf16 %v35
  %v292 = vunpack.c.l.bf16 %v36
  %v293 = vunpack.c.l.bf16 %v37
  %v294 = vunpack.c.l.bf16 %v38
  %v295 = vunpack.c.l.bf16 %v39
  %v296 = vunpack.c.l.bf16 %v40
  %v297 = vunpack.c.l.bf16 %v41
  %v298 = vunpack.c.l.bf16 %v42
  %v299 = vunpack.c.l.bf16 %v43
  %v300 = vunpack.c.l.bf16 %v44
  %v301 = vunpack.c.l.bf16 %v45
  %v302 = vunpack.c.l.bf16 %v46
  %v303 = vunpack.c.l.bf16 %v47
  %v304 = vunpack.c.l.bf16 %v48
  %v305 = vunpack.c.l.bf16 %v49
  %v306 = vunpack.c.l.bf16 %v50
  %v307 = vunpack.c.l.bf16 %v51
  %v308 = vunpack.c.l.bf16 %v52
  %v309 = vunpack.c.l.bf16 %v53
  %v310 = vunpack.c.l.bf16 %v54
  %v311 = vunpack.c.l.bf16 %v55
  %v312 = vunpack.c.l.bf16 %v56
  %v313 = vunpack.c.l.bf16 %v57
  %v314 = vunpack.c.l.bf16 %v58
  %v315 = vunpack.c.l.bf16 %v59
  %v316 = vunpack.c.l.bf16 %v60
  %v317 = vunpack.c.l.bf16 %v61
  %v318 = vunpack.c.l.bf16 %v62
  %v319 = vunpack.c.l.bf16 %v63
  %v320 = vunpack.c.l.bf16 %v64
  %v321 = vunpack.c.l.bf16 %v65
  %v322 = vunpack.c.l.bf16 %v66
  %v323 = vunpack.c.l.bf16 %v67
  %v324 = vunpack.c.l.bf16 %v68
  %v325 = vunpack.c.l.bf16 %v69
  %v326 = vunpack.c.l.bf16 %v70
  %v327 = vunpack.c.l.bf16 %v71
  %v328 = vunpack.c.l.bf16 %v72
  %v329 = vunpack.c.l.bf16 %v73
  %v330 = vunpack.c.l.bf16 %v74
  %v331 = vunpack.c.l.bf16 %v75
  %v332 = vunpack.c.l.bf16 %v76
  %v333 = vunpack.c.l.bf16 %v77
  %v334 = vunpack.c.l.bf16 %v78
  %v335 = vunpack.c.l.bf16 %v79
  %v336 = vunpack.c.l.bf16 %v80
  %v337 = vunpack.c.l.bf16 %v81
  %v338 = vunpack.c.l.bf16 %v82
  %v339 = vunpack.c.l.bf16 %v83
  %v340 = vunpack.c.l.bf16 %v84
  %v341 = vunpack.c.l.bf16 %v85
  %v342 = vunpack.c.l.bf16 %v86
  %v343 = vunpack.c.l.bf16 %v87
  %v344 = vunpack.c.l.bf16 %v88
  %v345 = vunpack.c.l.bf16 %v89
  %v346 = vunpack.c.l.bf16 %v90
  %v347 = vunpack.c.l.bf16 %v91
  %v348 = vunpack.c.l.bf16 %v92
  %v349 = vunpack.c.l.bf16 %v93
  %v350 = vunpack.c.l.bf16 %v94
  %v351 = vunpack.c.l.bf16 %v95
  %v352 = vunpack.c.l.bf16 %v96
  %v353 = vunpack.c.l.bf16 %v97
  %v354 = vunpack.c.l.bf16 %v98
  %v355 = vunpack.c.l.bf16 %v99
  %v356 = vunpack.c.l.bf16 %v100
  %v357 = vunpack.c.l.bf16 %v101
  %v358 = vunpack.c.l.bf16 %v102
  %v359 = vunpack.c.l.bf16 %v103
  %v360 = vunpack.c.l.bf16 %v104
  %v361 = vunpack.c.l.bf16 %v105
  %v362 = vunpack.c.l.bf16 %v106
  %v363 = vunpack.c.l.bf16 %v107
  %v364 = vunpack.c.l.bf16 %v108
  %v365 = vunpack.c.l.bf16 %v109
  %v366 = vunpack.c.l.bf16 %v110
  %v367 = vunpack.c.l.bf16 %v111
  %v368 = vunpack.c.l.bf16 %v112
  %v369 = vunpack.c.l.bf16 %v113
  %v370 = vunpack.c.l.bf16 %v114
  %v371 = vunpack.c.l.bf16 %v115
  %v372 = vunpack.c.l.bf16 %v116
  %v373 = vunpack.c.l.bf16 %v117
  %v374 = vunpack.c.l.bf16 %v118
  %v375 = vunpack.c.l.bf16 %v119
  %v376 = vunpack.c.l.bf16 %v120
  %v377 = vunpack.c.l.bf16 %v121
  %v378 = vunpack.c.l.bf16 %v122
  %v379 = vunpack.c.l.bf16 %v123
  %v380 = vunpack.c.l.bf16 %v124
  %v381 = vunpack.c.l.bf16 %v125
  %v382 = vunpack.c.l.bf16 %v126
  %v383 = vunpack.c.l.bf16 %v127
  %v384 = vunpack.c.l.bf16 %v128
  %v385 = vunpack.c.l.bf16 %v129
  %v386 = vunpack.c.l.bf16 %v130
  %v387 = vunpack.c.l.bf16 %v131
  %v388 = vunpack.c.l.bf16 %v132
  %v389 = vunpack.c.l.bf16 %v133
  %v390 = vunpack.c.l.bf16 %v134
  %v391 = vunpack.c.l.bf16 %v135
  %v392 = vunpack.c.l.bf16 %v136
  %v393 = vunpack.c.l.bf16 %v137
  %v394 = vunpack.c.l.bf16 %v138
  %v395 = vunpack.c.l.bf16 %v139
  %v396 = vunpack.c.l.bf16 %v140
  %v397 = vunpack.c.l.bf16 %v141
  %v398 = vunpack.c.l.bf16 %v142
  %v399 = vunpack.c.l.bf16 %v143
  %v400 = vunpack.c.l.bf16 %v144
  %v401 = vunpack.c.l.bf16 %v145
  %v402 = vunpack.c.l.bf16 %v146
  %v403 = vunpack.c.l.bf16 %v147
  %v404 = vunpack.c.l.bf16 %v148
  %v405 = vunpack.c.l.bf16 %v149
  %v406 = vunpack.c.l.bf16 %v150
  %v407 = vunpack.c.l.bf16 %v151
  %v408 = vunpack.c.l.bf16 %v152
  %v409 = vunpack.c.l.bf16 %v153
  %v410 = vunpack.c.l.bf16 %v154
  %v411 = vunpack.c.l.bf16 %v155
  %v412 = vunpack.c.l.bf16 %v156
  %v413 = vunpack.c.l.bf16 %v157
  %v414 = vunpack.c.l.bf16 %v158
  %v415 = vunpack.c.l.bf16 %v159
  %v416 = vunpack.c.l.bf16 %v160
  %v417 = vunpack.c.l.bf16 %v161
  %v418 = vunpack.c.l.bf16 %v162
  %v419 = vunpack.c.l.bf16 %v163
  %v420 = vunpack.c.l.bf16 %v164
  %v421 = vunpack.c.l.bf16 %v165
  %v422 = vunpack.c.l.bf16 %v166
  %v423 = vunpack.c.l.bf16 %v167
  %v424 = vunpack.c.l.bf16 %v168
  %v425 = vunpack.c.l.bf16 %v169
  %v426 = vunpack.c.l.bf16 %v170
  %v427 = vunpack.c.l.bf16 %v171
  %v428 = vunpack.c.l.bf16 %v172
  %v429 = vunpack.c.l.bf16 %v173
  %v430 = vunpack.c.l.bf16 %v174
  %v431 = vunpack.c.l.bf16 %v175
  %v432 = vunpack.c.l.bf16 %v176
  %v433 = vunpack.c.l.bf16 %v177
  %v434 = vunpack.c.l.bf16 %v178
  %v435 = vunpack.c.l.bf16 %v179
  %v436 = vunpack.c.l.bf16 %v180
  %v437 = vunpack.c.l.bf16 %v181
  %v438 = vunpack.c.l.bf16 %v182
  %v439 = vunpack.c.l.bf16 %v183
  %v440 = vunpack.c.l.bf16 %v184
  %v441 = vunpack.c.l.bf16 %v185
  %v442 = vunpack.c.l.bf16 %v186
  %v443 = vunpack.c.l.bf16 %v187
  %v444 = vunpack.c.l.bf16 %v188
  %v445 = vunpack.c.l.bf16 %v189
  %v446 = vunpack.c.l.bf16 %v190
  %v447 = vunpack.c.l.bf16 %v191
  %v448 = vunpack.c.l.bf16 %v192
  %v449 = vunpack.c.l.bf16 %v193
  %v450 = vunpack.c.l.bf16 %v194
  %v451 = vunpack.c.l.bf16 %v195
  %v452 = vunpack.c.l.bf16 %v196
  %v453 = vunpack.c.l.bf16 %v197
  %v454 = vunpack.c.l.bf16 %v198
  %v455 = vunpack.c.l.bf16 %v199
  %v456 = vunpack.c.l.bf16 %v200
  %v457 = vunpack.c.l.bf16 %v201
  %v458 = vunpack.c.l.bf16 %v202
  %v459 = vunpack.c.l.bf16 %v203
  %v460 = vunpack.c.l.bf16 %v204
  %v461 = vunpack.c.l.bf16 %v205
  %v462 = vunpack.c.l.bf16 %v206
  %v463 = vunpack.c.l.bf16 %v207
  %v464 = vunpack.c.l.bf16 %v208
  %v465 = vunpack.c.l.bf16 %v209
  %v466 = vunpack.c.l.bf16 %v210
  %v467 = vunpack.c.l.bf16 %v211
  %v468 = vunpack.c.l.bf16 %v212
  %v469 = vunpack.c.l.bf16 %v213
  %v470 = vunpack.c.l.bf16 %v214
  %v471 = vunpack.c.l.bf16 %v215
  %v472 = vunpack.c.l.bf16 %v216
  %v473 = vunpack.c.l.bf16 %v217
  %v474 = vunpack.c.l.bf16 %v218
  %v475 = vunpack.c.l.bf16 %v219
  %v476 = vunpack.c.l.bf16 %v220
  %v477 = vunpack.c.l.bf16 %v221
  %v478 = vunpack.c.l.bf16 %v222
  %v479 = vunpack.c.l.bf16 %v223
  %v480 = vunpack.c.l.bf16 %v224
  %v481 = vunpack.c.l.bf16 %v225
  %v482 = vunpack.c.l.bf16 %v226
  %v483 = vunpack.c.l.bf16 %v227
  %v484 = vunpack.c.l.bf16 %v228
  %v485 = vunpack.c.l.bf16 %v229
  %v486 = vunpack.c.l.bf16 %v230
  %v487 = vunpack.c.l.bf16 %v231
  %v488 = vunpack.c.l.bf16 %v232
  %v489 = vunpack.c.l.bf16 %v233
  %v490 = vunpack.c.l.bf16 %v234
  %v491 = vunpack.c.l.bf16 %v235
  %v492 = vunpack.c.l.bf16 %v236
  %v493 = vunpack.c.l.bf16 %v237
  %v494 = vunpack.c.l.bf16 %v238
  %v495 = vunpack.c.l.bf16 %v239
  %v496 = vunpack.c.l.bf16 %v240
  %v497 = vunpack.c.l.bf16 %v241
  %v498 = vunpack.c.l.bf16 %v242
  %v499 = vunpack.c.l.bf16 %v243
  %v500 = vunpack.c.l.bf16 %v244
  %v501 = vunpack.c.l.bf16 %v245
  %v502 = vunpack.c.l.bf16 %v246
  %v503 = vunpack.c.l.bf16 %v247
  %v504 = vunpack.c.l.bf16 %v248
  %v505 = vunpack.c.l.bf16 %v249
  %v506 = vunpack.c.l.bf16 %v250
  %v507 = vunpack.c.l.bf16 %v251
  %v508 = vunpack.c.l.bf16 %v252
  %v509 = vunpack.c.l.bf16 %v253
  %v510 = vunpack.c.l.bf16 %v254
  %v511 = vunpack.c.l.bf16 %v255
  %v512 = vunpack.c.l.bf16 %v256
  %v513 = vunpack.c.l.bf16 %v257
  %v514 = vunpack.c.l.bf16 %v258
  %v515 = vunpack.c.l.bf16 %v259
  %v516 = vunpack.c.l.bf16 %v260
  %v517 = vunpack.c.l.bf16 %v261
  %v518 = vunpack.c.l.bf16 %v262
  %v519 = vunpack.c.l.bf16 %v263
  %v520 = vmax.f32 %v264, %v328
  %v521 = vmax.f32 %v265, %v329
  %v522 = vmax.f32 %v266, %v330
  %v523 = vmax.f32 %v267, %v331
  %v524 = vmax.f32 %v268, %v332
  %v525 = vmax.f32 %v269, %v333
  %v526 = vmax.f32 %v270, %v334
  %v527 = vmax.f32 %v271, %v335
  %v528 = vmax.f32 %v272, %v336
  %v529 = vmax.f32 %v273, %v337
  %v530 = vmax.f32 %v274, %v338
  %v531 = vmax.f32 %v275, %v339
  %v532 = vmax.f32 %v276, %v340
  %v533 = vmax.f32 %v277, %v341
  %v534 = vmax.f32 %v278, %v342
  %v535 = vmax.f32 %v279, %v343
  %v536 = vmax.f32 %v280, %v344
  %v537 = vmax.f32 %v281, %v345
  %v538 = vmax.f32 %v282, %v346
  %v539 = vmax.f32 %v283, %v347
  %v540 = vmax.f32 %v284, %v348
  %v541 = vmax.f32 %v285, %v349
  %v542 = vmax.f32 %v286, %v350
  %v543 = vmax.f32 %v287, %v351
  %v544 = vmax.f32 %v288, %v352
  %v545 = vmax.f32 %v289, %v353
  %v546 = vmax.f32 %v290, %v354
  %v547 = vmax.f32 %v291, %v355
  %v548 = vmax.f32 %v292, %v356
  %v549 = vmax.f32 %v293, %v357
  %v550 = vmax.f32 %v294, %v358
  %v551 = vmax.f32 %v295, %v359
  %v552 = vmax.f32 %v296, %v360
  %v553 = vmax.f32 %v297, %v361
  %v554 = vmax.f32 %v298, %v362
  %v555 = vmax.f32 %v299, %v363
  %v556 = vmax.f32 %v300, %v364
  %v557 = vmax.f32 %v301, %v365
  %v558 = vmax.f32 %v302, %v366
  %v559 = vmax.f32 %v303, %v367
  %v560 = vmax.f32 %v304, %v368
  %v561 = vmax.f32 %v305, %v369
  %v562 = vmax.f32 %v306, %v370
  %v563 = vmax.f32 %v307, %v371
  %v564 = vmax.f32 %v308, %v372
  %v565 = vmax.f32 %v309, %v373
  %v566 = vmax.f32 %v310, %v374
  %v567 = vmax.f32 %v311, %v375
  %v568 = vmax.f32 %v312, %v376
  %v569 = vmax.f32 %v313, %v377
  %v570 = vmax.f32 %v314, %v378
  %v571 = vmax.f32 %v315, %v379
  %v572 = vmax.f32 %v316, %v380
  %v573 = vmax.f32 %v317, %v381
  %v574 = vmax.f32 %v318, %v382
  %v575 = vmax.f32 %v319, %v383
  %v576 = vmax.f32 %v320, %v384
  %v577 = vmax.f32 %v321, %v385
  %v578 = vmax.f32 %v322, %v386
  %v579 = vmax.f32 %v323, %v387
  %v580 = vmax.f32 %v324, %v388
  %v581 = vmax.f32 %v325, %v389
  %v582 = vmax.f32 %v326, %v390
  %v583 = vmax.f32 %v327, %v391
  %v584 = vmax.f32 %v520, 0.0
  %v585 = vmax.f32 %v521, %v328
  %v586 = vmax.f32 %v522, %v329
  %v587 = vmax.f32 %v523, %v330
  %v588 = vmax.f32 %v524, %v331
  %v589 = vmax.f32 %v525, %v332
  %v590 = vmax.f32 %v526, %v333
  %v591 = vmax.f32 %v527, %v334
  %v592 = vmax.f32 %v528, 0.0
  %v593 = vmax.f32 %v529, %v336
  %v594 = vmax.f32 %v530, %v337
  %v595 = vmax.f32 %v531, %v338
  %v596 = vmax.f32 %v532, %v339
  %v597 = vmax.f32 %v533, %v340
  %v598 = vmax.f32 %v534, %v341
  %v599 = vmax.f32 %v535, %v342
  %v600 = vmax.f32 %v536, 0.0
  %v601 = vmax.f32 %v537, %v344
  %v602 = vmax.f32 %v538, %v345
  %v603 = vmax.f32 %v539, %v346
  %v604 = vmax.f32 %v540, %v347
  %v605 = vmax.f32 %v541, %v348
  %v606 = vmax.f32 %v542, %v349
  %v607 = vmax.f32 %v543, %v350
  %v608 = vmax.f32 %v544, 0.0
  %v609 = vmax.f32 %v545, %v352
  %v610 = vmax.f32 %v546, %v353
  %v611 = vmax.f32 %v547, %v354
  %v612 = vmax.f32 %v548, %v355
  %v613 = vmax.f32 %v549, %v356
  %v614 = vmax.f32 %v550, %v357
  %v615 = vmax.f32 %v551, %v358
  %v616 = vmax.f32 %v552, 0.0
  %v617 = vmax.f32 %v553, %v360
  %v618 = vmax.f32 %v554, %v361
  %v619 = vmax.f32 %v555, %v362
  %v620 = vmax.f32 %v556, %v363
  %v621 = vmax.f32 %v557, %v364
  %v622 = vmax.f32 %v558, %v365
  %v623 = vmax.f32 %v559, %v366
  %v624 = vmax.f32 %v560, 0.0
  %v625 = vmax.f32 %v561, %v368
  %v626 = vmax.f32 %v562, %v369
  %v627 = vmax.f32 %v563, %v370
  %v628 = vmax.f32 %v564, %v371
  %v629 = vmax.f32 %v565, %v372
  %v630 = vmax.f32 %v566, %v373
  %v631 = vmax.f32 %v567, %v374
  %v632 = vmax.f32 %v568, 0.0
  %v633 = vmax.f32 %v569, %v376
  %v634 = vmax.f32 %v570, %v377
  %v635 = vmax.f32 %v571, %v378
  %v636 = vmax.f32 %v572, %v379
  %v637 = vmax.f32 %v573, %v380
  %v638 = vmax.f32 %v574, %v381
  %v639 = vmax.f32 %v575, %v382
  %v640 = vmax.f32 %v576, 0.0
  %v641 = vmax.f32 %v577, %v384
  %v642 = vmax.f32 %v578, %v385
  %v643 = vmax.f32 %v579, %v386
  %v644 = vmax.f32 %v580, %v387
  %v645 = vmax.f32 %v581, %v388
  %v646 = vmax.f32 %v582, %v389
  %v647 = vmax.f32 %v583, %v390
  %v648 = vmax.f32 %v584, %v392
  %v649 = vmax.f32 %v585, %v393
  %v650 = vmax.f32 %v586, %v394
  %v651 = vmax.f32 %v587, %v395
  %v652 = vmax.f32 %v588, %v396
  %v653 = vmax.f32 %v589, %v397
  %v654 = vmax.f32 %v590, %v398
  %v655 = vmax.f32 %v591, %v399
  %v656 = vmax.f32 %v592, %v400
  %v657 = vmax.f32 %v593, %v401
  %v658 = vmax.f32 %v594, %v402
  %v659 = vmax.f32 %v595, %v403
  %v660 = vmax.f32 %v596, %v404
  %v661 = vmax.f32 %v597, %v405
  %v662 = vmax.f32 %v598, %v406
  %v663 = vmax.f32 %v599, %v407
  %v664 = vmax.f32 %v600, %v408
  %v665 = vmax.f32 %v601, %v409
  %v666 = vmax.f32 %v602, %v410
  %v667 = vmax.f32 %v603, %v411
  %v668 = vmax.f32 %v604, %v412
  %v669 = vmax.f32 %v605, %v413
  %v670 = vmax.f32 %v606, %v414
  %v671 = vmax.f32 %v607, %v415
  %v672 = vmax.f32 %v608, %v416
  %v673 = vmax.f32 %v609, %v417
  %v674 = vmax.f32 %v610, %v418
  %v675 = vmax.f32 %v611, %v419
  %v676 = vmax.f32 %v612, %v420
  %v677 = vmax.f32 %v613, %v421
  %v678 = vmax.f32 %v614, %v422
  %v679 = vmax.f32 %v615, %v423
  %v680 = vmax.f32 %v616, %v424
  %v681 = vmax.f32 %v617, %v425
  %v682 = vmax.f32 %v618, %v426
  %v683 = vmax.f32 %v619, %v427
  %v684 = vmax.f32 %v620, %v428
  %v685 = vmax.f32 %v621, %v429
  %v686 = vmax.f32 %v622, %v430
  %v687 = vmax.f32 %v623, %v431
  %v688 = vmax.f32 %v624, %v432
  %v689 = vmax.f32 %v625, %v433
  %v690 = vmax.f32 %v626, %v434
  %v691 = vmax.f32 %v627, %v435
  %v692 = vmax.f32 %v628, %v436
  %v693 = vmax.f32 %v629, %v437
  %v694 = vmax.f32 %v630, %v438
  %v695 = vmax.f32 %v631, %v439
  %v696 = vmax.f32 %v632, %v440
  %v697 = vmax.f32 %v633, %v441
  %v698 = vmax.f32 %v634, %v442
  %v699 = vmax.f32 %v635, %v443
  %v700 = vmax.f32 %v636, %v444
  %v701 = vmax.f32 %v637, %v445
  %v702 = vmax.f32 %v638, %v446
  %v703 = vmax.f32 %v639, %v447
  %v704 = vmax.f32 %v640, %v448
  %v705 = vmax.f32 %v641, %v449
  %v706 = vmax.f32 %v642, %v450
  %v707 = vmax.f32 %v643, %v451
  %v708 = vmax.f32 %v644, %v452
  %v709 = vmax.f32 %v645, %v453
  %v710 = vmax.f32 %v646, %v454
  %v711 = vmax.f32 %v647, %v455
  %v712 = vmax.f32 %v648, 0.0
  %v713 = vmax.f32 %v649, 0.0
  %v714 = vmax.f32 %v650, 0.0
  %v715 = vmax.f32 %v651, 0.0
  %v716 = vmax.f32 %v652, 0.0
  %v717 = vmax.f32 %v653, 0.0
  %v718 = vmax.f32 %v654, 0.0
  %v719 = vmax.f32 %v655, 0.0
  %v720 = vmax.f32 %v656, %v392
  %v721 = vmax.f32 %v657, %v393
  %v722 = vmax.f32 %v658, %v394
  %v723 = vmax.f32 %v659, %v395
  %v724 = vmax.f32 %v660, %v396
  %v725 = vmax.f32 %v661, %v397
  %v726 = vmax.f32 %v662, %v398
  %v727 = vmax.f32 %v663, %v399
  %v728 = vmax.f32 %v664, %v400
  %v729 = vmax.f32 %v665, %v401
  %v730 = vmax.f32 %v666, %v402
  %v731 = vmax.f32 %v667, %v403
  %v732 = vmax.f32 %v668, %v404
  %v733 = vmax.f32 %v669, %v405
  %v734 = vmax.f32 %v670, %v406
  %v735 = vmax.f32 %v671, %v407
  %v736 = vmax.f32 %v672, %v408
  %v737 = vmax.f32 %v673, %v409
  %v738 = vmax.f32 %v674, %v410
  %v739 = vmax.f32 %v675, %v411
  %v740 = vmax.f32 %v676, %v412
  %v741 = vmax.f32 %v677, %v413
  %v742 = vmax.f32 %v678, %v414
  %v743 = vmax.f32 %v679, %v415
  %v744 = vmax.f32 %v680, %v416
  %v745 = vmax.f32 %v681, %v417
  %v746 = vmax.f32 %v682, %v418
  %v747 = vmax.f32 %v683, %v419
  %v748 = vmax.f32 %v684, %v420
  %v749 = vmax.f32 %v685, %v421
  %v750 = vmax.f32 %v686, %v422
  %v751 = vmax.f32 %v687, %v423
  %v752 = vmax.f32 %v688, %v424
  %v753 = vmax.f32 %v689, %v425
  %v754 = vmax.f32 %v690, %v426
  %v755 = vmax.f32 %v691, %v427
  %v756 = vmax.f32 %v692, %v428
  %v757 = vmax.f32 %v693, %v429
  %v758 = vmax.f32 %v694, %v430
  %v759 = vmax.f32 %v695, %v431
  %v760 = vmax.f32 %v696, %v432
  %v761 = vmax.f32 %v697, %v433
  %v762 = vmax.f32 %v698, %v434
  %v763 = vmax.f32 %v699, %v435
  %v764 = vmax.f32 %v700, %v436
  %v765 = vmax.f32 %v701, %v437
  %v766 = vmax.f32 %v702, %v438
  %v767 = vmax.f32 %v703, %v439
  %v768 = vmax.f32 %v704, %v440
  %v769 = vmax.f32 %v705, %v441
  %v770 = vmax.f32 %v706, %v442
  %v771 = vmax.f32 %v707, %v443
  %v772 = vmax.f32 %v708, %v444
  %v773 = vmax.f32 %v709, %v445
  %v774 = vmax.f32 %v710, %v446
  %v775 = vmax.f32 %v711, %v447
  %v776 = vmax.f32 %v712, %v456
  %v777 = vmax.f32 %v713, %v457
  %v778 = vmax.f32 %v714, %v458
  %v779 = vmax.f32 %v715, %v459
  %v780 = vmax.f32 %v716, %v460
  %v781 = vmax.f32 %v717, %v461
  %v782 = vmax.f32 %v718, %v462
  %v783 = vmax.f32 %v719, %v463
  %v784 = vmax.f32 %v720, %v464
  %v785 = vmax.f32 %v721, %v465
  %v786 = vmax.f32 %v722, %v466
  %v787 = vmax.f32 %v723, %v467
  %v788 = vmax.f32 %v724, %v468
  %v789 = vmax.f32 %v725, %v469
  %v790 = vmax.f32 %v726, %v470
  %v791 = vmax.f32 %v727, %v471
  %v792 = vmax.f32 %v728, %v472
  %v793 = vmax.f32 %v729, %v473
  %v794 = vmax.f32 %v730, %v474
  %v795 = vmax.f32 %v731, %v475
  %v796 = vmax.f32 %v732, %v476
  %v797 = vmax.f32 %v733, %v477
  %v798 = vmax.f32 %v734, %v478
  %v799 = vmax.f32 %v735, %v479
  %v800 = vmax.f32 %v736, %v480
  %v801 = vmax.f32 %v737, %v481
  %v802 = vmax.f32 %v738, %v482
  %v803 = vmax.f32 %v739, %v483
  %v804 = vmax.f32 %v740, %v484
  %v805 = vmax.f32 %v741, %v485
  %v806 = vmax.f32 %v742, %v486
  %v807 = vmax.f32 %v743, %v487
  %v808 = vmax.f32 %v744, %v488
  %v809 = vmax.f32 %v745, %v489
  %v810 = vmax.f32 %v746, %v490
  %v811 = vmax.f32 %v747, %v491
  %v812 = vmax.f32 %v748, %v492
  %v813 = vmax.f32 %v749, %v493
  %v814 = vmax.f32 %v750, %v494
  %v815 = vmax.f32 %v751, %v495
  %v816 = vmax.f32 %v752, %v496
  %v817 = vmax.f32 %v753, %v497
  %v818 = vmax.f32 %v754, %v498
  %v819 = vmax.f32 %v755, %v499
  %v820 = vmax.f32 %v756, %v500
  %v821 = vmax.f32 %v757, %v501
  %v822 = vmax.f32 %v758, %v502
  %v823 = vmax.f32 %v759, %v503
  %v824 = vmax.f32 %v760, %v504
  %v825 = vmax.f32 %v761, %v505
  %v826 = vmax.f32 %v762, %v506
  %v827 = vmax.f32 %v763, %v507
  %v828 = vmax.f32 %v764, %v508
  %v829 = vmax.f32 %v765, %v509
  %v830 = vmax.f32 %v766, %v510
  %v831 = vmax.f32 %v767, %v511
  %v832 = vmax.f32 %v768, %v512
  %v833 = vmax.f32 %v769, %v513
  %v834 = vmax.f32 %v770, %v514
  %v835 = vmax.f32 %v771, %v515
  %v836 = vmax.f32 %v772, %v516
  %v837 = vmax.f32 %v773, %v517
  %v838 = vmax.f32 %v774, %v518
  %v839 = vmax.f32 %v775, %v519
  %v840 = vmax.f32 %v776, 0.0
  %v841 = vmax.f32 %v777, %v456
  %v842 = vmax.f32 %v778, %v457
  %v843 = vmax.f32 %v779, %v458
  %v844 = vmax.f32 %v780, %v459
  %v845 = vmax.f32 %v781, %v460
  %v846 = vmax.f32 %v782, %v461
  %v847 = vmax.f32 %v783, %v462
  %v848 = vmax.f32 %v784, 0.0
  %v849 = vmax.f32 %v785, %v464
  %v850 = vmax.f32 %v786, %v465
  %v851 = vmax.f32 %v787, %v466
  %v852 = vmax.f32 %v788, %v467
  %v853 = vmax.f32 %v789, %v468
  %v854 = vmax.f32 %v790, %v469
  %v855 = vmax.f32 %v791, %v470
  %v856 = vmax.f32 %v792, 0.0
  %v857 = vmax.f32 %v793, %v472
  %v858 = vmax.f32 %v794, %v473
  %v859 = vmax.f32 %v795, %v474
  %v860 = vmax.f32 %v796, %v475
  %v861 = vmax.f32 %v797, %v476
  %v862 = vmax.f32 %v798, %v477
  %v863 = vmax.f32 %v799, %v478
  %v864 = vmax.f32 %v800, 0.0
  %v865 = vmax.f32 %v801, %v480
  %v866 = vmax.f32 %v802, %v481
  %v867 = vmax.f32 %v803, %v482
  %v868 = vmax.f32 %v804, %v483
  %v869 = vmax.f32 %v805, %v484
  %v870 = vmax.f32 %v806, %v485
  %v871 = vmax.f32 %v807, %v486
  %v872 = vmax.f32 %v808, 0.0
  %v873 = vmax.f32 %v809, %v488
  %v874 = vmax.f32 %v810, %v489
  %v875 = vmax.f32 %v811, %v490
  %v876 = vmax.f32 %v812, %v491
  %v877 = vmax.f32 %v813, %v492
  %v878 = vmax.f32 %v814, %v493
  %v879 = vmax.f32 %v815, %v494
  %v880 = vmax.f32 %v816, 0.0
  %v881 = vmax.f32 %v817, %v496
  %v882 = vmax.f32 %v818, %v497
  %v883 = vmax.f32 %v819, %v498
  %v884 = vmax.f32 %v820, %v499
  %v885 = vmax.f32 %v821, %v500
  %v886 = vmax.f32 %v822, %v501
  %v887 = vmax.f32 %v823, %v502
  %v888 = vmax.f32 %v824, 0.0
  %v889 = vmax.f32 %v825, %v504
  %v890 = vmax.f32 %v826, %v505
  %v891 = vmax.f32 %v827, %v506
  %v892 = vmax.f32 %v828, %v507
  %v893 = vmax.f32 %v829, %v508
  %v894 = vmax.f32 %v830, %v509
  %v895 = vmax.f32 %v831, %v510
  %v896 = vmax.f32 %v832, 0.0
  %v897 = vmax.f32 %v833, %v512
  %v898 = vmax.f32 %v834, %v513
  %v899 = vmax.f32 %v835, %v514
  %v900 = vmax.f32 %v836, %v515
  %v901 = vmax.f32 %v837, %v516
  %v902 = vmax.f32 %v838, %v517
  %v903 = vmax.f32 %v839, %v518
  %v904 = vmax.f32 %v840, 0.0
  %v905 = vmax.f32 %v841, 0.0
  %v906 = vmax.f32 %v842, 0.0
  %v907 = vmax.f32 %v843, 0.0
  %v908 = vmax.f32 %v844, 0.0
  %v909 = vmax.f32 %v845, 0.0
  %v910 = vmax.f32 %v846, 0.0
  %v911 = vmax.f32 %v847, 0.0
  %v912 = vmax.f32 %v848, %v456
  %v913 = vmax.f32 %v849, %v457
  %v914 = vmax.f32 %v850, %v458
  %v915 = vmax.f32 %v851, %v459
  %v916 = vmax.f32 %v852, %v460
  %v917 = vmax.f32 %v853, %v461
  %v918 = vmax.f32 %v854, %v462
  %v919 = vmax.f32 %v855, %v463
  %v920 = vmax.f32 %v856, %v464
  %v921 = vmax.f32 %v857, %v465
  %v922 = vmax.f32 %v858, %v466
  %v923 = vmax.f32 %v859, %v467
  %v924 = vmax.f32 %v860, %v468
  %v925 = vmax.f32 %v861, %v469
  %v926 = vmax.f32 %v862, %v470
  %v927 = vmax.f32 %v863, %v471
  %v928 = vmax.f32 %v864, %v472
  %v929 = vmax.f32 %v865, %v473
  %v930 = vmax.f32 %v866, %v474
  %v931 = vmax.f32 %v867, %v475
  %v932 = vmax.f32 %v868, %v476
  %v933 = vmax.f32 %v869, %v477
  %v934 = vmax.f32 %v870, %v478
  %v935 = vmax.f32 %v871, %v479
  %v936 = vmax.f32 %v872, %v480
  %v937 = vmax.f32 %v873, %v481
  %v938 = vmax.f32 %v874, %v482
  %v939 = vmax.f32 %v875, %v483
  %v940 = vmax.f32 %v876, %v484
  %v941 = vmax.f32 %v877, %v485
  %v942 = vmax.f32 %v878, %v486
  %v943 = vmax.f32 %v879, %v487
  %v944 = vmax.f32 %v880, %v488
  %v945 = vmax.f32 %v881, %v489
  %v946 = vmax.f32 %v882, %v490
  %v947 = vmax.f32 %v883, %v491
  %v948 = vmax.f32 %v884, %v492
  %v949 = vmax.f32 %v885, %v493
  %v950 = vmax.f32 %v886, %v494
  %v951 = vmax.f32 %v887, %v495
  %v952 = vmax.f32 %v888, %v496
  %v953 = vmax.f32 %v889, %v497
  %v954 = vmax.f32 %v890, %v498
  %v955 = vmax.f32 %v891, %v499
  %v956 = vmax.f32 %v892, %v500
  %v957 = vmax.f32 %v893, %v501
  %v958 = vmax.f32 %v894, %v502
  %v959 = vmax.f32 %v895, %v503
  %v960 = vmax.f32 %v896, %v504
  %v961 = vmax.f32 %v897, %v505
  %v962 = vmax.f32 %v898, %v506
  %v963 = vmax.f32 %v899, %v507
  %v964 = vmax.f32 %v900, %v508
  %v965 = vmax.f32 %v901, %v509
  %v966 = vmax.f32 %v902, %v510
  %v967 = vmax.f32 %v903, %v511
  %v968 = vmax.f32 %v904, 0.0
  %v969 = vmax.f32 %v905, 0.0
  %v970 = vmax.f32 %v906, 0.0
  %v971 = vmax.f32 %v907, 0.0
  %v972 = vmax.f32 %v908, 0.0
  %v973 = vmax.f32 %v909, 0.0
  %v974 = vmax.f32 %v910, 0.0
  %v975 = vmax.f32 %v911, 0.0
  %v976 = vmax.f32 %v912, 0.0
  %v977 = vmax.f32 %v913, %v456
  %v978 = vmax.f32 %v914, %v457
  %v979 = vmax.f32 %v915, %v458
  %v980 = vmax.f32 %v916, %v459
  %v981 = vmax.f32 %v917, %v460
  %v982 = vmax.f32 %v918, %v461
  %v983 = vmax.f32 %v919, %v462
  %v984 = vmax.f32 %v920, 0.0
  %v985 = vmax.f32 %v921, %v464
  %v986 = vmax.f32 %v922, %v465
  %v987 = vmax.f32 %v923, %v466
  %v988 = vmax.f32 %v924, %v467
  %v989 = vmax.f32 %v925, %v468
  %v990 = vmax.f32 %v926, %v469
  %v991 = vmax.f32 %v927, %v470
  %v992 = vmax.f32 %v928, 0.0
  %v993 = vmax.f32 %v929, %v472
  %v994 = vmax.f32 %v930, %v473
  %v995 = vmax.f32 %v931, %v474
  %v996 = vmax.f32 %v932, %v475
  %v997 = vmax.f32 %v933, %v476
  %v998 = vmax.f32 %v934, %v477
  %v999 = vmax.f32 %v935, %v478
  %v1000 = vmax.f32 %v936, 0.0
  %v1001 = vmax.f32 %v937, %v480
  %v1002 = vmax.f32 %v938, %v481
  %v1003 = vmax.f32 %v939, %v482
  %v1004 = vmax.f32 %v940, %v483
  %v1005 = vmax.f32 %v941, %v484
  %v1006 = vmax.f32 %v942, %v485
  %v1007 = vmax.f32 %v943, %v486
  %v1008 = vmax.f32 %v944, 0.0
  %v1009 = vmax.f32 %v945, %v488
  %v1010 = vmax.f32 %v946, %v489
  %v1011 = vmax.f32 %v947, %v490
  %v1012 = vmax.f32 %v948, %v491
  %v1013 = vmax.f32 %v949, %v492
  %v1014 = vmax.f32 %v950, %v493
  %v1015 = vmax.f32 %v951, %v494
  %v1016 = vmax.f32 %v952, 0.0
  %v1017 = vmax.f32 %v953, %v496
  %v1018 = vmax.f32 %v954, %v497
  %v1019 = vmax.f32 %v955, %v498
  %v1020 = vmax.f32 %v956, %v499
  %v1021 = vmax.f32 %v957, %v500
  %v1022 = vmax.f32 %v958, %v501
  %v1023 = vmax.f32 %v959, %v502
  %v1024 = vmax.f32 %v960, 0.0
  %v1025 = vmax.f32 %v961, %v504
  %v1026 = vmax.f32 %v962, %v505
  %v1027 = vmax.f32 %v963, %v506
  %v1028 = vmax.f32 %v964, %v507
  %v1029 = vmax.f32 %v965, %v508
  %v1030 = vmax.f32 %v966, %v509
  %v1031 = vmax.f32 %v967, %v510
  %v1032 = vpack.c.bf16 %v968, %v968
  %v1033 = vpack.c.bf16 %v969, %v969
  %v1034 = vpack.c.bf16 %v970, %v970
  %v1035 = vpack.c.bf16 %v971, %v971
  %v1036 = vpack.c.bf16 %v972, %v972
  %v1037 = vpack.c.bf16 %v973, %v973
  %v1038 = vpack.c.bf16 %v974, %v974
  %v1039 = vpack.c.bf16 %v975, %v975
  %v1040 = vpack.c.bf16 %v976, %v976
  %v1041 = vpack.c.bf16 %v977, %v977
  %v1042 = vpack.c.bf16 %v978, %v978
  %v1043 = vpack.c.bf16 %v979, %v979
  %v1044 = vpack.c.bf16 %v980, %v980
  %v1045 = vpack.c.bf16 %v981, %v981
  %v1046 = vpack.c.bf16 %v982, %v982
  %v1047 = vpack.c.bf16 %v983, %v983
  %v1048 = vpack.c.bf16 %v984, %v984
  %v1049 = vpack.c.bf16 %v985, %v985
  %v1050 = vpack.c.bf16 %v986, %v986
  %v1051 = vpack.c.bf16 %v987, %v987
  %v1052 = vpack.c.bf16 %v988, %v988
  %v1053 = vpack.c.bf16 %v989, %v989
  %v1054 = vpack.c.bf16 %v990, %v990
  %v1055 = vpack.c.bf16 %v991, %v991
  %v1056 = vpack.c.bf16 %v992, %v992
  %v1057 = vpack.c.bf16 %v993, %v993
  %v1058 = vpack.c.bf16 %v994, %v994
  %v1059 = vpack.c.bf16 %v995, %v995
  %v1060 = vpack.c.bf16 %v996, %v996
  %v1061 = vpack.c.bf16 %v997, %v997
  %v1062 = vpack.c.bf16 %v998, %v998
  %v1063 = vpack.c.bf16 %v999, %v999
  %v1064 = vpack.c.bf16 %v1000, %v1000
  %v1065 = vpack.c.bf16 %v1001, %v1001
  %v1066 = vpack.c.bf16 %v1002, %v1002
  %v1067 = vpack.c.bf16 %v1003, %v1003
  %v1068 = vpack.c.bf16 %v1004, %v1004
  %v1069 = vpack.c.bf16 %v1005, %v1005
  %v1070 = vpack.c.bf16 %v1006, %v1006
  %v1071 = vpack.c.bf16 %v1007, %v1007
  %v1072 = vpack.c.bf16 %v1008, %v1008
  %v1073 = vpack.c.bf16 %v1009, %v1009
  %v1074 = vpack.c.bf16 %v1010, %v1010
  %v1075 = vpack.c.bf16 %v1011, %v1011
  %v1076 = vpack.c.bf16 %v1012, %v1012
  %v1077 = vpack.c.bf16 %v1013, %v1013
  %v1078 = vpack.c.bf16 %v1014, %v1014
  %v1079 = vpack.c.bf16 %v1015, %v1015
  %v1080 = vpack.c.bf16 %v1016, %v1016
  %v1081 = vpack.c.bf16 %v1017, %v1017
  %v1082 = vpack.c.bf16 %v1018, %v1018
  %v1083 = vpack.c.bf16 %v1019, %v1019
  %v1084 = vpack.c.bf16 %v1020, %v1020
  %v1085 = vpack.c.bf16 %v1021, %v1021
  %v1086 = vpack.c.bf16 %v1022, %v1022
  %v1087 = vpack.c.bf16 %v1023, %v1023
  %v1088 = vpack.c.bf16 %v1024, %v1024
  %v1089 = vpack.c.bf16 %v1025, %v1025
  %v1090 = vpack.c.bf16 %v1026, %v1026
  %v1091 = vpack.c.bf16 %v1027, %v1027
  %v1092 = vpack.c.bf16 %v1028, %v1028
  %v1093 = vpack.c.bf16 %v1029, %v1029
  %v1094 = vpack.c.bf16 %v1030, %v1030
  %v1095 = vpack.c.bf16 %v1031, %v1031
  %vm1096 = vcmask 253952
  %1097 = vst.msk [vmem:[%s1] sm:$0x1] %vm1096, %v1032
  %1098 = vst.msk [vmem:[%s1 + $0x1] sm:$0x1] %vm1096, %v1033
  %1099 = vst.msk [vmem:[%s1 + $0x2] sm:$0x1] %vm1096, %v1034
  %1100 = vst.msk [vmem:[%s1 + $0x3] sm:$0x1] %vm1096, %v1035
  %1101 = vst.msk [vmem:[%s1 + $0x4] sm:$0x1] %vm1096, %v1036
  %1102 = vst.msk [vmem:[%s1 + $0x5] sm:$0x1] %vm1096, %v1037
  %1103 = vst.msk [vmem:[%s1 + $0x6] sm:$0x1] %vm1096, %v1038
  %1104 = vst.msk [vmem:[%s1 + $0x7] sm:$0x1] %vm1096, %v1039
  %1105 = vst.msk [vmem:[%s1 + $0x8] sm:$0x1] %vm1096, %v1040
  %1106 = vst.msk [vmem:[%s1 + $0x9] sm:$0x1] %vm1096, %v1041
  %1107 = vst.msk [vmem:[%s1 + $0xa] sm:$0x1] %vm1096, %v1042
  %1108 = vst.msk [vmem:[%s1 + $0xb] sm:$0x1] %vm1096, %v1043
  %1109 = vst.msk [vmem:[%s1 + $0xc] sm:$0x1] %vm1096, %v1044
  %1110 = vst.msk [vmem:[%s1 + $0xd] sm:$0x1] %vm1096, %v1045
  %1111 = vst.msk [vmem:[%s1 + $0xe] sm:$0x1] %vm1096, %v1046
  %1112 = vst.msk [vmem:[%s1 + $0xf] sm:$0x1] %vm1096, %v1047
  %1113 = vst.msk [vmem:[%s1 + $0x10] sm:$0x1] %vm1096, %v1048
  %1114 = vst.msk [vmem:[%s1 + $0x11] sm:$0x1] %vm1096, %v1049
  %1115 = vst.msk [vmem:[%s1 + $0x12] sm:$0x1] %vm1096, %v1050
  %1116 = vst.msk [vmem:[%s1 + $0x13] sm:$0x1] %vm1096, %v1051
  %1117 = vst.msk [vmem:[%s1 + $0x14] sm:$0x1] %vm1096, %v1052
  %1118 = vst.msk [vmem:[%s1 + $0x15] sm:$0x1] %vm1096, %v1053
  %1119 = vst.msk [vmem:[%s1 + $0x16] sm:$0x1] %vm1096, %v1054
  %1120 = vst.msk [vmem:[%s1 + $0x17] sm:$0x1] %vm1096, %v1055
  %1121 = vst.msk [vmem:[%s1 + $0x18] sm:$0x1] %vm1096, %v1056
  %1122 = vst.msk [vmem:[%s1 + $0x19] sm:$0x1] %vm1096, %v1057
  %1123 = vst.msk [vmem:[%s1 + $0x1a] sm:$0x1] %vm1096, %v1058
  %1124 = vst.msk [vmem:[%s1 + $0x1b] sm:$0x1] %vm1096, %v1059
  %1125 = vst.msk [vmem:[%s1 + $0x1c] sm:$0x1] %vm1096, %v1060
  %1126 = vst.msk [vmem:[%s1 + $0x1d] sm:$0x1] %vm1096, %v1061
  %1127 = vst.msk [vmem:[%s1 + $0x1e] sm:$0x1] %vm1096, %v1062
  %1128 = vst.msk [vmem:[%s1 + $0x1f] sm:$0x1] %vm1096, %v1063
  %1129 = vst.msk [vmem:[%s1 + $0x20] sm:$0x1] %vm1096, %v1064
  %1130 = vst.msk [vmem:[%s1 + $0x21] sm:$0x1] %vm1096, %v1065
  %1131 = vst.msk [vmem:[%s1 + $0x22] sm:$0x1] %vm1096, %v1066
  %1132 = vst.msk [vmem:[%s1 + $0x23] sm:$0x1] %vm1096, %v1067
  %1133 = vst.msk [vmem:[%s1 + $0x24] sm:$0x1] %vm1096, %v1068
  %1134 = vst.msk [vmem:[%s1 + $0x25] sm:$0x1] %vm1096, %v1069
  %1135 = vst.msk [vmem:[%s1 + $0x26] sm:$0x1] %vm1096, %v1070
  %1136 = vst.msk [vmem:[%s1 + $0x27] sm:$0x1] %vm1096, %v1071
  %1137 = vst.msk [vmem:[%s1 + $0x28] sm:$0x1] %vm1096, %v1072
  %1138 = vst.msk [vmem:[%s1 + $0x29] sm:$0x1] %vm1096, %v1073
  %1139 = vst.msk [vmem:[%s1 + $0x2a] sm:$0x1] %vm1096, %v1074
  %1140 = vst.msk [vmem:[%s1 + $0x2b] sm:$0x1] %vm1096, %v1075
  %1141 = vst.msk [vmem:[%s1 + $0x2c] sm:$0x1] %vm1096, %v1076
  %1142 = vst.msk [vmem:[%s1 + $0x2d] sm:$0x1] %vm1096, %v1077
  %1143 = vst.msk [vmem:[%s1 + $0x2e] sm:$0x1] %vm1096, %v1078
  %1144 = vst.msk [vmem:[%s1 + $0x2f] sm:$0x1] %vm1096, %v1079
  %1145 = vst.msk [vmem:[%s1 + $0x30] sm:$0x1] %vm1096, %v1080
  %1146 = vst.msk [vmem:[%s1 + $0x31] sm:$0x1] %vm1096, %v1081
  %1147 = vst.msk [vmem:[%s1 + $0x32] sm:$0x1] %vm1096, %v1082
  %1148 = vst.msk [vmem:[%s1 + $0x33] sm:$0x1] %vm1096, %v1083
  %1149 = vst.msk [vmem:[%s1 + $0x34] sm:$0x1] %vm1096, %v1084
  %1150 = vst.msk [vmem:[%s1 + $0x35] sm:$0x1] %vm1096, %v1085
  %1151 = vst.msk [vmem:[%s1 + $0x36] sm:$0x1] %vm1096, %v1086
  %1152 = vst.msk [vmem:[%s1 + $0x37] sm:$0x1] %vm1096, %v1087
  %1153 = vst.msk [vmem:[%s1 + $0x38] sm:$0x1] %vm1096, %v1088
  %1154 = vst.msk [vmem:[%s1 + $0x39] sm:$0x1] %vm1096, %v1089
  %1155 = vst.msk [vmem:[%s1 + $0x3a] sm:$0x1] %vm1096, %v1090
  %1156 = vst.msk [vmem:[%s1 + $0x3b] sm:$0x1] %vm1096, %v1091
  %1157 = vst.msk [vmem:[%s1 + $0x3c] sm:$0x1] %vm1096, %v1092
  %1158 = vst.msk [vmem:[%s1 + $0x3d] sm:$0x1] %vm1096, %v1093
  %1159 = vst.msk [vmem:[%s1 + $0x3e] sm:$0x1] %vm1096, %v1094
  %1160 = vst.msk [vmem:[%s1 + $0x3f] sm:$0x1] %vm1096, %v1095
  // Predicated region
  $region6: #{toynet_forward.5} parent=0 // pred_check
    _
  $region7: #{toynet_forward.5} parent=0 // pred_check_branch
    %1162 = sbr.rel (0) target = $region9
  $region8: #{toynet_forward.5} parent=0 // pred_region
    _
  $region9: #{toynet_forward.5} parent=0 // pred_fallthru
    _
  // Predicated region
  $region10: #{toynet_forward.5} parent=0 // pred_check
    _
  $region11: #{toynet_forward.5} parent=0 // pred_check_branch
    %1164 = sbr.rel (0) target = $region13
  $region12: #{toynet_forward.5} parent=0 // pred_region
    _
  $region13: #{toynet_forward.5} parent=0 // pred_fallthru
    _

// kernel: toynet_forward.6
$region0: #{toynet_forward.6}
  #allocation0 [shape = 'u32[]', space=smem, size = 0x4, offset = 0x4, fixed_abs, tag = 'smem constant byte address 0x4 - core index']
  #allocation1 [shape = 'u32[72,128]{1,0:T(1,128)}', space=vmem, size = 0x9000, scoped, tag = 'internal scratch']
  %s0 = inlined_call_operand.vmem [shape: bf16[32,800], index: 0, kind: input, shape index: {}]
  %s1 = inlined_call_operand.vmem [shape: bf16[800,64], index: 1, kind: input, shape index: {}]
  %s2 = inlined_call_operand.vmem [shape: f32[1,64], index: 2, kind: input, shape index: {}]
  %s3 = inlined_call_operand.vmem [shape: bf16[32,64], index: 3, kind: output, shape index: {}]
  %s4 = sld [smem:[#allocation0]]
  $region22: #{toynet_forward.6} parent=0
    _
  %s6 = ssub.s32 1, %s4
  %s7 = scalar_select 0, %s6, %s4
  // Predicated region
  $region2: #{toynet_forward.6} parent=0 // pred_check
    _
  $region3: #{toynet_forward.6} parent=0 // pred_check_branch
    %9 = sbr.rel (0) target = $region5
  $region4: #{toynet_forward.6} parent=0 // pred_region
    _
  $region5: #{toynet_forward.6} parent=0 // pred_fallthru
    _
  // Predicated region
  $region6: #{toynet_forward.6} parent=0 // pred_check
    _
  $region7: #{toynet_forward.6} parent=0 // pred_check_branch
    %11 = sbr.rel (0) target = $region9
  $region8: #{toynet_forward.6} parent=0 // pred_region
    _
  $region9: #{toynet_forward.6} parent=0 // pred_fallthru
    _
  // Predicated region
  $region10: #{toynet_forward.6} parent=0 // pred_check
    _
  $region11: #{toynet_forward.6} parent=0 // pred_check_branch
    %13 = sbr.rel (0) target = $region13
  $region12: #{toynet_forward.6} parent=0 // pred_region
    _
  $region13: #{toynet_forward.6} parent=0 // pred_fallthru
    _
  %v15 = vld [vmem:[%s0] sm:$0xff]
  %v16 = vld [vmem:[%s0 + $0x8] sm:$0xff]
  %v17 = vld [vmem:[%s0 + $0x10] sm:$0xff]
  %v18 = vld [vmem:[%s0 + $0x18] sm:$0xf]
  %v19 = vld [vmem:[%s0 + $0x1c] sm:$0xff]
  %v20 = vld [vmem:[%s0 + $0x24] sm:$0xff]
  %v21 = vld [vmem:[%s0 + $0x2c] sm:$0xff]
  %v22 = vld [vmem:[%s0 + $0x34] sm:$0xf]
  %v23 = vld [vmem:[%s0 + $0x38] sm:$0xff]
  %v24 = vld [vmem:[%s0 + $0x40] sm:$0xff]
  %v25 = vld [vmem:[%s0 + $0x48] sm:$0xff]
  %v26 = vld [vmem:[%s0 + $0x50] sm:$0xf]
  %v27 = vld [vmem:[%s0 + $0x54] sm:$0xff]
  %v28 = vld [vmem:[%s0 + $0x5c] sm:$0xff]
  %v29 = vld [vmem:[%s0 + $0x64] sm:$0xff]
  %v30 = vld [vmem:[%s0 + $0x6c] sm:$0xf]
  %v31 = vld [vmem:[%s1] sm:$0xf]
  %v32 = vld [vmem:[%s1 + $0x4] sm:$0xf]
  %v33 = vld [vmem:[%s1 + $0x8] sm:$0xf]
  %v34 = vld [vmem:[%s1 + $0xc] sm:$0xf]
  %v35 = vld [vmem:[%s1 + $0x10] sm:$0xf]
  %v36 = vld [vmem:[%s1 + $0x14] sm:$0xf]
  %v37 = vld [vmem:[%s1 + $0x18] sm:$0xf]
  %v38 = vld [vmem:[%s1 + $0x1c] sm:$0xf]
  %v39 = vld [vmem:[%s1 + $0x20] sm:$0xf]
  %v40 = vld [vmem:[%s1 + $0x24] sm:$0xf]
  %v41 = vld [vmem:[%s1 + $0x28] sm:$0xf]
  %v42 = vld [vmem:[%s1 + $0x2c] sm:$0xf]
  %v43 = vld [vmem:[%s1 + $0x30] sm:$0xf]
  %v44 = vld [vmem:[%s1 + $0x34] sm:$0xf]
  %v45 = vld [vmem:[%s1 + $0x38] sm:$0xf]
  %v46 = vld [vmem:[%s1 + $0x3c] sm:$0xf]
  %v47 = vld [vmem:[%s1 + $0x40] sm:$0xf]
  %v48 = vld [vmem:[%s1 + $0x44] sm:$0xf]
  %v49 = vld [vmem:[%s1 + $0x48] sm:$0xf]
  %v50 = vld [vmem:[%s1 + $0x4c] sm:$0xf]
  %v51 = vld [vmem:[%s1 + $0x50] sm:$0xf]
  %v52 = vld [vmem:[%s1 + $0x54] sm:$0xf]
  %v53 = vld [vmem:[%s1 + $0x58] sm:$0xf]
  %v54 = vld [vmem:[%s1 + $0x5c] sm:$0xf]
  %v55 = vld [vmem:[%s1 + $0x60] sm:$0xf]
  %v56 = vld [vmem:[%s1 + $0x64] sm:$0xf]
  %v57 = vld [vmem:[%s1 + $0x68] sm:$0xf]
  %v58 = vld [vmem:[%s1 + $0x6c] sm:$0xf]
  %v59 = vld [vmem:[%s1 + $0x70] sm:$0xf]
  %v60 = vld [vmem:[%s1 + $0x74] sm:$0xf]
  %v61 = vld [vmem:[%s1 + $0x78] sm:$0xf]
  %v62 = vld [vmem:[%s1 + $0x7c] sm:$0xf]
  %v63 = vld [vmem:[%s1 + $0x80] sm:$0xf]
  %v64 = vld [vmem:[%s1 + $0x84] sm:$0xf]
  %v65 = vld [vmem:[%s1 + $0x88] sm:$0xf]
  %v66 = vld [vmem:[%s1 + $0x8c] sm:$0xf]
  %v67 = vld [vmem:[%s1 + $0x90] sm:$0xf]
  %v68 = vld [vmem:[%s1 + $0x94] sm:$0xf]
  %v69 = vld [vmem:[%s1 + $0x98] sm:$0xf]
  %v70 = vld [vmem:[%s1 + $0x9c] sm:$0xf]
  %v71 = vld [vmem:[%s1 + $0xa0] sm:$0xf]
  %v72 = vld [vmem:[%s1 + $0xa4] sm:$0xf]
  %v73 = vld [vmem:[%s1 + $0xa8] sm:$0xf]
  %v74 = vld [vmem:[%s1 + $0xac] sm:$0xf]
  %v75 = vld [vmem:[%s1 + $0xb0] sm:$0xf]
  %v76 = vld [vmem:[%s1 + $0xb4] sm:$0xf]
  %v77 = vld [vmem:[%s1 + $0xb8] sm:$0xf]
  %v78 = vld [vmem:[%s1 + $0xbc] sm:$0xf]
  %v79 = vld [vmem:[%s1 + $0xc0] sm:$0xf]
  %v80 = vld [vmem:[%s1 + $0xc4] sm:$0xf]
  %v81 = vld [vmem:[%s1 + $0xc8] sm:$0xf]
  %v82 = vld [vmem:[%s1 + $0xcc] sm:$0xf]
  %v83 = vld [vmem:[%s1 + $0xd0] sm:$0xf]
  %v84 = vld [vmem:[%s1 + $0xd4] sm:$0xf]
  %v85 = vld [vmem:[%s1 + $0xd8] sm:$0xf]
  %v86 = vld [vmem:[%s1 + $0xdc] sm:$0xf]
  %v87 = vld [vmem:[%s1 + $0xe0] sm:$0xf]
  %v88 = vld [vmem:[%s1 + $0xe4] sm:$0xf]
  %v89 = vld [vmem:[%s1 + $0xe8] sm:$0xf]
  %v90 = vld [vmem:[%s1 + $0xec] sm:$0xf]
  %v91 = vld [vmem:[%s1 + $0xf0] sm:$0xf]
  %v92 = vld [vmem:[%s1 + $0xf4] sm:$0xf]
  %v93 = vld [vmem:[%s1 + $0xf8] sm:$0xf]
  %v94 = vld [vmem:[%s1 + $0xfc] sm:$0xf]
  %v95 = vld [vmem:[%s1 + $0x100] sm:$0xf]
  %v96 = vld [vmem:[%s1 + $0x104] sm:$0xf]
  %v97 = vld [vmem:[%s1 + $0x108] sm:$0xf]
  %v98 = vld [vmem:[%s1 + $0x10c] sm:$0xf]
  %v99 = vld [vmem:[%s1 + $0x110] sm:$0xf]
  %v100 = vld [vmem:[%s1 + $0x114] sm:$0xf]
  %v101 = vld [vmem:[%s1 + $0x118] sm:$0xf]
  %v102 = vld [vmem:[%s1 + $0x11c] sm:$0xf]
  %v103 = vld [vmem:[%s1 + $0x120] sm:$0xf]
  %v104 = vld [vmem:[%s1 + $0x124] sm:$0xf]
  %v105 = vld [vmem:[%s1 + $0x128] sm:$0xf]
  %v106 = vld [vmem:[%s1 + $0x12c] sm:$0xf]
  %v107 = vld [vmem:[%s1 + $0x130] sm:$0xf]
  %v108 = vld [vmem:[%s1 + $0x134] sm:$0xf]
  %v109 = vld [vmem:[%s1 + $0x138] sm:$0xf]
  %v110 = vld [vmem:[%s1 + $0x13c] sm:$0xf]
  %v111 = vld [vmem:[%s1 + $0x140] sm:$0xf]
  %v112 = vld [vmem:[%s1 + $0x144] sm:$0xf]
  %v113 = vld [vmem:[%s1 + $0x148] sm:$0xf]
  %v114 = vld [vmem:[%s1 + $0x14c] sm:$0xf]
  %v115 = vld [vmem:[%s1 + $0x150] sm:$0xf]
  %v116 = vld [vmem:[%s1 + $0x154] sm:$0xf]
  %v117 = vld [vmem:[%s1 + $0x158] sm:$0xf]
  %v118 = vld [vmem:[%s1 + $0x15c] sm:$0xf]
  %v119 = vld [vmem:[%s1 + $0x160] sm:$0xf]
  %v120 = vld [vmem:[%s1 + $0x164] sm:$0xf]
  %v121 = vld [vmem:[%s1 + $0x168] sm:$0xf]
  %v122 = vld [vmem:[%s1 + $0x16c] sm:$0xf]
  %v123 = vld [vmem:[%s1 + $0x170] sm:$0xf]
  %v124 = vld [vmem:[%s1 + $0x174] sm:$0xf]
  %v125 = vld [vmem:[%s1 + $0x178] sm:$0xf]
  %v126 = vld [vmem:[%s1 + $0x17c] sm:$0xf]
  %v127 = vld [vmem:[%s1 + $0x180] sm:$0xf]
  %v128 = vld [vmem:[%s1 + $0x184] sm:$0xf]
  %v129 = vld [vmem:[%s1 + $0x188] sm:$0xf]
  %v130 = vld [vmem:[%s1 + $0x18c] sm:$0xf]
  %v131 = vld [vmem:[%s2] sm:$0x1]
  %v133 = vperm.slane %v131, 0
  %v151 = vunpack.c.l.b16 %v15
  %v152 = vunpack.c.h.b16 %v15
  %v153 = vunpack.c.l.b16 %v16
  %v154 = vunpack.c.h.b16 %v16
  %v155 = vunpack.c.l.b16 %v17
  %v156 = vunpack.c.h.b16 %v17
  %v157 = vunpack.c.l.b16 %v18
  %v158 = vunpack.c.l.b16 %v19
  %v159 = vunpack.c.h.b16 %v19
  %v160 = vunpack.c.l.b16 %v20
  %v161 = vunpack.c.h.b16 %v20
  %v162 = vunpack.c.l.b16 %v21
  %v163 = vunpack.c.h.b16 %v21
  %v164 = vunpack.c.l.b16 %v22
  %v165 = vunpack.c.l.b16 %v23
  %v166 = vunpack.c.h.b16 %v23
  %v167 = vunpack.c.l.b16 %v24
  %v168 = vunpack.c.h.b16 %v24
  %v169 = vunpack.c.l.b16 %v25
  %v170 = vunpack.c.h.b16 %v25
  %v171 = vunpack.c.l.b16 %v26
  %v172 = vunpack.c.l.b16 %v27
  %v173 = vunpack.c.h.b16 %v27
  %v174 = vunpack.c.l.b16 %v28
  %v175 = vunpack.c.h.b16 %v28
  %v176 = vunpack.c.l.b16 %v29
  %v177 = vunpack.c.h.b16 %v29
  %v178 = vunpack.c.l.b16 %v30
  %v179 = vpack.c.b16 %v158, %v151
  %v180 = vpack.c.b16 %v159, %v152
  %v181 = vpack.c.b16 %v160, %v153
  %v182 = vpack.c.b16 %v161, %v154
  %v183 = vpack.c.b16 %v162, %v155
  %v184 = vpack.c.b16 %v163, %v156
  %v185 = vpack.c.b16 %v164, %v157
  %v186 = vpack.c.b16 %v172, %v165
  %v187 = vpack.c.b16 %v173, %v166
  %v188 = vpack.c.b16 %v174, %v167
  %v189 = vpack.c.b16 %v175, %v168
  %v190 = vpack.c.b16 %v176, %v169
  %v191 = vpack.c.b16 %v177, %v170
  %v192 = vpack.c.b16 %v178, %v171
  %v305 = vunpack.c.l.b16 %v31
  %v306 = vunpack.c.l.b16 %v32
  %v307 = vunpack.c.l.b16 %v33
  %v308 = vunpack.c.l.b16 %v34
  %v309 = vunpack.c.l.b16 %v35
  %v310 = vunpack.c.l.b16 %v36
  %v311 = vunpack.c.l.b16 %v37
  %v312 = vunpack.c.l.b16 %v38
  %v313 = vunpack.c.l.b16 %v39
  %v314 = vunpack.c.l.b16 %v40
  %v315 = vunpack.c.l.b16 %v41
  %v316 = vunpack.c.l.b16 %v42
  %v317 = vunpack.c.l.b16 %v43
  %v318 = vunpack.c.l.b16 %v44
  %v319 = vunpack.c.l.b16 %v45
  %v320 = vunpack.c.l.b16 %v46
  %v321 = vunpack.c.l.b16 %v47
  %v322 = vunpack.c.l.b16 %v48
  %v323 = vunpack.c.l.b16 %v49
  %v324 = vunpack.c.l.b16 %v50
  %v325 = vunpack.c.l.b16 %v51
  %v326 = vunpack.c.l.b16 %v52
  %v327 = vunpack.c.l.b16 %v53
  %v328 = vunpack.c.l.b16 %v54
  %v329 = vunpack.c.l.b16 %v55
  %v330 = vunpack.c.l.b16 %v56
  %v331 = vunpack.c.l.b16 %v57
  %v332 = vunpack.c.l.b16 %v58
  %v333 = vunpack.c.l.b16 %v59
  %v334 = vunpack.c.l.b16 %v60
  %v335 = vunpack.c.l.b16 %v61
  %v336 = vunpack.c.l.b16 %v62
  %v337 = vunpack.c.l.b16 %v63
  %v338 = vunpack.c.l.b16 %v64
  %v339 = vunpack.c.l.b16 %v65
  %v340 = vunpack.c.l.b16 %v66
  %v341 = vunpack.c.l.b16 %v67
  %v342 = vunpack.c.l.b16 %v68
  %v343 = vunpack.c.l.b16 %v69
  %v344 = vunpack.c.l.b16 %v70
  %v345 = vunpack.c.l.b16 %v71
  %v346 = vunpack.c.l.b16 %v72
  %v347 = vunpack.c.l.b16 %v73
  %v348 = vunpack.c.l.b16 %v74
  %v349 = vunpack.c.l.b16 %v75
  %v350 = vunpack.c.l.b16 %v76
  %v351 = vunpack.c.l.b16 %v77
  %v352 = vunpack.c.l.b16 %v78
  %v353 = vunpack.c.l.b16 %v79
  %v354 = vunpack.c.l.b16 %v80
  %v355 = vunpack.c.l.b16 %v81
  %v356 = vunpack.c.l.b16 %v82
  %v357 = vunpack.c.l.b16 %v83
  %v358 = vunpack.c.l.b16 %v84
  %v359 = vunpack.c.l.b16 %v85
  %v360 = vunpack.c.l.b16 %v86
  %v361 = vunpack.c.l.b16 %v87
  %v362 = vunpack.c.l.b16 %v88
  %v363 = vunpack.c.l.b16 %v89
  %v364 = vunpack.c.l.b16 %v90
  %v365 = vunpack.c.l.b16 %v91
  %v366 = vunpack.c.l.b16 %v92
  %v367 = vunpack.c.l.b16 %v93
  %v368 = vunpack.c.l.b16 %v94
  %v369 = vunpack.c.l.b16 %v95
  %v370 = vunpack.c.l.b16 %v96
  %v371 = vunpack.c.l.b16 %v97
  %v372 = vunpack.c.l.b16 %v98
  %v373 = vunpack.c.l.b16 %v99
  %v374 = vunpack.c.l.b16 %v100
  %v375 = vunpack.c.l.b16 %v101
  %v376 = vunpack.c.l.b16 %v102
  %v377 = vunpack.c.l.b16 %v103
  %v378 = vunpack.c.l.b16 %v104
  %v379 = vunpack.c.l.b16 %v105
  %v380 = vunpack.c.l.b16 %v106
  %v381 = vunpack.c.l.b16 %v107
  %v382 = vunpack.c.l.b16 %v108
  %v383 = vunpack.c.l.b16 %v109
  %v384 = vunpack.c.l.b16 %v110
  %v385 = vunpack.c.l.b16 %v111
  %v386 = vunpack.c.l.b16 %v112
  %v387 = vunpack.c.l.b16 %v113
  %v388 = vunpack.c.l.b16 %v114
  %v389 = vunpack.c.l.b16 %v115
  %v390 = vunpack.c.l.b16 %v116
  %v391 = vunpack.c.l.b16 %v117
  %v392 = vunpack.c.l.b16 %v118
  %v393 = vunpack.c.l.b16 %v119
  %v394 = vunpack.c.l.b16 %v120
  %v395 = vunpack.c.l.b16 %v121
  %v396 = vunpack.c.l.b16 %v122
  %v397 = vunpack.c.l.b16 %v123
  %v398 = vunpack.c.l.b16 %v124
  %v399 = vunpack.c.l.b16 %v125
  %v400 = vunpack.c.l.b16 %v126
  %v401 = vunpack.c.l.b16 %v127
  %v402 = vunpack.c.l.b16 %v128
  %v403 = vunpack.c.l.b16 %v129
  %v404 = vunpack.c.l.b16 %v130
  %v405 = vpack.c.b16 %v306, %v305
  %v406 = vpack.c.b16 %v308, %v307
  %v407 = vpack.c.b16 %v310, %v309
  %v408 = vpack.c.b16 %v312, %v311
  %v409 = vpack.c.b16 %v314, %v313
  %v410 = vpack.c.b16 %v316, %v315
  %v411 = vpack.c.b16 %v318, %v317
  %v412 = vpack.c.b16 %v320, %v319
  %v413 = vpack.c.b16 %v322, %v321
  %v414 = vpack.c.b16 %v324, %v323
  %v415 = vpack.c.b16 %v326, %v325
  %v416 = vpack.c.b16 %v328, %v327
  %v417 = vpack.c.b16 %v330, %v329
  %v418 = vpack.c.b16 %v332, %v331
  %v419 = vpack.c.b16 %v334, %v333
  %v420 = vpack.c.b16 %v336, %v335
  %v421 = vpack.c.b16 %v338, %v337
  %v422 = vpack.c.b16 %v340, %v339
  %v423 = vpack.c.b16 %v342, %v341
  %v424 = vpack.c.b16 %v344, %v343
  %v425 = vpack.c.b16 %v346, %v345
  %v426 = vpack.c.b16 %v348, %v347
  %v427 = vpack.c.b16 %v350, %v349
  %v428 = vpack.c.b16 %v352, %v351
  %v429 = vpack.c.b16 %v354, %v353
  %v430 = vpack.c.b16 %v356, %v355
  %v431 = vpack.c.b16 %v358, %v357
  %v432 = vpack.c.b16 %v360, %v359
  %v433 = vpack.c.b16 %v362, %v361
  %v434 = vpack.c.b16 %v364, %v363
  %v435 = vpack.c.b16 %v366, %v365
  %v436 = vpack.c.b16 %v368, %v367
  %v437 = vpack.c.b16 %v370, %v369
  %v438 = vpack.c.b16 %v372, %v371
  %v439 = vpack.c.b16 %v374, %v373
  %v440 = vpack.c.b16 %v376, %v375
  %v441 = vpack.c.b16 %v378, %v377
  %v442 = vpack.c.b16 %v380, %v379
  %v443 = vpack.c.b16 %v382, %v381
  %v444 = vpack.c.b16 %v384, %v383
  %v445 = vpack.c.b16 %v386, %v385
  %v446 = vpack.c.b16 %v388, %v387
  %v447 = vpack.c.b16 %v390, %v389
  %v448 = vpack.c.b16 %v392, %v391
  %v449 = vpack.c.b16 %v394, %v393
  %v450 = vpack.c.b16 %v396, %v395
  %v451 = vpack.c.b16 %v398, %v397
  %v452 = vpack.c.b16 %v400, %v399
  %v453 = vpack.c.b16 %v402, %v401
  %v454 = vpack.c.b16 %v404, %v403
  %vm505 = vcmask 261120
  %v507 = vsel %vm505, %v185, 0
  %v510 = vsel %vm505, %v192, 0
  %512 = vmatpush.bf16.msra.mxu0 %v412
  %513 = vmatpush.bf16.msra.mxu0 %v411
  %514 = vmatpush.bf16.msra.mxu0 %v410
  %515 = vmatpush.bf16.msra.mxu0 %v409
  %516 = vmatpush.bf16.msra.mxu0 %v408
  %517 = vmatpush.bf16.msra.mxu0 %v407
  %518 = vmatpush.bf16.msra.mxu0 %v406
  %519 = vmatpush.bf16.msra.mxu0 %v405
  %520 = vmatmul.bf16.gmra.mxu0 %v179
  %v521 = vpop.f32.mrf.mxu0
  %v522 = vadd.f32 %v133, %v521
  %v523 = vpop.f32.mrf.mxu0
  %v524 = vadd.f32 %v133, %v523
  %525 = vmatmul.bf16.gmra.mxu0 %v186
  %v526 = vpop.f32.mrf.mxu0
  %v527 = vadd.f32 %v133, %v526
  %v528 = vpop.f32.mrf.mxu0
  %v529 = vadd.f32 %v133, %v528
  %530 = vdwg.mxu0
  %531 = vmatpush.bf16.msra.mxu0 %v420
  %532 = vmatpush.bf16.msra.mxu0 %v419
  %533 = vmatpush.bf16.msra.mxu0 %v418
  %534 = vmatpush.bf16.msra.mxu0 %v417
  %535 = vmatpush.bf16.msra.mxu0 %v416
  %536 = vmatpush.bf16.msra.mxu0 %v415
  %537 = vmatpush.bf16.msra.mxu0 %v414
  %538 = vmatpush.bf16.msra.mxu0 %v413
  %539 = vmatmul.bf16.gmra.mxu0 %v180
  %v540 = vpop.f32.mrf.mxu0
  %v541 = vadd.f32 %v522, %v540
  %v542 = vpop.f32.mrf.mxu0
  %v543 = vadd.f32 %v524, %v542
  %544 = vmatmul.bf16.gmra.mxu0 %v187
  %v545 = vpop.f32.mrf.mxu0
  %v546 = vadd.f32 %v527, %v545
  %v547 = vpop.f32.mrf.mxu0
  %v548 = vadd.f32 %v529, %v547
  %549 = vdwg.mxu0
  %550 = vmatpush.bf16.msra.mxu0 %v428
  %551 = vmatpush.bf16.msra.mxu0 %v427
  %552 = vmatpush.bf16.msra.mxu0 %v426
  %553 = vmatpush.bf16.msra.mxu0 %v425
  %554 = vmatpush.bf16.msra.mxu0 %v424
  %555 = vmatpush.bf16.msra.mxu0 %v423
  %556 = vmatpush.bf16.msra.mxu0 %v422
  %557 = vmatpush.bf16.msra.mxu0 %v421
  %558 = vmatmul.bf16.gmra.mxu0 %v181
  %v559 = vpop.f32.mrf.mxu0
  %v560 = vadd.f32 %v541, %v559
  %v561 = vpop.f32.mrf.mxu0
  %v562 = vadd.f32 %v543, %v561
  %563 = vmatmul.bf16.gmra.mxu0 %v188
  %v564 = vpop.f32.mrf.mxu0
  %v565 = vadd.f32 %v546, %v564
  %v566 = vpop.f32.mrf.mxu0
  %v567 = vadd.f32 %v548, %v566
  %568 = vdwg.mxu0
  %569 = vmatpush.bf16.msra.mxu0 %v436
  %570 = vmatpush.bf16.msra.mxu0 %v435
  %571 = vmatpush.bf16.msra.mxu0 %v434
  %572 = vmatpush.bf16.msra.mxu0 %v433
  %573 = vmatpush.bf16.msra.mxu0 %v432
  %574 = vmatpush.bf16.msra.mxu0 %v431
  %575 = vmatpush.bf16.msra.mxu0 %v430
  %576 = vmatpush.bf16.msra.mxu0 %v429
  %577 = vmatmul.bf16.gmra.mxu0 %v182
  %v578 = vpop.f32.mrf.mxu0
  %v579 = vadd.f32 %v560, %v578
  %v580 = vpop.f32.mrf.mxu0
  %v581 = vadd.f32 %v562, %v580
  %582 = vmatmul.bf16.gmra.mxu0 %v189
  %v583 = vpop.f32.mrf.mxu0
  %v584 = vadd.f32 %v565, %v583
  %v585 = vpop.f32.mrf.mxu0
  %v586 = vadd.f32 %v567, %v585
  %587 = vdwg.mxu0
  %588 = vmatpush.bf16.msra.mxu0 %v444
  %589 = vmatpush.bf16.msra.mxu0 %v443
  %590 = vmatpush.bf16.msra.mxu0 %v442
  %591 = vmatpush.bf16.msra.mxu0 %v441
  %592 = vmatpush.bf16.msra.mxu0 %v440
  %593 = vmatpush.bf16.msra.mxu0 %v439
  %594 = vmatpush.bf16.msra.mxu0 %v438
  %595 = vmatpush.bf16.msra.mxu0 %v437
  %596 = vmatmul.bf16.gmra.mxu0 %v183
  %v597 = vpop.f32.mrf.mxu0
  %v598 = vadd.f32 %v579, %v597
  %v599 = vpop.f32.mrf.mxu0
  %v600 = vadd.f32 %v581, %v599
  %601 = vmatmul.bf16.gmra.mxu0 %v190
  %v602 = vpop.f32.mrf.mxu0
  %v603 = vadd.f32 %v584, %v602
  %v604 = vpop.f32.mrf.mxu0
  %v605 = vadd.f32 %v586, %v604
  %606 = vdwg.mxu0
  %607 = vmatpush.bf16.msra.mxu0 %v452
  %608 = vmatpush.bf16.msra.mxu0 %v451
  %609 = vmatpush.bf16.msra.mxu0 %v450
  %610 = vmatpush.bf16.msra.mxu0 %v449
  %611 = vmatpush.bf16.msra.mxu0 %v448
  %612 = vmatpush.bf16.msra.mxu0 %v447
  %613 = vmatpush.bf16.msra.mxu0 %v446
  %614 = vmatpush.bf16.msra.mxu0 %v445
  %615 = vmatmul.bf16.gmra.mxu0 %v184
  %v616 = vpop.f32.mrf.mxu0
  %v617 = vadd.f32 %v598, %v616
  %v618 = vpop.f32.mrf.mxu0
  %v619 = vadd.f32 %v600, %v618
  %620 = vmatmul.bf16.gmra.mxu0 %v191
  %v621 = vpop.f32.mrf.mxu0
  %v622 = vadd.f32 %v603, %v621
  %v623 = vpop.f32.mrf.mxu0
  %v624 = vadd.f32 %v605, %v623
  %625 = vdwg.mxu0
  %626 = vmatpush.bf16.msra.mxu0 0
  %627 = vmatpush.bf16.msra.mxu0 0
  %628 = vmatpush.bf16.msra.mxu0 0
  %629 = vmatpush.bf16.msra.mxu0 0
  %630 = vmatpush.bf16.msra.mxu0 0
  %631 = vmatpush.bf16.msra.mxu0 0
  %632 = vmatpush.bf16.msra.mxu0 %v454
  %633 = vmatpush.bf16.msra.mxu0 %v453
  %634 = vmatmul.bf16.gmra.mxu0 %v507
  %v635 = vpop.f32.mrf.mxu0
  %v636 = vadd.f32 %v617, %v635
  %v637 = vpop.f32.mrf.mxu0
  %v638 = vadd.f32 %v619, %v637
  %639 = vmatmul.bf16.gmra.mxu0 %v510
  %v640 = vpop.f32.mrf.mxu0
  %v641 = vadd.f32 %v622, %v640
  %v642 = vpop.f32.mrf.mxu0
  %v643 = vadd.f32 %v624, %v642
  %644 = vdwg.mxu0
  %v645 = vmax.f32 %v636, 0.0
  %v646 = vmax.f32 %v638, 0.0
  %v647 = vmax.f32 %v641, 0.0
  %v648 = vmax.f32 %v643, 0.0
  %v649 = vpack.c.bf16 %v645, %v645
  %v650 = vpack.c.bf16 %v646, %v646
  %v651 = vpack.c.bf16 %v647, %v647
  %v652 = vpack.c.bf16 %v648, %v648
  %vm653 = vcmask 519168
  %654 = vst.msk [vmem:[%s3] sm:$0xf] %vm653, %v649
  %655 = vst.msk [vmem:[%s3 + $0x4] sm:$0xf] %vm653, %v650
  %656 = vst.msk [vmem:[%s3 + $0x8] sm:$0xf] %vm653, %v651
  %657 = vst.msk [vmem:[%s3 + $0xc] sm:$0xf] %vm653, %v652
  // Predicated region
  $region14: #{toynet_forward.6} parent=0 // pred_check
    _
  $region15: #{toynet_forward.6} parent=0 // pred_check_branch
    %659 = sbr.rel (0) target = $region17
  $region16: #{toynet_forward.6} parent=0 // pred_region
    _
  $region17: #{toynet_forward.6} parent=0 // pred_fallthru
    _
  // Predicated region
  $region18: #{toynet_forward.6} parent=0 // pred_check
    _
  $region19: #{toynet_forward.6} parent=0 // pred_check_branch
    %661 = sbr.rel (0) target = $region21
  $region20: #{toynet_forward.6} parent=0 // pred_region
    _
  $region21: #{toynet_forward.6} parent=0 // pred_fallthru
    _

// kernel: toynet_forward.7
$region0: #{toynet_forward.7}
  #allocation0 [shape = 'u32[]', space=smem, size = 0x4, offset = 0x4, fixed_abs, tag = 'smem constant byte address 0x4 - core index']
  #allocation1 [shape = 'u32[72,128]{1,0:T(1,128)}', space=vmem, size = 0x9000, scoped, tag = 'internal scratch']
  %s0 = inlined_call_operand.vmem [shape: bf16[2,2,2,2,2,64], index: 0, kind: input, shape index: {}]
  %s1 = inlined_call_operand.vmem [shape: bf16[4,64,128], index: 1, kind: input, shape index: {}]
  %s2 = inlined_call_operand.vmem [shape: f32[1,128], index: 2, kind: input, shape index: {}]
  %s3 = inlined_call_operand.vmem [shape: bf16[128,128], index: 3, kind: input, shape index: {}]
  %s4 = inlined_call_operand.vmem [shape: f32[1,128], index: 4, kind: input, shape index: {}]
  %s5 = inlined_call_operand.hbm [shape: f32[2,128], index: 5, kind: output, shape index: {}]
  %s6 = sld [smem:[#allocation0]]
  $region30: #{toynet_forward.7} parent=0
    _
  %s8 = ssub.s32 1, %s6
  %s9 = scalar_select 0, %s8, %s6
  $region1: #{toynet_forward.7} parent=0
    #allocation2 [shape = 'u8[1024]{0}', space=vmem, size = 0x400, scoped, tag = 'output window, operand 0, single buffered']
    #allocation3 [shape = 's32[1]{0}', space=sflag, size = 0x4, scoped, tag = 'scoped memory for toynet_forward.7']
    %10 = vsyncpa [#allocation3], 0
    // Predicated region
    $region2: #{toynet_forward.7} parent=1 // pred_check
      _
    $region3: #{toynet_forward.7} parent=1 // pred_check_branch
      %12 = sbr.rel (0) target = $region5
    $region4: #{toynet_forward.7} parent=1 // pred_region
      _
    $region5: #{toynet_forward.7} parent=1 // pred_fallthru
      _
    // Predicated region
    $region6: #{toynet_forward.7} parent=1 // pred_check
      _
    $region7: #{toynet_forward.7} parent=1 // pred_check_branch
      %14 = sbr.rel (0) target = $region9
    $region8: #{toynet_forward.7} parent=1 // pred_region
      _
    $region9: #{toynet_forward.7} parent=1 // pred_fallthru
      _
    // Predicated region
    $region10: #{toynet_forward.7} parent=1 // pred_check
      _
    $region11: #{toynet_forward.7} parent=1 // pred_check_branch
      %16 = sbr.rel (0) target = $region13
    $region12: #{toynet_forward.7} parent=1 // pred_region
      _
    $region13: #{toynet_forward.7} parent=1 // pred_fallthru
      _
    // Predicated region
    $region14: #{toynet_forward.7} parent=1 // pred_check
      _
    $region15: #{toynet_forward.7} parent=1 // pred_check_branch
      %18 = sbr.rel (0) target = $region17
    $region16: #{toynet_forward.7} parent=1 // pred_region
      _
    $region17: #{toynet_forward.7} parent=1 // pred_fallthru
      _
    // Predicated region
    $region18: #{toynet_forward.7} parent=1 // pred_check
      _
    $region19: #{toynet_forward.7} parent=1 // pred_check_branch
      %20 = sbr.rel (0) target = $region21
    $region20: #{toynet_forward.7} parent=1 // pred_region
      _
    $region21: #{toynet_forward.7} parent=1 // pred_fallthru
      _
    %v22 = vld [vmem:[%s0] sm:$0x1]
    %v23 = vld [vmem:[%s0 + $0x1] sm:$0x1]
    %v24 = vld [vmem:[%s0 + $0x2] sm:$0x1]
    %v25 = vld [vmem:[%s0 + $0x3] sm:$0x1]
    %v26 = vld [vmem:[%s0 + $0x4] sm:$0x1]
    %v27 = vld [vmem:[%s0 + $0x5] sm:$0x1]
    %v28 = vld [vmem:[%s0 + $0x6] sm:$0x1]
    %v29 = vld [vmem:[%s0 + $0x7] sm:$0x1]
    %v30 = vld [vmem:[%s0 + $0x8] sm:$0x1]
    %v31 = vld [vmem:[%s0 + $0x9] sm:$0x1]
    %v32 = vld [vmem:[%s0 + $0xa] sm:$0x1]
    %v33 = vld [vmem:[%s0 + $0xb] sm:$0x1]
    %v34 = vld [vmem:[%s0 + $0xc] sm:$0x1]
    %v35 = vld [vmem:[%s0 + $0xd] sm:$0x1]
    %v36 = vld [vmem:[%s0 + $0xe] sm:$0x1]
    %v37 = vld [vmem:[%s0 + $0xf] sm:$0x1]
    %v38 = vunpack.c.l.bf16 %v22
    %v39 = vunpack.c.l.bf16 %v23
    %v40 = vunpack.c.l.bf16 %v24
    %v41 = vunpack.c.l.bf16 %v25
    %v42 = vunpack.c.l.bf16 %v26
    %v43 = vunpack.c.l.bf16 %v27
    %v44 = vunpack.c.l.bf16 %v28
    %v45 = vunpack.c.l.bf16 %v29
    %v46 = vunpack.c.l.bf16 %v30
    %v47 = vunpack.c.l.bf16 %v31
    %v48 = vunpack.c.l.bf16 %v32
    %v49 = vunpack.c.l.bf16 %v33
    %v50 = vunpack.c.l.bf16 %v34
    %v51 = vunpack.c.l.bf16 %v35
    %v52 = vunpack.c.l.bf16 %v36
    %v53 = vunpack.c.l.bf16 %v37
    %v54 = vmax.f32 %v38, %v42
    %v55 = vmax.f32 %v39, %v43
    %v56 = vmax.f32 %v40, %v44
    %v57 = vmax.f32 %v41, %v45
    %v58 = vmax.f32 %v54, 0.0
    %v59 = vmax.f32 %v55, %v42
    %v60 = vmax.f32 %v56, 0.0
    %v61 = vmax.f32 %v57, %v44
    %v62 = vmax.f32 %v58, %v46
    %v63 = vmax.f32 %v59, %v47
    %v64 = vmax.f32 %v60, %v48
    %v65 = vmax.f32 %v61, %v49
    %v66 = vmax.f32 %v62, 0.0
    %v67 = vmax.f32 %v63, 0.0
    %v68 = vmax.f32 %v64, %v46
    %v69 = vmax.f32 %v65, %v47
    %v70 = vmax.f32 %v66, %v50
    %v71 = vmax.f32 %v67, %v51
    %v72 = vmax.f32 %v68, %v52
    %v73 = vmax.f32 %v69, %v53
    %v74 = vmax.f32 %v70, 0.0
    %v75 = vmax.f32 %v71, %v50
    %v76 = vmax.f32 %v72, 0.0
    %v77 = vmax.f32 %v73, %v52
    %v78 = vmax.f32 %v74, 0.0
    %v79 = vmax.f32 %v75, 0.0
    %v80 = vmax.f32 %v76, %v50
    %v81 = vmax.f32 %v77, %v51
    %v82 = vmax.f32 %v78, 0.0
    %v83 = vmax.f32 %v79, 0.0
    %v84 = vmax.f32 %v80, 0.0
    %v85 = vmax.f32 %v81, %v50
    %v86 = vpack.c.bf16 %v82, %v82
    %v87 = vpack.c.bf16 %v83, %v83
    %v88 = vpack.c.bf16 %v84, %v84
    %v89 = vpack.c.bf16 %v85, %v85
    %v90 = vld [vmem:[%s1] sm:$0xf]
    %v91 = vld [vmem:[%s1 + $0x4] sm:$0xf]
    %v92 = vld [vmem:[%s1 + $0x8] sm:$0xf]
    %v93 = vld [vmem:[%s1 + $0xc] sm:$0xf]
    %v94 = vld [vmem:[%s1 + $0x10] sm:$0xf]
    %v95 = vld [vmem:[%s1 + $0x14] sm:$0xf]
    %v96 = vld [vmem:[%s1 + $0x18] sm:$0xf]
    %v97 = vld [vmem:[%s1 + $0x1c] sm:$0xf]
    %s98 = scalar_lea.vmem %s1, 32
    %v99 = vld [vmem:[%s98] sm:$0xf]
    %v100 = vld [vmem:[%s98 + $0x4] sm:$0xf]
    %v101 = vld [vmem:[%s98 + $0x8] sm:$0xf]
    %v102 = vld [vmem:[%s98 + $0xc] sm:$0xf]
    %v103 = vld [vmem:[%s98 + $0x10] sm:$0xf]
    %v104 = vld [vmem:[%s98 + $0x14] sm:$0xf]
    %v105 = vld [vmem:[%s98 + $0x18] sm:$0xf]
    %v106 = vld [vmem:[%s98 + $0x1c] sm:$0xf]
    %v115 = vunpack.c.l.b16 %v99
    %v116 = vunpack.c.l.b16 %v100
    %v117 = vunpack.c.l.b16 %v101
    %v118 = vunpack.c.l.b16 %v102
    %v119 = vunpack.c.l.b16 %v103
    %v120 = vunpack.c.l.b16 %v104
    %v121 = vunpack.c.l.b16 %v105
    %v122 = vunpack.c.l.b16 %v106
    %v123 = vpack.c.b16 %v116, %v115
    %v124 = vpack.c.b16 %v118, %v117
    %v125 = vpack.c.b16 %v120, %v119
    %v126 = vpack.c.b16 %v122, %v121
    %vm131 = vcmask 523264
    %v133 = vsel %vm131, %v87, 0
    %135 = vmatpush.bf16.msra.mxu0 0
    %136 = vmatpush.bf16.msra.mxu0 0
    %137 = vmatpush.bf16.msra.mxu0 0
    %138 = vmatpush.bf16.msra.mxu0 0
    %139 = vmatpush.bf16.msra.mxu0 %v126
    %140 = vmatpush.bf16.msra.mxu0 %v125
    %141 = vmatpush.bf16.msra.mxu0 %v124
    %142 = vmatpush.bf16.msra.mxu0 %v123
    %143 = vmatmul.bf16.gmra.mxu0 %v133
    %v144 = vpop.f32.mrf.mxu0
    %v145 = vadd.f32 0.0, %v144
    %v146 = vpop.f32.mrf.mxu0
    %147 = vdwg.mxu0
    %v156 = vunpack.c.l.b16 %v90
    %v157 = vunpack.c.l.b16 %v91
    %v158 = vunpack.c.l.b16 %v92
    %v159 = vunpack.c.l.b16 %v93
    %v160 = vunpack.c.l.b16 %v94
    %v161 = vunpack.c.l.b16 %v95
    %v162 = vunpack.c.l.b16 %v96
    %v163 = vunpack.c.l.b16 %v97
    %v164 = vpack.c.b16 %v157, %v156
    %v165 = vpack.c.b16 %v159, %v158
    %v166 = vpack.c.b16 %v161, %v160
    %v167 = vpack.c.b16 %v163, %v162
    %v173 = vsel %vm131, %v86, 0
    %175 = vmatpush.bf16.msra.mxu0 0
    %176 = vmatpush.bf16.msra.mxu0 0
    %177 = vmatpush.bf16.msra.mxu0 0
    %178 = vmatpush.bf16.msra.mxu0 0
    %179 = vmatpush.bf16.msra.mxu0 %v167
    %180 = vmatpush.bf16.msra.mxu0 %v166
    %181 = vmatpush.bf16.msra.mxu0 %v165
    %182 = vmatpush.bf16.msra.mxu0 %v164
    %183 = vmatmul.bf16.gmra.mxu0 %v173
    %v184 = vpop.f32.mrf.mxu0
    %v185 = vadd.f32 %v145, %v184
    %v186 = vpop.f32.mrf.mxu0
    %187 = vdwg.mxu0
    %s188 = scalar_lea.vmem %s1, 64
    %v189 = vld [vmem:[%s188] sm:$0xf]
    %v190 = vld [vmem:[%s188 + $0x4] sm:$0xf]
    %v191 = vld [vmem:[%s188 + $0x8] sm:$0xf]
    %v192 = vld [vmem:[%s188 + $0xc] sm:$0xf]
    %v193 = vld [vmem:[%s188 + $0x10] sm:$0xf]
    %v194 = vld [vmem:[%s188 + $0x14] sm:$0xf]
    %v195 = vld [vmem:[%s188 + $0x18] sm:$0xf]
    %v196 = vld [vmem:[%s188 + $0x1c] sm:$0xf]
    %v205 = vunpack.c.l.b16 %v189
    %v206 = vunpack.c.l.b16 %v190
    %v207 = vunpack.c.l.b16 %v191
    %v208 = vunpack.c.l.b16 %v192
    %v209 = vunpack.c.l.b16 %v193
    %v210 = vunpack.c.l.b16 %v194
    %v211 = vunpack.c.l.b16 %v195
    %v212 = vunpack.c.l.b16 %v196
    %v213 = vpack.c.b16 %v206, %v205
    %v214 = vpack.c.b16 %v208, %v207
    %v215 = vpack.c.b16 %v210, %v209
    %v216 = vpack.c.b16 %v212, %v211
    %v222 = vsel %vm131, %v88, 0
    %224 = vmatpush.bf16.msra.mxu0 0
    %225 = vmatpush.bf16.msra.mxu0 0
    %226 = vmatpush.bf16.msra.mxu0 0
    %227 = vmatpush.bf16.msra.mxu0 0
    %228 = vmatpush.bf16.msra.mxu0 %v216
    %229 = vmatpush.bf16.msra.mxu0 %v215
    %230 = vmatpush.bf16.msra.mxu0 %v214
    %231 = vmatpush.bf16.msra.mxu0 %v213
    %232 = vmatmul.bf16.gmra.mxu0 %v222
    %v233 = vpop.f32.mrf.mxu0
    %v234 = vadd.f32 0.0, %v233
    %v235 = vpop.f32.mrf.mxu0
    %236 = vdwg.mxu0
    %v237 = vadd.f32 %v185, %v234
    %s238 = scalar_lea.vmem %s1, 96
    %v239 = vld [vmem:[%s238] sm:$0xf]
    %v240 = vld [vmem:[%s238 + $0x4] sm:$0xf]
    %v241 = vld [vmem:[%s238 + $0x8] sm:$0xf]
    %v242 = vld [vmem:[%s238 + $0xc] sm:$0xf]
    %v243 = vld [vmem:[%s238 + $0x10] sm:$0xf]
    %v244 = vld [vmem:[%s238 + $0x14] sm:$0xf]
    %v245 = vld [vmem:[%s238 + $0x18] sm:$0xf]
    %v246 = vld [vmem:[%s238 + $0x1c] sm:$0xf]
    %v255 = vunpack.c.l.b16 %v239
    %v256 = vunpack.c.l.b16 %v240
    %v257 = vunpack.c.l.b16 %v241
    %v258 = vunpack.c.l.b16 %v242
    %v259 = vunpack.c.l.b16 %v243
    %v260 = vunpack.c.l.b16 %v244
    %v261 = vunpack.c.l.b16 %v245
    %v262 = vunpack.c.l.b16 %v246
    %v263 = vpack.c.b16 %v256, %v255
    %v264 = vpack.c.b16 %v258, %v257
    %v265 = vpack.c.b16 %v260, %v259
    %v266 = vpack.c.b16 %v262, %v261
    %v272 = vsel %vm131, %v89, 0
    %274 = vmatpush.bf16.msra.mxu0 0
    %275 = vmatpush.bf16.msra.mxu0 0
    %276 = vmatpush.bf16.msra.mxu0 0
    %277 = vmatpush.bf16.msra.mxu0 0
    %278 = vmatpush.bf16.msra.mxu0 %v266
    %279 = vmatpush.bf16.msra.mxu0 %v265
    %280 = vmatpush.bf16.msra.mxu0 %v264
    %281 = vmatpush.bf16.msra.mxu0 %v263
    %282 = vmatmul.bf16.gmra.mxu0 %v272
    %v283 = vpop.f32.mrf.mxu0
    %v284 = vadd.f32 0.0, %v283
    %v285 = vpop.f32.mrf.mxu0
    %286 = vdwg.mxu0
    %v287 = vadd.f32 %v237, %v284
    %v288 = vld [vmem:[%s2] sm:$0x1]
    %v290 = vperm.slane %v288, 0
    %v292 = vadd.f32 %v287, %v290
    %v293 = vmax.f32 %v292, 0.0
    %v294 = vpack.c.bf16 %v293, %v293
    %v295 = vld [vmem:[%s3] sm:$0xf]
    %v296 = vld [vmem:[%s3 + $0x4] sm:$0xf]
    %v297 = vld [vmem:[%s3 + $0x8] sm:$0xf]
    %v298 = vld [vmem:[%s3 + $0xc] sm:$0xf]
    %v299 = vld [vmem:[%s3 + $0x10] sm:$0xf]
    %v300 = vld [vmem:[%s3 + $0x14] sm:$0xf]
    %v301 = vld [vmem:[%s3 + $0x18] sm:$0xf]
    %v302 = vld [vmem:[%s3 + $0x1c] sm:$0xf]
    %v303 = vld [vmem:[%s3 + $0x20] sm:$0xf]
    %v304 = vld [vmem:[%s3 + $0x24] sm:$0xf]
    %v305 = vld [vmem:[%s3 + $0x28] sm:$0xf]
    %v306 = vld [vmem:[%s3 + $0x2c] sm:$0xf]
    %v307 = vld [vmem:[%s3 + $0x30] sm:$0xf]
    %v308 = vld [vmem:[%s3 + $0x34] sm:$0xf]
    %v309 = vld [vmem:[%s3 + $0x38] sm:$0xf]
    %v310 = vld [vmem:[%s3 + $0x3c] sm:$0xf]
    %v311 = vld [vmem:[%s4] sm:$0x1]
    %v313 = vperm.slane %v311, 0
    %v331 = vunpack.c.l.b16 %v295
    %v332 = vunpack.c.l.b16 %v296
    %v333 = vunpack.c.l.b16 %v297
    %v334 = vunpack.c.l.b16 %v298
    %v335 = vunpack.c.l.b16 %v299
    %v336 = vunpack.c.l.b16 %v300
    %v337 = vunpack.c.l.b16 %v301
    %v338 = vunpack.c.l.b16 %v302
    %v339 = vunpack.c.l.b16 %v303
    %v340 = vunpack.c.l.b16 %v304
    %v341 = vunpack.c.l.b16 %v305
    %v342 = vunpack.c.l.b16 %v306
    %v343 = vunpack.c.l.b16 %v307
    %v344 = vunpack.c.l.b16 %v308
    %v345 = vunpack.c.l.b16 %v309
    %v346 = vunpack.c.l.b16 %v310
    %v347 = vpack.c.b16 %v332, %v331
    %v348 = vpack.c.b16 %v334, %v333
    %v349 = vpack.c.b16 %v336, %v335
    %v350 = vpack.c.b16 %v338, %v337
    %v351 = vpack.c.b16 %v340, %v339
    %v352 = vpack.c.b16 %v342, %v341
    %v353 = vpack.c.b16 %v344, %v343
    %v354 = vpack.c.b16 %v346, %v345
    %363 = vmatpush.bf16.msra.mxu0 %v354
    %364 = vmatpush.bf16.msra.mxu0 %v353
    %365 = vmatpush.bf16.msra.mxu0 %v352
    %366 = vmatpush.bf16.msra.mxu0 %v351
    %367 = vmatpush.bf16.msra.mxu0 %v350
    %368 = vmatpush.bf16.msra.mxu0 %v349
    %369 = vmatpush.bf16.msra.mxu0 %v348
    %370 = vmatpush.bf16.msra.mxu0 %v347
    %371 = vmatmul.bf16.gmra.mxu0 %v294
    %v372 = vpop.f32.mrf.mxu0
    %v373 = vadd.f32 %v313, %v372
    %v374 = vpop.f32.mrf.mxu0
    %375 = vdwg.mxu0
    %v376 = vlaneseq
    %v377 = vand.u32 %v376, 127
    %vm378 = vcmp.lt.s32.totalorder %v377, 10
    %v379 = vsel %vm378, %v373, -1e+30
    %vm380 = vcmask 1041408
    %v381 = vsel %vm380, %v379, -inf
    %382 = vmax.xlane.f32.xlu0 %v381
    %v383 = vpop.xlane.xlu0 %382
    %v384 = vsub.f32 %v379, %v383
    %v385 = vmul.f32 %v384, 1.442695
    %v386 = vpow.pop %v385
    %v387 = vsel %vm380, %v386, 0.0
    %388 = vadd.xlane.f32.xlu0 %v387
    %v389 = vpop.xlane.xlu0 %388
    %v390 = vlog2.pop %v389
    %v391 = vmul.f32 %v390, 0.6931472
    %v392 = vsub.f32 %v384, %v391
    %393 = vst [vmem:[#allocation2] sm:$0x3] %v392
    // Predicated region
    $region22: #{toynet_forward.7} parent=1 // pred_check
      _
    $region23: #{toynet_forward.7} parent=1 // pred_check_branch
      %395 = sbr.rel (0) target = $region25
    $region24: #{toynet_forward.7} parent=1 // pred_region
      %397 = vsyncadd [#allocation3], 0
      %s399 = sshll.u32 [#allocation2], 4
      %s400 = int_to_ptr.vmem [resolvable:$true] %s399
      %s401 = sshll.u32 %s5, 4
      %s402 = int_to_ptr.hbm [resolvable:$true] %s401
      %404 = dma.vmem_to_hbm [thread:$0]  %s400, 32, %s402, [#allocation3]
    $region25: #{toynet_forward.7} parent=1 // pred_fallthru
      _
    // Predicated region
    $region26: #{toynet_forward.7} parent=1 // pred_check
      _
    $region27: #{toynet_forward.7} parent=1 // pred_check_branch
      %406 = sbr.rel (0) target = $region29
    $region28: #{toynet_forward.7} parent=1 // pred_region
      %408 = dma.done [#allocation3], 32
    $region29: #{toynet_forward.7} parent=1 // pred_fallthru
      _
    %409 = vsyncpa [#allocation3], 1

</llo_original>
